<compile_context>
chip_gen: v5e
topology: v5e:2x2
jax: 0.10.0
libtpu: 0.0.40
codegen_flags: <defaults>
</compile_context>

<pallas_src>
import functools
import math

import jax
import jax.numpy as jnp
from jax import lax
from jax.experimental import pallas as pl
from jax.experimental.pallas import tpu as pltpu


def _resample_norm_kernel(x_ref, wc_ref, segb_ref, gamma_ref, beta_ref, o_ref,
                          *, precision):
    # x_ref:     (tile, pack*Din)        pack original rows packed along lanes
    # wc_ref:    (pack*Din, pack*Dout)   block-diag interp matrix; gate and
    #                                    per-segment mean subtraction folded in
    # segb_ref:  (pack*Dout, pack*Dout)  block-diag segment-averaging matrix (1/Dout)
    # gamma_ref: (1, pack*Dout)          LayerNorm weight, tiled pack times
    # beta_ref:  (1, pack*Dout)          LayerNorm bias,   tiled pack times
    x = x_ref[...]                                    # keep input dtype (bf16-friendly)
    # centered, gated, resampled activations (f32 accumulate on MXU)
    c = jnp.dot(x, wc_ref[...], preferred_element_type=jnp.float32,
                precision=precision)
    # biased per-segment variance, broadcast back across each Dout-lane segment
    var = jnp.dot(c * c, segb_ref[...], preferred_element_type=jnp.float32,
                  precision=precision)
    inv = lax.rsqrt(var + 1e-5)                       # EUP; matches torch eps
    out = c * inv * gamma_ref[...] + beta_ref[...]
    o_ref[...] = out.astype(o_ref.dtype)


def make_interp_matrix(din: int, dout: int, dtype=jnp.float32):
    """Matrix W s.t. x @ W == F.interpolate(x, dout, mode='linear', align_corners=True)."""
    j = jnp.arange(dout)
    if dout == 1:
        coord = jnp.zeros((1,), jnp.float32)
    else:
        coord = j.astype(jnp.float32) * (din - 1) / (dout - 1)
    lo = jnp.floor(coord).astype(jnp.int32)
    hi = jnp.minimum(lo + 1, din - 1)
    frac = coord - lo.astype(jnp.float32)
    w = jnp.zeros((din, dout), dtype)
    w = w.at[lo, j].add((1.0 - frac).astype(dtype))
    w = w.at[hi, j].add(frac.astype(dtype))
    return w


def _block_diag(block, pack):
    """pack copies of `block` (a, b) along the diagonal of a (pack*a, pack*b) matrix."""
    a, b = block.shape
    eye = jnp.eye(pack, dtype=block.dtype)
    return jnp.einsum("pq,ab->paqb", eye, block).reshape(pack * a, pack * b)


def resample_norm(x, w_interp, mask, gamma, beta, *, pack=None, block_rows=2048,
                  out_dtype=None, precision=None):
    """x: (B, T, Din) -> (B, T, Dout). Fused resample + trainable gate + LayerNorm."""
    B, T, Din = x.shape
    Dout = w_interp.shape[1]
    N = B * T
    f32 = jnp.float32
    out_dtype = x.dtype if out_dtype is None else out_dtype

    # pack so that pack*Din and pack*Dout are multiples of 128 (lane-dense I/O).
    if pack is None:
        pack = math.lcm(128 // math.gcd(Din, 128), 128 // math.gcd(Dout, 128))
    pack_in, pack_out = pack * Din, pack * Dout

    # Pin MXU precision: f32 stays full f32 (HIGHEST); bf16 stays on the native
    # 1-pass path.  Override (e.g. DEFAULT on v5e) if throughput > exactness.
    if precision is None:
        precision = (lax.Precision.HIGHEST if x.dtype == jnp.float32
                     else lax.Precision.DEFAULT)

    # ---------- wrapper-side precompute (tiny, O(pack^2 * Din * Dout)) ----------
    gate = 2.0 * jax.nn.sigmoid(mask.reshape(-1).astype(f32))           # (Dout,)
    wg = w_interp.astype(f32) * gate[None, :]                           # gate folded in
    wp = _block_diag(wg, pack)                                          # (pack*Din, pack*Dout)
    segb = _block_diag(jnp.full((Dout, Dout), 1.0 / Dout, f32), pack)   # segment averaging
    wc = wp - wp @ segb                                                 # fold mean subtraction
    if x.dtype == jnp.bfloat16:
        wc = wc.astype(jnp.bfloat16)                                    # keep MXU on bf16 path
    gamma_t = jnp.tile(gamma.reshape(1, Dout).astype(f32), (1, pack))   # (1, pack*Dout)
    beta_t = jnp.tile(beta.reshape(1, Dout).astype(f32), (1, pack))

    # ---------- pack `pack` consecutive rows into one lane-dense row ----------
    # Zero-copy in the common case (B*T a multiple of `pack`, and >= 8 packed
    # rows): the flatten/reshape is layout-preserving.  Only the ragged/tiny
    # case pays a pad copy; ragged *tile* boundaries are handled by Pallas
    # masking (no padding to a tile multiple is ever materialized).
    rows = max(-(-N // pack), 8)
    pad_elems = rows * pack_in - N * Din
    xf = x.reshape(-1)
    if pad_elems:
        xf = jnp.concatenate([xf, jnp.zeros((pad_elems,), xf.dtype)])
    xp = xf.reshape(rows, pack_in)

    # ---------- row-tile selection ----------
    # Big tiles amortize the ~0.35us per-grid-step overhead (HBM-bound kernel);
    # small-N fallback keeps >=~4 grid steps; even step count balances v7x's
    # two TensorCores under "parallel" semantics.
    cap = max(8, min(block_rows, -(-rows // 4)))
    tile = min(((cap + 7) // 8) * 8, ((rows + 7) // 8) * 8)
    steps = -(-rows // tile)
    if steps > 1 and steps % 2:
        t2 = ((-(-rows // (steps + 1)) + 7) // 8) * 8
        if -(-rows // t2) % 2 == 0:
            tile = t2
            steps = -(-rows // tile)

    # Pipeline buffers + in-kernel f32 temporaries: give the compiler headroom
    # (stays well under physical VMEM on v5e/v6e/v7x).
    vmem_limit = int(min(56 << 20, max(32 << 20, 48 * tile * pack_out)))

    def _call(single_buffer_weights: bool):
        # Grid-invariant operands never change block index; a second pipeline
        # buffer is pure waste, so request single buffering.
        wkw = {"pipeline_mode": pl.Buffered(1)} if single_buffer_weights else {}
        in_specs = [
            pl.BlockSpec((tile, pack_in), lambda i: (i, 0)),
            pl.BlockSpec((pack_in, pack_out), lambda i: (0, 0), **wkw),
            pl.BlockSpec((pack_out, pack_out), lambda i: (0, 0), **wkw),
            pl.BlockSpec((1, pack_out), lambda i: (0, 0), **wkw),
            pl.BlockSpec((1, pack_out), lambda i: (0, 0), **wkw),
        ]
        fn = pl.pallas_call(
            functools.partial(_resample_norm_kernel, precision=precision),
            out_shape=jax.ShapeDtypeStruct((rows, pack_out), out_dtype),
            grid_spec=pltpu.PrefetchScalarGridSpec(
                num_scalar_prefetch=0,
                grid=(steps,),
                in_specs=in_specs,
                out_specs=pl.BlockSpec((tile, pack_out), lambda i: (i, 0)),
            ),
            compiler_params=pltpu.CompilerParams(
                dimension_semantics=("parallel",),
                vmem_limit_bytes=vmem_limit),
        )
        return fn(xp, wc, segb, gamma_t, beta_t)

    try:
        out_packed = _call(True)
    except Exception:
        # Fallback for jax builds without BlockSpec.pipeline_mode / Buffered(1).
        out_packed = _call(False)

    out = out_packed.reshape(rows * pack, Dout)
    if rows * pack != N:
        out = out[:N]
    return out.reshape(B, T, Dout)


def resample_norm_ref(x, w_interp, mask, gamma, beta):
    """Pure-JAX reference (mirrors the PyTorch forward), full f32 precision."""
    y = jnp.einsum("btd,de->bte", x.astype(jnp.float32), w_interp.astype(jnp.float32),
                   precision="highest")
    y = y * (2.0 * jax.nn.sigmoid(mask.reshape(-1).astype(jnp.float32)))
    mean = jnp.mean(y, axis=-1, keepdims=True)
    var = jnp.mean((y - mean) ** 2, axis=-1, keepdims=True)
    norm = (y - mean) / jnp.sqrt(var + 1e-5)
    return norm * gamma.reshape(-1).astype(jnp.float32) + beta.reshape(-1).astype(jnp.float32)


if __name__ == "__main__":
    # Module config: ResampleNorm(input_size=16, output_size=32, trainable_add=True)
    input_size, output_size = 16, 32

    key = jax.random.PRNGKey(0)
    kx, km, kg = jax.random.split(key, 3)

    # Small deterministic parameter values (non-trivial so the gate / affine
    # folding paths are actually exercised; module init would be 0 / 1 / 0).
    mask = 0.1 * jax.random.normal(km, (output_size,), dtype=jnp.float32)
    gamma = 1.0 + 0.1 * jax.random.normal(kg, (output_size,), dtype=jnp.float32)
    beta = 0.05 * jnp.ones((output_size,), dtype=jnp.float32)

    # Interpolation matrix for TimeDistributedInterpolation (linear, align_corners=True).
    w_interp = make_interp_matrix(input_size, output_size, dtype=jnp.float32)

    # f32 cases:
    #   (2, 8)  -> tiny input (rows < 8 guard path)
    #   (3, 7)  -> B*T not a multiple of pack (small pad fallback path)
    #   (5, 40) -> pack-aligned, zero-copy path with a masked partial last tile
    for (Bt, Tt) in [(2, 8), (3, 7), (5, 40)]:
        x = jax.random.normal(jax.random.fold_in(kx, Bt * 100 + Tt),
                              (Bt, Tt, input_size), dtype=jnp.float32)
        out = jax.block_until_ready(resample_norm(x, w_interp, mask, gamma, beta))
        ref = resample_norm_ref(x, w_interp, mask, gamma, beta)
        assert out.shape == (Bt, Tt, output_size)
        assert jnp.allclose(out, ref, atol=1e-4, rtol=1e-4), "mismatch vs reference (f32)"

    # bf16 case: bf16 DMA + bf16 MXU operands + bf16 output (half the HBM traffic).
    xb = jax.random.normal(jax.random.fold_in(kx, 7), (4, 16, input_size), dtype=jnp.float32)
    xb16 = xb.astype(jnp.bfloat16)
    outb = jax.block_until_ready(resample_norm(xb16, w_interp, mask, gamma, beta))
    refb = resample_norm_ref(xb16.astype(jnp.float32), w_interp, mask, gamma, beta)
    assert outb.shape == (4, 16, output_size) and outb.dtype == jnp.bfloat16
    assert jnp.allclose(outb.astype(jnp.float32), refb, atol=5e-2, rtol=5e-2), \
        "mismatch vs reference (bf16)"

    print("KERNEL_OK")
</pallas_src>

<mosaic_0001>
module attributes {stable_mosaic.version = 11 : i64} {
  func.func @_resample_norm_kernel(%arg0: i32, %arg1: memref<8x128xf32, #tpu.memory_space<vmem>>, %arg2: memref<128x256xf32, #tpu.memory_space<vmem>>, %arg3: memref<256x256xf32, #tpu.memory_space<vmem>>, %arg4: memref<1x256xf32, #tpu.memory_space<vmem>>, %arg5: memref<1x256xf32, #tpu.memory_space<vmem>>, %arg6: memref<8x256xf32, #tpu.memory_space<vmem>>) attributes {dimension_semantics = [#tpu.dimension_semantics<parallel>], iteration_bounds = array<i64: 1>, scalar_prefetch = 0 : i64, scratch_operands = 0 : i64, tpu.core_type = #tpu.core_type<tc>, window_params = [{transform_indices = @transform_0, window_bounds = array<i64: 8, 128>}, {pipeline_mode = #tpu.pipeline_mode<synchronous>, transform_indices = @transform_1, window_bounds = array<i64: 128, 256>}, {pipeline_mode = #tpu.pipeline_mode<synchronous>, transform_indices = @transform_2, window_bounds = array<i64: 256, 256>}, {pipeline_mode = #tpu.pipeline_mode<synchronous>, transform_indices = @transform_3, window_bounds = array<i64: 1, 256>}, {pipeline_mode = #tpu.pipeline_mode<synchronous>, transform_indices = @transform_4, window_bounds = array<i64: 1, 256>}, {transform_indices = @transform_5, window_bounds = array<i64: 8, 256>}]} {
    %c0 = arith.constant 0 : index
    %c0_0 = arith.constant 0 : index
    %0 = vector.load %arg1[%c0, %c0_0] : memref<8x128xf32, #tpu.memory_space<vmem>>, vector<8x128xf32>
    %c0_1 = arith.constant 0 : index
    %c0_2 = arith.constant 0 : index
    %1 = vector.load %arg2[%c0_1, %c0_2] : memref<128x256xf32, #tpu.memory_space<vmem>>, vector<128x256xf32>
    %cst = arith.constant dense<0.000000e+00> : vector<8x256xf32>
    %2 = tpu.matmul %0, %1, %cst {dimension_numbers = #tpu.dot_dimension_numbers<[1], [0], [0], [1], [0, 0, 1, 1], [], []>, precision = #tpu.contract_precision<fp32>} : vector<8x128xf32>, vector<128x256xf32>, vector<8x256xf32> -> vector<8x256xf32>
    %3 = arith.mulf %2, %2 : vector<8x256xf32>
    %c0_3 = arith.constant 0 : index
    %c0_4 = arith.constant 0 : index
    %4 = vector.load %arg3[%c0_3, %c0_4] : memref<256x256xf32, #tpu.memory_space<vmem>>, vector<256x256xf32>
    %cst_5 = arith.constant dense<0.000000e+00> : vector<8x256xf32>
    %5 = tpu.matmul %3, %4, %cst_5 {dimension_numbers = #tpu.dot_dimension_numbers<[1], [0], [0], [1], [0, 0, 1, 1], [], []>, precision = #tpu.contract_precision<fp32>} : vector<8x256xf32>, vector<256x256xf32>, vector<8x256xf32> -> vector<8x256xf32>
    %cst_6 = arith.constant 9.99999974E-6 : f32
    %6 = vector.broadcast %cst_6 : f32 to vector<8x256xf32>
    %7 = arith.addf %5, %6 : vector<8x256xf32>
    %8 = math.rsqrt %7 : vector<8x256xf32>
    %9 = arith.mulf %2, %8 : vector<8x256xf32>
    %c0_7 = arith.constant 0 : index
    %c0_8 = arith.constant 0 : index
    %10 = vector.load %arg4[%c0_7, %c0_8] : memref<1x256xf32, #tpu.memory_space<vmem>>, vector<1x256xf32>
    %11 = vector.broadcast %10 : vector<1x256xf32> to vector<8x256xf32>
    %12 = arith.mulf %9, %11 : vector<8x256xf32>
    %c0_9 = arith.constant 0 : index
    %c0_10 = arith.constant 0 : index
    %13 = vector.load %arg5[%c0_9, %c0_10] : memref<1x256xf32, #tpu.memory_space<vmem>>, vector<1x256xf32>
    %14 = vector.broadcast %13 : vector<1x256xf32> to vector<8x256xf32>
    %15 = arith.addf %12, %14 : vector<8x256xf32>
    %c0_11 = arith.constant 0 : index
    %c0_12 = arith.constant 0 : index
    %16 = vector.load %arg6[%c0_11, %c0_12] : memref<8x256xf32, #tpu.memory_space<vmem>>, vector<8x256xf32>
    tpu.vector_store %arg6[%c0_11, %c0_12], %15 {strides = array<i32>} : memref<8x256xf32, #tpu.memory_space<vmem>>, vector<8x256xf32>,
    return
  }
  func.func @transform_0(%arg0: i32) -> (i32, i32) {
    %c0_i32 = arith.constant 0 : i32
    %c0_i32_0 = arith.constant 0 : i32
    return %arg0, %c0_i32 : i32, i32
  }
  func.func @transform_1(%arg0: i32) -> (i32, i32) {
    %c0_i32 = arith.constant 0 : i32
    %c0_i32_0 = arith.constant 0 : i32
    %c0_i32_1 = arith.constant 0 : i32
    return %c0_i32, %c0_i32_0 : i32, i32
  }
  func.func @transform_2(%arg0: i32) -> (i32, i32) {
    %c0_i32 = arith.constant 0 : i32
    %c0_i32_0 = arith.constant 0 : i32
    %c0_i32_1 = arith.constant 0 : i32
    return %c0_i32, %c0_i32_0 : i32, i32
  }
  func.func @transform_3(%arg0: i32) -> (i32, i32) {
    %c0_i32 = arith.constant 0 : i32
    %c0_i32_0 = arith.constant 0 : i32
    %c0_i32_1 = arith.constant 0 : i32
    return %c0_i32, %c0_i32_0 : i32, i32
  }
  func.func @transform_4(%arg0: i32) -> (i32, i32) {
    %c0_i32 = arith.constant 0 : i32
    %c0_i32_0 = arith.constant 0 : i32
    %c0_i32_1 = arith.constant 0 : i32
    return %c0_i32, %c0_i32_0 : i32, i32
  }
  func.func @transform_5(%arg0: i32) -> (i32, i32) {
    %c0_i32 = arith.constant 0 : i32
    %c0_i32_0 = arith.constant 0 : i32
    return %arg0, %c0_i32 : i32, i32
  }
}

module attributes {stable_mosaic.version = 11 : i64} {
  func.func @_resample_norm_kernel(%arg0: i32, %arg1: memref<8x128xf32, #tpu.memory_space<vmem>>, %arg2: memref<128x256xf32, #tpu.memory_space<vmem>>, %arg3: memref<256x256xf32, #tpu.memory_space<vmem>>, %arg4: memref<1x256xf32, #tpu.memory_space<vmem>>, %arg5: memref<1x256xf32, #tpu.memory_space<vmem>>, %arg6: memref<8x256xf32, #tpu.memory_space<vmem>>) attributes {dimension_semantics = [#tpu.dimension_semantics<parallel>], iteration_bounds = array<i64: 1>, scalar_prefetch = 0 : i64, scratch_operands = 0 : i64, tpu.core_type = #tpu.core_type<tc>, window_params = [{transform_indices = @transform_0, window_bounds = array<i64: 8, 128>}, {pipeline_mode = #tpu.pipeline_mode<synchronous>, transform_indices = @transform_1, window_bounds = array<i64: 128, 256>}, {pipeline_mode = #tpu.pipeline_mode<synchronous>, transform_indices = @transform_2, window_bounds = array<i64: 256, 256>}, {pipeline_mode = #tpu.pipeline_mode<synchronous>, transform_indices = @transform_3, window_bounds = array<i64: 1, 256>}, {pipeline_mode = #tpu.pipeline_mode<synchronous>, transform_indices = @transform_4, window_bounds = array<i64: 1, 256>}, {transform_indices = @transform_5, window_bounds = array<i64: 8, 256>}]} {
    %c0 = arith.constant 0 : index
    %c0_0 = arith.constant 0 : index
    %0 = vector.load %arg1[%c0, %c0_0] : memref<8x128xf32, #tpu.memory_space<vmem>>, vector<8x128xf32>
    %c0_1 = arith.constant 0 : index
    %c0_2 = arith.constant 0 : index
    %1 = vector.load %arg2[%c0_1, %c0_2] : memref<128x256xf32, #tpu.memory_space<vmem>>, vector<128x256xf32>
    %cst = arith.constant dense<0.000000e+00> : vector<8x256xf32>
    %2 = tpu.matmul %0, %1, %cst {dimension_numbers = #tpu.dot_dimension_numbers<[1], [0], [0], [1], [0, 0, 1, 1], [], []>, precision = #tpu.contract_precision<fp32>} : vector<8x128xf32>, vector<128x256xf32>, vector<8x256xf32> -> vector<8x256xf32>
    %3 = arith.mulf %2, %2 : vector<8x256xf32>
    %c0_3 = arith.constant 0 : index
    %c0_4 = arith.constant 0 : index
    %4 = vector.load %arg3[%c0_3, %c0_4] : memref<256x256xf32, #tpu.memory_space<vmem>>, vector<256x256xf32>
    %cst_5 = arith.constant dense<0.000000e+00> : vector<8x256xf32>
    %5 = tpu.matmul %3, %4, %cst_5 {dimension_numbers = #tpu.dot_dimension_numbers<[1], [0], [0], [1], [0, 0, 1, 1], [], []>, precision = #tpu.contract_precision<fp32>} : vector<8x256xf32>, vector<256x256xf32>, vector<8x256xf32> -> vector<8x256xf32>
    %cst_6 = arith.constant 9.99999974E-6 : f32
    %6 = vector.broadcast %cst_6 : f32 to vector<8x256xf32>
    %7 = arith.addf %5, %6 : vector<8x256xf32>
    %8 = math.rsqrt %7 : vector<8x256xf32>
    %9 = arith.mulf %2, %8 : vector<8x256xf32>
    %c0_7 = arith.constant 0 : index
    %c0_8 = arith.constant 0 : index
    %10 = vector.load %arg4[%c0_7, %c0_8] : memref<1x256xf32, #tpu.memory_space<vmem>>, vector<1x256xf32>
    %11 = vector.broadcast %10 : vector<1x256xf32> to vector<8x256xf32>
    %12 = arith.mulf %9, %11 : vector<8x256xf32>
    %c0_9 = arith.constant 0 : index
    %c0_10 = arith.constant 0 : index
    %13 = vector.load %arg5[%c0_9, %c0_10] : memref<1x256xf32, #tpu.memory_space<vmem>>, vector<1x256xf32>
    %14 = vector.broadcast %13 : vector<1x256xf32> to vector<8x256xf32>
    %15 = arith.addf %12, %14 : vector<8x256xf32>
    %c0_11 = arith.constant 0 : index
    %c0_12 = arith.constant 0 : index
    %16 = vector.load %arg6[%c0_11, %c0_12] : memref<8x256xf32, #tpu.memory_space<vmem>>, vector<8x256xf32>
    tpu.vector_store %arg6[%c0_11, %c0_12], %15 {strides = array<i32>} : memref<8x256xf32, #tpu.memory_space<vmem>>, vector<8x256xf32>,
    return
  }
  func.func @transform_0(%arg0: i32) -> (i32, i32) {
    %c0_i32 = arith.constant 0 : i32
    %c0_i32_0 = arith.constant 0 : i32
    return %arg0, %c0_i32 : i32, i32
  }
  func.func @transform_1(%arg0: i32) -> (i32, i32) {
    %c0_i32 = arith.constant 0 : i32
    %c0_i32_0 = arith.constant 0 : i32
    %c0_i32_1 = arith.constant 0 : i32
    return %c0_i32, %c0_i32_0 : i32, i32
  }
  func.func @transform_2(%arg0: i32) -> (i32, i32) {
    %c0_i32 = arith.constant 0 : i32
    %c0_i32_0 = arith.constant 0 : i32
    %c0_i32_1 = arith.constant 0 : i32
    return %c0_i32, %c0_i32_0 : i32, i32
  }
  func.func @transform_3(%arg0: i32) -> (i32, i32) {
    %c0_i32 = arith.constant 0 : i32
    %c0_i32_0 = arith.constant 0 : i32
    %c0_i32_1 = arith.constant 0 : i32
    return %c0_i32, %c0_i32_0 : i32, i32
  }
  func.func @transform_4(%arg0: i32) -> (i32, i32) {
    %c0_i32 = arith.constant 0 : i32
    %c0_i32_0 = arith.constant 0 : i32
    %c0_i32_1 = arith.constant 0 : i32
    return %c0_i32, %c0_i32_0 : i32, i32
  }
  func.func @transform_5(%arg0: i32) -> (i32, i32) {
    %c0_i32 = arith.constant 0 : i32
    %c0_i32_0 = arith.constant 0 : i32
    return %arg0, %c0_i32 : i32, i32
  }
}

</mosaic_0001>

<llo_original>
// kernel: tpu_custom_call.1
$region0: #{tpu_custom_call.1}
  #allocation0 [shape = 'u32[]', space=smem, size = 0x4, offset = 0x4, fixed_abs, tag = 'smem constant byte address 0x4 - core index']
  #allocation1 [shape = 'u32[72,128]{1,0:T(1,128)}', space=vmem, size = 0x9000, scoped, tag = 'internal scratch']
  %s0 = inlined_call_operand.hbm [shape: f32[8,128], index: 0, kind: input, shape index: {}]
  %s1 = inlined_call_operand.hbm [shape: f32[128,256], index: 1, kind: input, shape index: {}]
  %s2 = inlined_call_operand.hbm [shape: f32[256,256], index: 2, kind: input, shape index: {}]
  %s3 = inlined_call_operand.vmem [shape: f32[1,256], index: 3, kind: input, shape index: {}]
  %s4 = inlined_call_operand.hbm [shape: f32[1,256], index: 4, kind: input, shape index: {}]
  %s5 = inlined_call_operand.hbm [shape: f32[8,256], index: 5, kind: output, shape index: {}]
  %s6 = sld [smem:[#allocation0]]
  $region46: #{tpu_custom_call.1} parent=0
    _
  %s8 = ssub.s32 1, %s6
  %s9 = scalar_select 0, %s8, %s6
  $region1: #{tpu_custom_call.1} parent=0
    #allocation2 [shape = 'u8[4096]{0}', space=vmem, size = 0x1000, scoped, tag = 'input window, operand 0, single buffered']
    #allocation3 [shape = 's32[1]{0}', space=sflag, size = 0x4, scoped, tag = 'scoped memory for tpu_custom_call.1']
    #allocation4 [shape = 's32[1]{0}', space=sflag, size = 0x4, scoped, tag = 'scoped memory for tpu_custom_call.1']
    #allocation5 [shape = 'u8[131072]{0}', space=vmem, size = 0x20000, scoped, tag = 'input window, operand 1, single buffered']
    #allocation6 [shape = 's32[1]{0}', space=sflag, size = 0x4, scoped, tag = 'scoped memory for tpu_custom_call.1']
    #allocation7 [shape = 'u8[262144]{0}', space=vmem, size = 0x40000, scoped, tag = 'input window, operand 2, single buffered']
    #allocation8 [shape = 'u8[1024]{0}', space=vmem, size = 0x400, scoped, tag = 'input window, operand 4, single buffered']
    #allocation9 [shape = 's32[1]{0}', space=sflag, size = 0x4, scoped, tag = 'scoped memory for tpu_custom_call.1']
    #allocation10 [shape = 'u8[8192]{0}', space=vmem, size = 0x2000, scoped, tag = 'output window, operand 0, single buffered']
    %10 = vsyncpa [#allocation3], 0
    %11 = vsyncpa [#allocation6], 0
    %12 = vsyncpa [#allocation9], 0
    %13 = vsyncpa [#allocation4], 0
    // Predicated region
    $region2: #{tpu_custom_call.1} parent=1 // pred_check
      _
    $region3: #{tpu_custom_call.1} parent=1 // pred_check_branch
      %15 = sbr.rel (0) target = $region5
    $region4: #{tpu_custom_call.1} parent=1 // pred_region
      %17 = vsyncadd [#allocation3], 0
      %s19 = sshll.u32 %s0, 4
      %s20 = int_to_ptr.hbm [resolvable:$true] %s19
      %s21 = sshll.u32 [#allocation2], 4
      %s22 = int_to_ptr.vmem [resolvable:$true] %s21
      %24 = dma.hbm_to_vmem [thread:$0]  %s20, 128, %s22, [#allocation3]
    $region5: #{tpu_custom_call.1} parent=1 // pred_fallthru
      _
    // Predicated region
    $region6: #{tpu_custom_call.1} parent=1 // pred_check
      _
    $region7: #{tpu_custom_call.1} parent=1 // pred_check_branch
      %26 = sbr.rel (0) target = $region9
    $region8: #{tpu_custom_call.1} parent=1 // pred_region
      %28 = vsyncadd [#allocation6], 0
      %s29 = sshll.u32 %s1, 4
      %s30 = int_to_ptr.hbm [resolvable:$true] %s29
      %s31 = sshll.u32 [#allocation5], 4
      %s32 = int_to_ptr.vmem [resolvable:$true] %s31
      %37 = dma.hbm_to_vmem [thread:$0]  %s30, 4096, %s32, [#allocation6], 256, 256, 16
    $region9: #{tpu_custom_call.1} parent=1 // pred_fallthru
      _
    // Predicated region
    $region10: #{tpu_custom_call.1} parent=1 // pred_check
      _
    $region11: #{tpu_custom_call.1} parent=1 // pred_check_branch
      %39 = sbr.rel (0) target = $region13
    $region12: #{tpu_custom_call.1} parent=1 // pred_region
      %41 = vsyncadd [#allocation6], 0
      %s42 = sshll.u32 %s2, 4
      %s43 = int_to_ptr.hbm [resolvable:$true] %s42
      %s44 = sshll.u32 [#allocation7], 4
      %s45 = int_to_ptr.vmem [resolvable:$true] %s44
      %50 = dma.hbm_to_vmem [thread:$0]  %s43, 8192, %s45, [#allocation6], 256, 256, 16
    $region13: #{tpu_custom_call.1} parent=1 // pred_fallthru
      _
    // Predicated region
    $region14: #{tpu_custom_call.1} parent=1 // pred_check
      _
    $region15: #{tpu_custom_call.1} parent=1 // pred_check_branch
      %52 = sbr.rel (0) target = $region17
    $region16: #{tpu_custom_call.1} parent=1 // pred_region
      _
    $region17: #{tpu_custom_call.1} parent=1 // pred_fallthru
      _
    // Predicated region
    $region18: #{tpu_custom_call.1} parent=1 // pred_check
      _
    $region19: #{tpu_custom_call.1} parent=1 // pred_check_branch
      %54 = sbr.rel (0) target = $region21
    $region20: #{tpu_custom_call.1} parent=1 // pred_region
      %56 = vsyncadd [#allocation9], 0
      %s58 = sshll.u32 %s4, 4
      %s59 = int_to_ptr.hbm [resolvable:$true] %s58
      %s60 = sshll.u32 [#allocation8], 4
      %s61 = int_to_ptr.vmem [resolvable:$true] %s60
      %63 = dma.hbm_to_vmem [thread:$0]  %s59, 32, %s61, [#allocation9]
    $region21: #{tpu_custom_call.1} parent=1 // pred_fallthru
      _
    // Predicated region
    $region22: #{tpu_custom_call.1} parent=1 // pred_check
      _
    $region23: #{tpu_custom_call.1} parent=1 // pred_check_branch
      %65 = sbr.rel (0) target = $region25
    $region24: #{tpu_custom_call.1} parent=1 // pred_region
      %67 = dma.done [#allocation3], 128
    $region25: #{tpu_custom_call.1} parent=1 // pred_fallthru
      _
    // Predicated region
    $region26: #{tpu_custom_call.1} parent=1 // pred_check
      _
    $region27: #{tpu_custom_call.1} parent=1 // pred_check_branch
      %69 = sbr.rel (0) target = $region29
    $region28: #{tpu_custom_call.1} parent=1 // pred_region
      %71 = dma.done [#allocation6], 4096
    $region29: #{tpu_custom_call.1} parent=1 // pred_fallthru
      _
    // Predicated region
    $region30: #{tpu_custom_call.1} parent=1 // pred_check
      _
    $region31: #{tpu_custom_call.1} parent=1 // pred_check_branch
      %73 = sbr.rel (0) target = $region33
    $region32: #{tpu_custom_call.1} parent=1 // pred_region
      %75 = dma.done [#allocation6], 8192
    $region33: #{tpu_custom_call.1} parent=1 // pred_fallthru
      _
    // Predicated region
    $region34: #{tpu_custom_call.1} parent=1 // pred_check
      _
    $region35: #{tpu_custom_call.1} parent=1 // pred_check_branch
      %77 = sbr.rel (0) target = $region37
    $region36: #{tpu_custom_call.1} parent=1 // pred_region
      %79 = dma.done [#allocation9], 32
    $region37: #{tpu_custom_call.1} parent=1 // pred_fallthru
      _
    %v80 = vld [vmem:[#allocation2] sm:$0xff]
    %v81 = vld [vmem:[#allocation5] sm:$0xff]
    %v82 = vld [vmem:[#allocation5 + $0x8] sm:$0xff]
    %v83 = vld [vmem:[#allocation5 + $0x10] sm:$0xff]
    %v84 = vld [vmem:[#allocation5 + $0x18] sm:$0xff]
    %v85 = vld [vmem:[#allocation5 + $0x20] sm:$0xff]
    %v86 = vld [vmem:[#allocation5 + $0x28] sm:$0xff]
    %v87 = vld [vmem:[#allocation5 + $0x30] sm:$0xff]
    %v88 = vld [vmem:[#allocation5 + $0x38] sm:$0xff]
    %v89 = vld [vmem:[#allocation5 + $0x40] sm:$0xff]
    %v90 = vld [vmem:[#allocation5 + $0x48] sm:$0xff]
    %v91 = vld [vmem:[#allocation5 + $0x50] sm:$0xff]
    %v92 = vld [vmem:[#allocation5 + $0x58] sm:$0xff]
    %v93 = vld [vmem:[#allocation5 + $0x60] sm:$0xff]
    %v94 = vld [vmem:[#allocation5 + $0x68] sm:$0xff]
    %v95 = vld [vmem:[#allocation5 + $0x70] sm:$0xff]
    %v96 = vld [vmem:[#allocation5 + $0x78] sm:$0xff]
    %v97 = vld [vmem:[#allocation5 + $0x80] sm:$0xff]
    %v98 = vld [vmem:[#allocation5 + $0x88] sm:$0xff]
    %v99 = vld [vmem:[#allocation5 + $0x90] sm:$0xff]
    %v100 = vld [vmem:[#allocation5 + $0x98] sm:$0xff]
    %v101 = vld [vmem:[#allocation5 + $0xa0] sm:$0xff]
    %v102 = vld [vmem:[#allocation5 + $0xa8] sm:$0xff]
    %v103 = vld [vmem:[#allocation5 + $0xb0] sm:$0xff]
    %v104 = vld [vmem:[#allocation5 + $0xb8] sm:$0xff]
    %v105 = vld [vmem:[#allocation5 + $0xc0] sm:$0xff]
    %v106 = vld [vmem:[#allocation5 + $0xc8] sm:$0xff]
    %v107 = vld [vmem:[#allocation5 + $0xd0] sm:$0xff]
    %v108 = vld [vmem:[#allocation5 + $0xd8] sm:$0xff]
    %v109 = vld [vmem:[#allocation5 + $0xe0] sm:$0xff]
    %v110 = vld [vmem:[#allocation5 + $0xe8] sm:$0xff]
    %v111 = vld [vmem:[#allocation5 + $0xf0] sm:$0xff]
    %v112 = vld [vmem:[#allocation5 + $0xf8] sm:$0xff]
    %v113 = vand.u32 %v111, 4294901760
    %114 = vmatpush.msra.mxu0 %v113
    %v115 = vand.u32 %v109, 4294901760
    %116 = vmatpush.msra.mxu0 %v115
    %v117 = vand.u32 %v107, 4294901760
    %118 = vmatpush.msra.mxu0 %v117
    %v119 = vand.u32 %v105, 4294901760
    %120 = vmatpush.msra.mxu0 %v119
    %v121 = vand.u32 %v103, 4294901760
    %122 = vmatpush.msra.mxu0 %v121
    %v123 = vand.u32 %v101, 4294901760
    %124 = vmatpush.msra.mxu0 %v123
    %v125 = vand.u32 %v99, 4294901760
    %126 = vmatpush.msra.mxu0 %v125
    %v127 = vand.u32 %v97, 4294901760
    %128 = vmatpush.msra.mxu0 %v127
    %v129 = vand.u32 %v95, 4294901760
    %130 = vmatpush.msra.mxu0 %v129
    %v131 = vand.u32 %v93, 4294901760
    %132 = vmatpush.msra.mxu0 %v131
    %v133 = vand.u32 %v91, 4294901760
    %134 = vmatpush.msra.mxu0 %v133
    %v135 = vand.u32 %v89, 4294901760
    %136 = vmatpush.msra.mxu0 %v135
    %v137 = vand.u32 %v87, 4294901760
    %138 = vmatpush.msra.mxu0 %v137
    %v139 = vand.u32 %v85, 4294901760
    %140 = vmatpush.msra.mxu0 %v139
    %v141 = vand.u32 %v83, 4294901760
    %142 = vmatpush.msra.mxu0 %v141
    %v143 = vand.u32 %v81, 4294901760
    %144 = vmatpush.msra.mxu0 %v143
    %v145 = vand.u32 %v80, 4294901760
    %v146 = vsub.f32 %v80, %v145
    %v147 = vand.u32 %v146, 4294901760
    %v148 = vsub.f32 %v146, %v147
    %v149 = vand.u32 %v148, 4294901760
    %150 = vmatmul.f32.gmra.mxu0 %v149
    %v151 = vpop.f32.mrf.mxu0
    %v152 = vadd.f32 0.0, %v151
    %153 = vdwg.mxu0
    %v154 = vand.u32 %v111, 4294901760
    %v155 = vsub.f32 %v111, %v154
    %v156 = vand.u32 %v155, 4294901760
    %v157 = vsub.f32 %v155, %v156
    %v158 = vand.u32 %v157, 4294901760
    %159 = vmatpush.msra.mxu0 %v158
    %v160 = vand.u32 %v109, 4294901760
    %v161 = vsub.f32 %v109, %v160
    %v162 = vand.u32 %v161, 4294901760
    %v163 = vsub.f32 %v161, %v162
    %v164 = vand.u32 %v163, 4294901760
    %165 = vmatpush.msra.mxu0 %v164
    %v166 = vand.u32 %v107, 4294901760
    %v167 = vsub.f32 %v107, %v166
    %v168 = vand.u32 %v167, 4294901760
    %v169 = vsub.f32 %v167, %v168
    %v170 = vand.u32 %v169, 4294901760
    %171 = vmatpush.msra.mxu0 %v170
    %v172 = vand.u32 %v105, 4294901760
    %v173 = vsub.f32 %v105, %v172
    %v174 = vand.u32 %v173, 4294901760
    %v175 = vsub.f32 %v173, %v174
    %v176 = vand.u32 %v175, 4294901760
    %177 = vmatpush.msra.mxu0 %v176
    %v178 = vand.u32 %v103, 4294901760
    %v179 = vsub.f32 %v103, %v178
    %v180 = vand.u32 %v179, 4294901760
    %v181 = vsub.f32 %v179, %v180
    %v182 = vand.u32 %v181, 4294901760
    %183 = vmatpush.msra.mxu0 %v182
    %v184 = vand.u32 %v101, 4294901760
    %v185 = vsub.f32 %v101, %v184
    %v186 = vand.u32 %v185, 4294901760
    %v187 = vsub.f32 %v185, %v186
    %v188 = vand.u32 %v187, 4294901760
    %189 = vmatpush.msra.mxu0 %v188
    %v190 = vand.u32 %v99, 4294901760
    %v191 = vsub.f32 %v99, %v190
    %v192 = vand.u32 %v191, 4294901760
    %v193 = vsub.f32 %v191, %v192
    %v194 = vand.u32 %v193, 4294901760
    %195 = vmatpush.msra.mxu0 %v194
    %v196 = vand.u32 %v97, 4294901760
    %v197 = vsub.f32 %v97, %v196
    %v198 = vand.u32 %v197, 4294901760
    %v199 = vsub.f32 %v197, %v198
    %v200 = vand.u32 %v199, 4294901760
    %201 = vmatpush.msra.mxu0 %v200
    %v202 = vand.u32 %v95, 4294901760
    %v203 = vsub.f32 %v95, %v202
    %v204 = vand.u32 %v203, 4294901760
    %v205 = vsub.f32 %v203, %v204
    %v206 = vand.u32 %v205, 4294901760
    %207 = vmatpush.msra.mxu0 %v206
    %v208 = vand.u32 %v93, 4294901760
    %v209 = vsub.f32 %v93, %v208
    %v210 = vand.u32 %v209, 4294901760
    %v211 = vsub.f32 %v209, %v210
    %v212 = vand.u32 %v211, 4294901760
    %213 = vmatpush.msra.mxu0 %v212
    %v214 = vand.u32 %v91, 4294901760
    %v215 = vsub.f32 %v91, %v214
    %v216 = vand.u32 %v215, 4294901760
    %v217 = vsub.f32 %v215, %v216
    %v218 = vand.u32 %v217, 4294901760
    %219 = vmatpush.msra.mxu0 %v218
    %v220 = vand.u32 %v89, 4294901760
    %v221 = vsub.f32 %v89, %v220
    %v222 = vand.u32 %v221, 4294901760
    %v223 = vsub.f32 %v221, %v222
    %v224 = vand.u32 %v223, 4294901760
    %225 = vmatpush.msra.mxu0 %v224
    %v226 = vand.u32 %v87, 4294901760
    %v227 = vsub.f32 %v87, %v226
    %v228 = vand.u32 %v227, 4294901760
    %v229 = vsub.f32 %v227, %v228
    %v230 = vand.u32 %v229, 4294901760
    %231 = vmatpush.msra.mxu0 %v230
    %v232 = vand.u32 %v85, 4294901760
    %v233 = vsub.f32 %v85, %v232
    %v234 = vand.u32 %v233, 4294901760
    %v235 = vsub.f32 %v233, %v234
    %v236 = vand.u32 %v235, 4294901760
    %237 = vmatpush.msra.mxu0 %v236
    %v238 = vand.u32 %v83, 4294901760
    %v239 = vsub.f32 %v83, %v238
    %v240 = vand.u32 %v239, 4294901760
    %v241 = vsub.f32 %v239, %v240
    %v242 = vand.u32 %v241, 4294901760
    %243 = vmatpush.msra.mxu0 %v242
    %v244 = vand.u32 %v81, 4294901760
    %v245 = vsub.f32 %v81, %v244
    %v246 = vand.u32 %v245, 4294901760
    %v247 = vsub.f32 %v245, %v246
    %v248 = vand.u32 %v247, 4294901760
    %249 = vmatpush.msra.mxu0 %v248
    %v250 = vand.u32 %v80, 4294901760
    %251 = vmatmul.f32.gmra.mxu0 %v250
    %v252 = vpop.f32.mrf.mxu0
    %v253 = vadd.f32 %v152, %v252
    %254 = vdwg.mxu0
    %v255 = vand.u32 %v111, 4294901760
    %v256 = vsub.f32 %v111, %v255
    %257 = vmatpush.msra.mxu0 %v256
    %v258 = vand.u32 %v109, 4294901760
    %v259 = vsub.f32 %v109, %v258
    %260 = vmatpush.msra.mxu0 %v259
    %v261 = vand.u32 %v107, 4294901760
    %v262 = vsub.f32 %v107, %v261
    %263 = vmatpush.msra.mxu0 %v262
    %v264 = vand.u32 %v105, 4294901760
    %v265 = vsub.f32 %v105, %v264
    %266 = vmatpush.msra.mxu0 %v265
    %v267 = vand.u32 %v103, 4294901760
    %v268 = vsub.f32 %v103, %v267
    %269 = vmatpush.msra.mxu0 %v268
    %v270 = vand.u32 %v101, 4294901760
    %v271 = vsub.f32 %v101, %v270
    %272 = vmatpush.msra.mxu0 %v271
    %v273 = vand.u32 %v99, 4294901760
    %v274 = vsub.f32 %v99, %v273
    %275 = vmatpush.msra.mxu0 %v274
    %v276 = vand.u32 %v97, 4294901760
    %v277 = vsub.f32 %v97, %v276
    %278 = vmatpush.msra.mxu0 %v277
    %v279 = vand.u32 %v95, 4294901760
    %v280 = vsub.f32 %v95, %v279
    %281 = vmatpush.msra.mxu0 %v280
    %v282 = vand.u32 %v93, 4294901760
    %v283 = vsub.f32 %v93, %v282
    %284 = vmatpush.msra.mxu0 %v283
    %v285 = vand.u32 %v91, 4294901760
    %v286 = vsub.f32 %v91, %v285
    %287 = vmatpush.msra.mxu0 %v286
    %v288 = vand.u32 %v89, 4294901760
    %v289 = vsub.f32 %v89, %v288
    %290 = vmatpush.msra.mxu0 %v289
    %v291 = vand.u32 %v87, 4294901760
    %v292 = vsub.f32 %v87, %v291
    %293 = vmatpush.msra.mxu0 %v292
    %v294 = vand.u32 %v85, 4294901760
    %v295 = vsub.f32 %v85, %v294
    %296 = vmatpush.msra.mxu0 %v295
    %v297 = vand.u32 %v83, 4294901760
    %v298 = vsub.f32 %v83, %v297
    %299 = vmatpush.msra.mxu0 %v298
    %v300 = vand.u32 %v81, 4294901760
    %v301 = vsub.f32 %v81, %v300
    %302 = vmatpush.msra.mxu0 %v301
    %v303 = vand.u32 %v80, 4294901760
    %v304 = vsub.f32 %v80, %v303
    %305 = vmatmul.f32.gmra.mxu0 %v304
    %v306 = vpop.f32.mrf.mxu0
    %v307 = vadd.f32 %v253, %v306
    %308 = vdwg.mxu0
    %v309 = vand.u32 %v111, 4294901760
    %310 = vmatpush.msra.mxu0 %v309
    %v311 = vand.u32 %v109, 4294901760
    %312 = vmatpush.msra.mxu0 %v311
    %v313 = vand.u32 %v107, 4294901760
    %314 = vmatpush.msra.mxu0 %v313
    %v315 = vand.u32 %v105, 4294901760
    %316 = vmatpush.msra.mxu0 %v315
    %v317 = vand.u32 %v103, 4294901760
    %318 = vmatpush.msra.mxu0 %v317
    %v319 = vand.u32 %v101, 4294901760
    %320 = vmatpush.msra.mxu0 %v319
    %v321 = vand.u32 %v99, 4294901760
    %322 = vmatpush.msra.mxu0 %v321
    %v323 = vand.u32 %v97, 4294901760
    %324 = vmatpush.msra.mxu0 %v323
    %v325 = vand.u32 %v95, 4294901760
    %326 = vmatpush.msra.mxu0 %v325
    %v327 = vand.u32 %v93, 4294901760
    %328 = vmatpush.msra.mxu0 %v327
    %v329 = vand.u32 %v91, 4294901760
    %330 = vmatpush.msra.mxu0 %v329
    %v331 = vand.u32 %v89, 4294901760
    %332 = vmatpush.msra.mxu0 %v331
    %v333 = vand.u32 %v87, 4294901760
    %334 = vmatpush.msra.mxu0 %v333
    %v335 = vand.u32 %v85, 4294901760
    %336 = vmatpush.msra.mxu0 %v335
    %v337 = vand.u32 %v83, 4294901760
    %338 = vmatpush.msra.mxu0 %v337
    %v339 = vand.u32 %v81, 4294901760
    %340 = vmatpush.msra.mxu0 %v339
    %v341 = vand.u32 %v80, 4294901760
    %v342 = vsub.f32 %v80, %v341
    %v343 = vand.u32 %v342, 4294901760
    %344 = vmatmul.f32.gmra.mxu0 %v343
    %v345 = vpop.f32.mrf.mxu0
    %v346 = vadd.f32 %v307, %v345
    %347 = vdwg.mxu0
    %v348 = vand.u32 %v111, 4294901760
    %v349 = vsub.f32 %v111, %v348
    %v350 = vand.u32 %v349, 4294901760
    %351 = vmatpush.msra.mxu0 %v350
    %v352 = vand.u32 %v109, 4294901760
    %v353 = vsub.f32 %v109, %v352
    %v354 = vand.u32 %v353, 4294901760
    %355 = vmatpush.msra.mxu0 %v354
    %v356 = vand.u32 %v107, 4294901760
    %v357 = vsub.f32 %v107, %v356
    %v358 = vand.u32 %v357, 4294901760
    %359 = vmatpush.msra.mxu0 %v358
    %v360 = vand.u32 %v105, 4294901760
    %v361 = vsub.f32 %v105, %v360
    %v362 = vand.u32 %v361, 4294901760
    %363 = vmatpush.msra.mxu0 %v362
    %v364 = vand.u32 %v103, 4294901760
    %v365 = vsub.f32 %v103, %v364
    %v366 = vand.u32 %v365, 4294901760
    %367 = vmatpush.msra.mxu0 %v366
    %v368 = vand.u32 %v101, 4294901760
    %v369 = vsub.f32 %v101, %v368
    %v370 = vand.u32 %v369, 4294901760
    %371 = vmatpush.msra.mxu0 %v370
    %v372 = vand.u32 %v99, 4294901760
    %v373 = vsub.f32 %v99, %v372
    %v374 = vand.u32 %v373, 4294901760
    %375 = vmatpush.msra.mxu0 %v374
    %v376 = vand.u32 %v97, 4294901760
    %v377 = vsub.f32 %v97, %v376
    %v378 = vand.u32 %v377, 4294901760
    %379 = vmatpush.msra.mxu0 %v378
    %v380 = vand.u32 %v95, 4294901760
    %v381 = vsub.f32 %v95, %v380
    %v382 = vand.u32 %v381, 4294901760
    %383 = vmatpush.msra.mxu0 %v382
    %v384 = vand.u32 %v93, 4294901760
    %v385 = vsub.f32 %v93, %v384
    %v386 = vand.u32 %v385, 4294901760
    %387 = vmatpush.msra.mxu0 %v386
    %v388 = vand.u32 %v91, 4294901760
    %v389 = vsub.f32 %v91, %v388
    %v390 = vand.u32 %v389, 4294901760
    %391 = vmatpush.msra.mxu0 %v390
    %v392 = vand.u32 %v89, 4294901760
    %v393 = vsub.f32 %v89, %v392
    %v394 = vand.u32 %v393, 4294901760
    %395 = vmatpush.msra.mxu0 %v394
    %v396 = vand.u32 %v87, 4294901760
    %v397 = vsub.f32 %v87, %v396
    %v398 = vand.u32 %v397, 4294901760
    %399 = vmatpush.msra.mxu0 %v398
    %v400 = vand.u32 %v85, 4294901760
    %v401 = vsub.f32 %v85, %v400
    %v402 = vand.u32 %v401, 4294901760
    %403 = vmatpush.msra.mxu0 %v402
    %v404 = vand.u32 %v83, 4294901760
    %v405 = vsub.f32 %v83, %v404
    %v406 = vand.u32 %v405, 4294901760
    %407 = vmatpush.msra.mxu0 %v406
    %v408 = vand.u32 %v81, 4294901760
    %v409 = vsub.f32 %v81, %v408
    %v410 = vand.u32 %v409, 4294901760
    %411 = vmatpush.msra.mxu0 %v410
    %v412 = vand.u32 %v80, 4294901760
    %413 = vmatmul.f32.gmra.mxu0 %v412
    %v414 = vpop.f32.mrf.mxu0
    %v415 = vadd.f32 %v346, %v414
    %416 = vdwg.mxu0
    %v417 = vand.u32 %v111, 4294901760
    %418 = vmatpush.msra.mxu0 %v417
    %v419 = vand.u32 %v109, 4294901760
    %420 = vmatpush.msra.mxu0 %v419
    %v421 = vand.u32 %v107, 4294901760
    %422 = vmatpush.msra.mxu0 %v421
    %v423 = vand.u32 %v105, 4294901760
    %424 = vmatpush.msra.mxu0 %v423
    %v425 = vand.u32 %v103, 4294901760
    %426 = vmatpush.msra.mxu0 %v425
    %v427 = vand.u32 %v101, 4294901760
    %428 = vmatpush.msra.mxu0 %v427
    %v429 = vand.u32 %v99, 4294901760
    %430 = vmatpush.msra.mxu0 %v429
    %v431 = vand.u32 %v97, 4294901760
    %432 = vmatpush.msra.mxu0 %v431
    %v433 = vand.u32 %v95, 4294901760
    %434 = vmatpush.msra.mxu0 %v433
    %v435 = vand.u32 %v93, 4294901760
    %436 = vmatpush.msra.mxu0 %v435
    %v437 = vand.u32 %v91, 4294901760
    %438 = vmatpush.msra.mxu0 %v437
    %v439 = vand.u32 %v89, 4294901760
    %440 = vmatpush.msra.mxu0 %v439
    %v441 = vand.u32 %v87, 4294901760
    %442 = vmatpush.msra.mxu0 %v441
    %v443 = vand.u32 %v85, 4294901760
    %444 = vmatpush.msra.mxu0 %v443
    %v445 = vand.u32 %v83, 4294901760
    %446 = vmatpush.msra.mxu0 %v445
    %v447 = vand.u32 %v81, 4294901760
    %448 = vmatpush.msra.mxu0 %v447
    %v449 = vand.u32 %v80, 4294901760
    %450 = vmatmul.f32.gmra.mxu0 %v449
    %v451 = vpop.f32.mrf.mxu0
    %v452 = vadd.f32 %v415, %v451
    %453 = vdwg.mxu0
    %v454 = vand.u32 %v112, 4294901760
    %455 = vmatpush.msra.mxu0 %v454
    %v456 = vand.u32 %v110, 4294901760
    %457 = vmatpush.msra.mxu0 %v456
    %v458 = vand.u32 %v108, 4294901760
    %459 = vmatpush.msra.mxu0 %v458
    %v460 = vand.u32 %v106, 4294901760
    %461 = vmatpush.msra.mxu0 %v460
    %v462 = vand.u32 %v104, 4294901760
    %463 = vmatpush.msra.mxu0 %v462
    %v464 = vand.u32 %v102, 4294901760
    %465 = vmatpush.msra.mxu0 %v464
    %v466 = vand.u32 %v100, 4294901760
    %467 = vmatpush.msra.mxu0 %v466
    %v468 = vand.u32 %v98, 4294901760
    %469 = vmatpush.msra.mxu0 %v468
    %v470 = vand.u32 %v96, 4294901760
    %471 = vmatpush.msra.mxu0 %v470
    %v472 = vand.u32 %v94, 4294901760
    %473 = vmatpush.msra.mxu0 %v472
    %v474 = vand.u32 %v92, 4294901760
    %475 = vmatpush.msra.mxu0 %v474
    %v476 = vand.u32 %v90, 4294901760
    %477 = vmatpush.msra.mxu0 %v476
    %v478 = vand.u32 %v88, 4294901760
    %479 = vmatpush.msra.mxu0 %v478
    %v480 = vand.u32 %v86, 4294901760
    %481 = vmatpush.msra.mxu0 %v480
    %v482 = vand.u32 %v84, 4294901760
    %483 = vmatpush.msra.mxu0 %v482
    %v484 = vand.u32 %v82, 4294901760
    %485 = vmatpush.msra.mxu0 %v484
    %v486 = vand.u32 %v80, 4294901760
    %v487 = vsub.f32 %v80, %v486
    %v488 = vand.u32 %v487, 4294901760
    %v489 = vsub.f32 %v487, %v488
    %v490 = vand.u32 %v489, 4294901760
    %491 = vmatmul.f32.gmra.mxu0 %v490
    %v492 = vpop.f32.mrf.mxu0
    %v493 = vadd.f32 0.0, %v492
    %494 = vdwg.mxu0
    %v495 = vand.u32 %v112, 4294901760
    %v496 = vsub.f32 %v112, %v495
    %v497 = vand.u32 %v496, 4294901760
    %v498 = vsub.f32 %v496, %v497
    %v499 = vand.u32 %v498, 4294901760
    %500 = vmatpush.msra.mxu0 %v499
    %v501 = vand.u32 %v110, 4294901760
    %v502 = vsub.f32 %v110, %v501
    %v503 = vand.u32 %v502, 4294901760
    %v504 = vsub.f32 %v502, %v503
    %v505 = vand.u32 %v504, 4294901760
    %506 = vmatpush.msra.mxu0 %v505
    %v507 = vand.u32 %v108, 4294901760
    %v508 = vsub.f32 %v108, %v507
    %v509 = vand.u32 %v508, 4294901760
    %v510 = vsub.f32 %v508, %v509
    %v511 = vand.u32 %v510, 4294901760
    %512 = vmatpush.msra.mxu0 %v511
    %v513 = vand.u32 %v106, 4294901760
    %v514 = vsub.f32 %v106, %v513
    %v515 = vand.u32 %v514, 4294901760
    %v516 = vsub.f32 %v514, %v515
    %v517 = vand.u32 %v516, 4294901760
    %518 = vmatpush.msra.mxu0 %v517
    %v519 = vand.u32 %v104, 4294901760
    %v520 = vsub.f32 %v104, %v519
    %v521 = vand.u32 %v520, 4294901760
    %v522 = vsub.f32 %v520, %v521
    %v523 = vand.u32 %v522, 4294901760
    %524 = vmatpush.msra.mxu0 %v523
    %v525 = vand.u32 %v102, 4294901760
    %v526 = vsub.f32 %v102, %v525
    %v527 = vand.u32 %v526, 4294901760
    %v528 = vsub.f32 %v526, %v527
    %v529 = vand.u32 %v528, 4294901760
    %530 = vmatpush.msra.mxu0 %v529
    %v531 = vand.u32 %v100, 4294901760
    %v532 = vsub.f32 %v100, %v531
    %v533 = vand.u32 %v532, 4294901760
    %v534 = vsub.f32 %v532, %v533
    %v535 = vand.u32 %v534, 4294901760
    %536 = vmatpush.msra.mxu0 %v535
    %v537 = vand.u32 %v98, 4294901760
    %v538 = vsub.f32 %v98, %v537
    %v539 = vand.u32 %v538, 4294901760
    %v540 = vsub.f32 %v538, %v539
    %v541 = vand.u32 %v540, 4294901760
    %542 = vmatpush.msra.mxu0 %v541
    %v543 = vand.u32 %v96, 4294901760
    %v544 = vsub.f32 %v96, %v543
    %v545 = vand.u32 %v544, 4294901760
    %v546 = vsub.f32 %v544, %v545
    %v547 = vand.u32 %v546, 4294901760
    %548 = vmatpush.msra.mxu0 %v547
    %v549 = vand.u32 %v94, 4294901760
    %v550 = vsub.f32 %v94, %v549
    %v551 = vand.u32 %v550, 4294901760
    %v552 = vsub.f32 %v550, %v551
    %v553 = vand.u32 %v552, 4294901760
    %554 = vmatpush.msra.mxu0 %v553
    %v555 = vand.u32 %v92, 4294901760
    %v556 = vsub.f32 %v92, %v555
    %v557 = vand.u32 %v556, 4294901760
    %v558 = vsub.f32 %v556, %v557
    %v559 = vand.u32 %v558, 4294901760
    %560 = vmatpush.msra.mxu0 %v559
    %v561 = vand.u32 %v90, 4294901760
    %v562 = vsub.f32 %v90, %v561
    %v563 = vand.u32 %v562, 4294901760
    %v564 = vsub.f32 %v562, %v563
    %v565 = vand.u32 %v564, 4294901760
    %566 = vmatpush.msra.mxu0 %v565
    %v567 = vand.u32 %v88, 4294901760
    %v568 = vsub.f32 %v88, %v567
    %v569 = vand.u32 %v568, 4294901760
    %v570 = vsub.f32 %v568, %v569
    %v571 = vand.u32 %v570, 4294901760
    %572 = vmatpush.msra.mxu0 %v571
    %v573 = vand.u32 %v86, 4294901760
    %v574 = vsub.f32 %v86, %v573
    %v575 = vand.u32 %v574, 4294901760
    %v576 = vsub.f32 %v574, %v575
    %v577 = vand.u32 %v576, 4294901760
    %578 = vmatpush.msra.mxu0 %v577
    %v579 = vand.u32 %v84, 4294901760
    %v580 = vsub.f32 %v84, %v579
    %v581 = vand.u32 %v580, 4294901760
    %v582 = vsub.f32 %v580, %v581
    %v583 = vand.u32 %v582, 4294901760
    %584 = vmatpush.msra.mxu0 %v583
    %v585 = vand.u32 %v82, 4294901760
    %v586 = vsub.f32 %v82, %v585
    %v587 = vand.u32 %v586, 4294901760
    %v588 = vsub.f32 %v586, %v587
    %v589 = vand.u32 %v588, 4294901760
    %590 = vmatpush.msra.mxu0 %v589
    %v591 = vand.u32 %v80, 4294901760
    %592 = vmatmul.f32.gmra.mxu0 %v591
    %v593 = vpop.f32.mrf.mxu0
    %v594 = vadd.f32 %v493, %v593
    %595 = vdwg.mxu0
    %v596 = vand.u32 %v112, 4294901760
    %v597 = vsub.f32 %v112, %v596
    %598 = vmatpush.msra.mxu0 %v597
    %v599 = vand.u32 %v110, 4294901760
    %v600 = vsub.f32 %v110, %v599
    %601 = vmatpush.msra.mxu0 %v600
    %v602 = vand.u32 %v108, 4294901760
    %v603 = vsub.f32 %v108, %v602
    %604 = vmatpush.msra.mxu0 %v603
    %v605 = vand.u32 %v106, 4294901760
    %v606 = vsub.f32 %v106, %v605
    %607 = vmatpush.msra.mxu0 %v606
    %v608 = vand.u32 %v104, 4294901760
    %v609 = vsub.f32 %v104, %v608
    %610 = vmatpush.msra.mxu0 %v609
    %v611 = vand.u32 %v102, 4294901760
    %v612 = vsub.f32 %v102, %v611
    %613 = vmatpush.msra.mxu0 %v612
    %v614 = vand.u32 %v100, 4294901760
    %v615 = vsub.f32 %v100, %v614
    %616 = vmatpush.msra.mxu0 %v615
    %v617 = vand.u32 %v98, 4294901760
    %v618 = vsub.f32 %v98, %v617
    %619 = vmatpush.msra.mxu0 %v618
    %v620 = vand.u32 %v96, 4294901760
    %v621 = vsub.f32 %v96, %v620
    %622 = vmatpush.msra.mxu0 %v621
    %v623 = vand.u32 %v94, 4294901760
    %v624 = vsub.f32 %v94, %v623
    %625 = vmatpush.msra.mxu0 %v624
    %v626 = vand.u32 %v92, 4294901760
    %v627 = vsub.f32 %v92, %v626
    %628 = vmatpush.msra.mxu0 %v627
    %v629 = vand.u32 %v90, 4294901760
    %v630 = vsub.f32 %v90, %v629
    %631 = vmatpush.msra.mxu0 %v630
    %v632 = vand.u32 %v88, 4294901760
    %v633 = vsub.f32 %v88, %v632
    %634 = vmatpush.msra.mxu0 %v633
    %v635 = vand.u32 %v86, 4294901760
    %v636 = vsub.f32 %v86, %v635
    %637 = vmatpush.msra.mxu0 %v636
    %v638 = vand.u32 %v84, 4294901760
    %v639 = vsub.f32 %v84, %v638
    %640 = vmatpush.msra.mxu0 %v639
    %v641 = vand.u32 %v82, 4294901760
    %v642 = vsub.f32 %v82, %v641
    %643 = vmatpush.msra.mxu0 %v642
    %v644 = vand.u32 %v80, 4294901760
    %v645 = vsub.f32 %v80, %v644
    %646 = vmatmul.f32.gmra.mxu0 %v645
    %v647 = vpop.f32.mrf.mxu0
    %v648 = vadd.f32 %v594, %v647
    %649 = vdwg.mxu0
    %v650 = vand.u32 %v112, 4294901760
    %651 = vmatpush.msra.mxu0 %v650
    %v652 = vand.u32 %v110, 4294901760
    %653 = vmatpush.msra.mxu0 %v652
    %v654 = vand.u32 %v108, 4294901760
    %655 = vmatpush.msra.mxu0 %v654
    %v656 = vand.u32 %v106, 4294901760
    %657 = vmatpush.msra.mxu0 %v656
    %v658 = vand.u32 %v104, 4294901760
    %659 = vmatpush.msra.mxu0 %v658
    %v660 = vand.u32 %v102, 4294901760
    %661 = vmatpush.msra.mxu0 %v660
    %v662 = vand.u32 %v100, 4294901760
    %663 = vmatpush.msra.mxu0 %v662
    %v664 = vand.u32 %v98, 4294901760
    %665 = vmatpush.msra.mxu0 %v664
    %v666 = vand.u32 %v96, 4294901760
    %667 = vmatpush.msra.mxu0 %v666
    %v668 = vand.u32 %v94, 4294901760
    %669 = vmatpush.msra.mxu0 %v668
    %v670 = vand.u32 %v92, 4294901760
    %671 = vmatpush.msra.mxu0 %v670
    %v672 = vand.u32 %v90, 4294901760
    %673 = vmatpush.msra.mxu0 %v672
    %v674 = vand.u32 %v88, 4294901760
    %675 = vmatpush.msra.mxu0 %v674
    %v676 = vand.u32 %v86, 4294901760
    %677 = vmatpush.msra.mxu0 %v676
    %v678 = vand.u32 %v84, 4294901760
    %679 = vmatpush.msra.mxu0 %v678
    %v680 = vand.u32 %v82, 4294901760
    %681 = vmatpush.msra.mxu0 %v680
    %v682 = vand.u32 %v80, 4294901760
    %v683 = vsub.f32 %v80, %v682
    %v684 = vand.u32 %v683, 4294901760
    %685 = vmatmul.f32.gmra.mxu0 %v684
    %v686 = vpop.f32.mrf.mxu0
    %v687 = vadd.f32 %v648, %v686
    %688 = vdwg.mxu0
    %v689 = vand.u32 %v112, 4294901760
    %v690 = vsub.f32 %v112, %v689
    %v691 = vand.u32 %v690, 4294901760
    %692 = vmatpush.msra.mxu0 %v691
    %v693 = vand.u32 %v110, 4294901760
    %v694 = vsub.f32 %v110, %v693
    %v695 = vand.u32 %v694, 4294901760
    %696 = vmatpush.msra.mxu0 %v695
    %v697 = vand.u32 %v108, 4294901760
    %v698 = vsub.f32 %v108, %v697
    %v699 = vand.u32 %v698, 4294901760
    %700 = vmatpush.msra.mxu0 %v699
    %v701 = vand.u32 %v106, 4294901760
    %v702 = vsub.f32 %v106, %v701
    %v703 = vand.u32 %v702, 4294901760
    %704 = vmatpush.msra.mxu0 %v703
    %v705 = vand.u32 %v104, 4294901760
    %v706 = vsub.f32 %v104, %v705
    %v707 = vand.u32 %v706, 4294901760
    %708 = vmatpush.msra.mxu0 %v707
    %v709 = vand.u32 %v102, 4294901760
    %v710 = vsub.f32 %v102, %v709
    %v711 = vand.u32 %v710, 4294901760
    %712 = vmatpush.msra.mxu0 %v711
    %v713 = vand.u32 %v100, 4294901760
    %v714 = vsub.f32 %v100, %v713
    %v715 = vand.u32 %v714, 4294901760
    %716 = vmatpush.msra.mxu0 %v715
    %v717 = vand.u32 %v98, 4294901760
    %v718 = vsub.f32 %v98, %v717
    %v719 = vand.u32 %v718, 4294901760
    %720 = vmatpush.msra.mxu0 %v719
    %v721 = vand.u32 %v96, 4294901760
    %v722 = vsub.f32 %v96, %v721
    %v723 = vand.u32 %v722, 4294901760
    %724 = vmatpush.msra.mxu0 %v723
    %v725 = vand.u32 %v94, 4294901760
    %v726 = vsub.f32 %v94, %v725
    %v727 = vand.u32 %v726, 4294901760
    %728 = vmatpush.msra.mxu0 %v727
    %v729 = vand.u32 %v92, 4294901760
    %v730 = vsub.f32 %v92, %v729
    %v731 = vand.u32 %v730, 4294901760
    %732 = vmatpush.msra.mxu0 %v731
    %v733 = vand.u32 %v90, 4294901760
    %v734 = vsub.f32 %v90, %v733
    %v735 = vand.u32 %v734, 4294901760
    %736 = vmatpush.msra.mxu0 %v735
    %v737 = vand.u32 %v88, 4294901760
    %v738 = vsub.f32 %v88, %v737
    %v739 = vand.u32 %v738, 4294901760
    %740 = vmatpush.msra.mxu0 %v739
    %v741 = vand.u32 %v86, 4294901760
    %v742 = vsub.f32 %v86, %v741
    %v743 = vand.u32 %v742, 4294901760
    %744 = vmatpush.msra.mxu0 %v743
    %v745 = vand.u32 %v84, 4294901760
    %v746 = vsub.f32 %v84, %v745
    %v747 = vand.u32 %v746, 4294901760
    %748 = vmatpush.msra.mxu0 %v747
    %v749 = vand.u32 %v82, 4294901760
    %v750 = vsub.f32 %v82, %v749
    %v751 = vand.u32 %v750, 4294901760
    %752 = vmatpush.msra.mxu0 %v751
    %v753 = vand.u32 %v80, 4294901760
    %754 = vmatmul.f32.gmra.mxu0 %v753
    %v755 = vpop.f32.mrf.mxu0
    %v756 = vadd.f32 %v687, %v755
    %757 = vdwg.mxu0
    %v758 = vand.u32 %v112, 4294901760
    %759 = vmatpush.msra.mxu0 %v758
    %v760 = vand.u32 %v110, 4294901760
    %761 = vmatpush.msra.mxu0 %v760
    %v762 = vand.u32 %v108, 4294901760
    %763 = vmatpush.msra.mxu0 %v762
    %v764 = vand.u32 %v106, 4294901760
    %765 = vmatpush.msra.mxu0 %v764
    %v766 = vand.u32 %v104, 4294901760
    %767 = vmatpush.msra.mxu0 %v766
    %v768 = vand.u32 %v102, 4294901760
    %769 = vmatpush.msra.mxu0 %v768
    %v770 = vand.u32 %v100, 4294901760
    %771 = vmatpush.msra.mxu0 %v770
    %v772 = vand.u32 %v98, 4294901760
    %773 = vmatpush.msra.mxu0 %v772
    %v774 = vand.u32 %v96, 4294901760
    %775 = vmatpush.msra.mxu0 %v774
    %v776 = vand.u32 %v94, 4294901760
    %777 = vmatpush.msra.mxu0 %v776
    %v778 = vand.u32 %v92, 4294901760
    %779 = vmatpush.msra.mxu0 %v778
    %v780 = vand.u32 %v90, 4294901760
    %781 = vmatpush.msra.mxu0 %v780
    %v782 = vand.u32 %v88, 4294901760
    %783 = vmatpush.msra.mxu0 %v782
    %v784 = vand.u32 %v86, 4294901760
    %785 = vmatpush.msra.mxu0 %v784
    %v786 = vand.u32 %v84, 4294901760
    %787 = vmatpush.msra.mxu0 %v786
    %v788 = vand.u32 %v82, 4294901760
    %789 = vmatpush.msra.mxu0 %v788
    %v790 = vand.u32 %v80, 4294901760
    %791 = vmatmul.f32.gmra.mxu0 %v790
    %v792 = vpop.f32.mrf.mxu0
    %v793 = vadd.f32 %v756, %v792
    %794 = vdwg.mxu0
    %v795 = vmul.f32 %v452, %v452
    %v796 = vmul.f32 %v793, %v793
    %v797 = vld [vmem:[#allocation7] sm:$0xff]
    %v798 = vld [vmem:[#allocation7 + $0x8] sm:$0xff]
    %v799 = vld [vmem:[#allocation7 + $0x10] sm:$0xff]
    %v800 = vld [vmem:[#allocation7 + $0x18] sm:$0xff]
    %v801 = vld [vmem:[#allocation7 + $0x20] sm:$0xff]
    %v802 = vld [vmem:[#allocation7 + $0x28] sm:$0xff]
    %v803 = vld [vmem:[#allocation7 + $0x30] sm:$0xff]
    %v804 = vld [vmem:[#allocation7 + $0x38] sm:$0xff]
    %v805 = vld [vmem:[#allocation7 + $0x40] sm:$0xff]
    %v806 = vld [vmem:[#allocation7 + $0x48] sm:$0xff]
    %v807 = vld [vmem:[#allocation7 + $0x50] sm:$0xff]
    %v808 = vld [vmem:[#allocation7 + $0x58] sm:$0xff]
    %v809 = vld [vmem:[#allocation7 + $0x60] sm:$0xff]
    %v810 = vld [vmem:[#allocation7 + $0x68] sm:$0xff]
    %v811 = vld [vmem:[#allocation7 + $0x70] sm:$0xff]
    %v812 = vld [vmem:[#allocation7 + $0x78] sm:$0xff]
    %v813 = vld [vmem:[#allocation7 + $0x80] sm:$0xff]
    %v814 = vld [vmem:[#allocation7 + $0x88] sm:$0xff]
    %v815 = vld [vmem:[#allocation7 + $0x90] sm:$0xff]
    %v816 = vld [vmem:[#allocation7 + $0x98] sm:$0xff]
    %v817 = vld [vmem:[#allocation7 + $0xa0] sm:$0xff]
    %v818 = vld [vmem:[#allocation7 + $0xa8] sm:$0xff]
    %v819 = vld [vmem:[#allocation7 + $0xb0] sm:$0xff]
    %v820 = vld [vmem:[#allocation7 + $0xb8] sm:$0xff]
    %v821 = vld [vmem:[#allocation7 + $0xc0] sm:$0xff]
    %v822 = vld [vmem:[#allocation7 + $0xc8] sm:$0xff]
    %v823 = vld [vmem:[#allocation7 + $0xd0] sm:$0xff]
    %v824 = vld [vmem:[#allocation7 + $0xd8] sm:$0xff]
    %v825 = vld [vmem:[#allocation7 + $0xe0] sm:$0xff]
    %v826 = vld [vmem:[#allocation7 + $0xe8] sm:$0xff]
    %v827 = vld [vmem:[#allocation7 + $0xf0] sm:$0xff]
    %v828 = vld [vmem:[#allocation7 + $0xf8] sm:$0xff]
    %v829 = vld [vmem:[#allocation7 + $0x100] sm:$0xff]
    %v830 = vld [vmem:[#allocation7 + $0x108] sm:$0xff]
    %v831 = vld [vmem:[#allocation7 + $0x110] sm:$0xff]
    %v832 = vld [vmem:[#allocation7 + $0x118] sm:$0xff]
    %v833 = vld [vmem:[#allocation7 + $0x120] sm:$0xff]
    %v834 = vld [vmem:[#allocation7 + $0x128] sm:$0xff]
    %v835 = vld [vmem:[#allocation7 + $0x130] sm:$0xff]
    %v836 = vld [vmem:[#allocation7 + $0x138] sm:$0xff]
    %v837 = vld [vmem:[#allocation7 + $0x140] sm:$0xff]
    %v838 = vld [vmem:[#allocation7 + $0x148] sm:$0xff]
    %v839 = vld [vmem:[#allocation7 + $0x150] sm:$0xff]
    %v840 = vld [vmem:[#allocation7 + $0x158] sm:$0xff]
    %v841 = vld [vmem:[#allocation7 + $0x160] sm:$0xff]
    %v842 = vld [vmem:[#allocation7 + $0x168] sm:$0xff]
    %v843 = vld [vmem:[#allocation7 + $0x170] sm:$0xff]
    %v844 = vld [vmem:[#allocation7 + $0x178] sm:$0xff]
    %v845 = vld [vmem:[#allocation7 + $0x180] sm:$0xff]
    %v846 = vld [vmem:[#allocation7 + $0x188] sm:$0xff]
    %v847 = vld [vmem:[#allocation7 + $0x190] sm:$0xff]
    %v848 = vld [vmem:[#allocation7 + $0x198] sm:$0xff]
    %v849 = vld [vmem:[#allocation7 + $0x1a0] sm:$0xff]
    %v850 = vld [vmem:[#allocation7 + $0x1a8] sm:$0xff]
    %v851 = vld [vmem:[#allocation7 + $0x1b0] sm:$0xff]
    %v852 = vld [vmem:[#allocation7 + $0x1b8] sm:$0xff]
    %v853 = vld [vmem:[#allocation7 + $0x1c0] sm:$0xff]
    %v854 = vld [vmem:[#allocation7 + $0x1c8] sm:$0xff]
    %v855 = vld [vmem:[#allocation7 + $0x1d0] sm:$0xff]
    %v856 = vld [vmem:[#allocation7 + $0x1d8] sm:$0xff]
    %v857 = vld [vmem:[#allocation7 + $0x1e0] sm:$0xff]
    %v858 = vld [vmem:[#allocation7 + $0x1e8] sm:$0xff]
    %v859 = vld [vmem:[#allocation7 + $0x1f0] sm:$0xff]
    %v860 = vld [vmem:[#allocation7 + $0x1f8] sm:$0xff]
    %v861 = vand.u32 %v827, 4294901760
    %862 = vmatpush.msra.mxu0 %v861
    %v863 = vand.u32 %v825, 4294901760
    %864 = vmatpush.msra.mxu0 %v863
    %v865 = vand.u32 %v823, 4294901760
    %866 = vmatpush.msra.mxu0 %v865
    %v867 = vand.u32 %v821, 4294901760
    %868 = vmatpush.msra.mxu0 %v867
    %v869 = vand.u32 %v819, 4294901760
    %870 = vmatpush.msra.mxu0 %v869
    %v871 = vand.u32 %v817, 4294901760
    %872 = vmatpush.msra.mxu0 %v871
    %v873 = vand.u32 %v815, 4294901760
    %874 = vmatpush.msra.mxu0 %v873
    %v875 = vand.u32 %v813, 4294901760
    %876 = vmatpush.msra.mxu0 %v875
    %v877 = vand.u32 %v811, 4294901760
    %878 = vmatpush.msra.mxu0 %v877
    %v879 = vand.u32 %v809, 4294901760
    %880 = vmatpush.msra.mxu0 %v879
    %v881 = vand.u32 %v807, 4294901760
    %882 = vmatpush.msra.mxu0 %v881
    %v883 = vand.u32 %v805, 4294901760
    %884 = vmatpush.msra.mxu0 %v883
    %v885 = vand.u32 %v803, 4294901760
    %886 = vmatpush.msra.mxu0 %v885
    %v887 = vand.u32 %v801, 4294901760
    %888 = vmatpush.msra.mxu0 %v887
    %v889 = vand.u32 %v799, 4294901760
    %890 = vmatpush.msra.mxu0 %v889
    %v891 = vand.u32 %v797, 4294901760
    %892 = vmatpush.msra.mxu0 %v891
    %v893 = vand.u32 %v795, 4294901760
    %v894 = vsub.f32 %v795, %v893
    %v895 = vand.u32 %v894, 4294901760
    %v896 = vsub.f32 %v894, %v895
    %v897 = vand.u32 %v896, 4294901760
    %898 = vmatmul.f32.gmra.mxu0 %v897
    %v899 = vpop.f32.mrf.mxu0
    %v900 = vadd.f32 1e-05, %v899
    %901 = vdwg.mxu0
    %v902 = vand.u32 %v827, 4294901760
    %v903 = vsub.f32 %v827, %v902
    %v904 = vand.u32 %v903, 4294901760
    %v905 = vsub.f32 %v903, %v904
    %v906 = vand.u32 %v905, 4294901760
    %907 = vmatpush.msra.mxu0 %v906
    %v908 = vand.u32 %v825, 4294901760
    %v909 = vsub.f32 %v825, %v908
    %v910 = vand.u32 %v909, 4294901760
    %v911 = vsub.f32 %v909, %v910
    %v912 = vand.u32 %v911, 4294901760
    %913 = vmatpush.msra.mxu0 %v912
    %v914 = vand.u32 %v823, 4294901760
    %v915 = vsub.f32 %v823, %v914
    %v916 = vand.u32 %v915, 4294901760
    %v917 = vsub.f32 %v915, %v916
    %v918 = vand.u32 %v917, 4294901760
    %919 = vmatpush.msra.mxu0 %v918
    %v920 = vand.u32 %v821, 4294901760
    %v921 = vsub.f32 %v821, %v920
    %v922 = vand.u32 %v921, 4294901760
    %v923 = vsub.f32 %v921, %v922
    %v924 = vand.u32 %v923, 4294901760
    %925 = vmatpush.msra.mxu0 %v924
    %v926 = vand.u32 %v819, 4294901760
    %v927 = vsub.f32 %v819, %v926
    %v928 = vand.u32 %v927, 4294901760
    %v929 = vsub.f32 %v927, %v928
    %v930 = vand.u32 %v929, 4294901760
    %931 = vmatpush.msra.mxu0 %v930
    %v932 = vand.u32 %v817, 4294901760
    %v933 = vsub.f32 %v817, %v932
    %v934 = vand.u32 %v933, 4294901760
    %v935 = vsub.f32 %v933, %v934
    %v936 = vand.u32 %v935, 4294901760
    %937 = vmatpush.msra.mxu0 %v936
    %v938 = vand.u32 %v815, 4294901760
    %v939 = vsub.f32 %v815, %v938
    %v940 = vand.u32 %v939, 4294901760
    %v941 = vsub.f32 %v939, %v940
    %v942 = vand.u32 %v941, 4294901760
    %943 = vmatpush.msra.mxu0 %v942
    %v944 = vand.u32 %v813, 4294901760
    %v945 = vsub.f32 %v813, %v944
    %v946 = vand.u32 %v945, 4294901760
    %v947 = vsub.f32 %v945, %v946
    %v948 = vand.u32 %v947, 4294901760
    %949 = vmatpush.msra.mxu0 %v948
    %v950 = vand.u32 %v811, 4294901760
    %v951 = vsub.f32 %v811, %v950
    %v952 = vand.u32 %v951, 4294901760
    %v953 = vsub.f32 %v951, %v952
    %v954 = vand.u32 %v953, 4294901760
    %955 = vmatpush.msra.mxu0 %v954
    %v956 = vand.u32 %v809, 4294901760
    %v957 = vsub.f32 %v809, %v956
    %v958 = vand.u32 %v957, 4294901760
    %v959 = vsub.f32 %v957, %v958
    %v960 = vand.u32 %v959, 4294901760
    %961 = vmatpush.msra.mxu0 %v960
    %v962 = vand.u32 %v807, 4294901760
    %v963 = vsub.f32 %v807, %v962
    %v964 = vand.u32 %v963, 4294901760
    %v965 = vsub.f32 %v963, %v964
    %v966 = vand.u32 %v965, 4294901760
    %967 = vmatpush.msra.mxu0 %v966
    %v968 = vand.u32 %v805, 4294901760
    %v969 = vsub.f32 %v805, %v968
    %v970 = vand.u32 %v969, 4294901760
    %v971 = vsub.f32 %v969, %v970
    %v972 = vand.u32 %v971, 4294901760
    %973 = vmatpush.msra.mxu0 %v972
    %v974 = vand.u32 %v803, 4294901760
    %v975 = vsub.f32 %v803, %v974
    %v976 = vand.u32 %v975, 4294901760
    %v977 = vsub.f32 %v975, %v976
    %v978 = vand.u32 %v977, 4294901760
    %979 = vmatpush.msra.mxu0 %v978
    %v980 = vand.u32 %v801, 4294901760
    %v981 = vsub.f32 %v801, %v980
    %v982 = vand.u32 %v981, 4294901760
    %v983 = vsub.f32 %v981, %v982
    %v984 = vand.u32 %v983, 4294901760
    %985 = vmatpush.msra.mxu0 %v984
    %v986 = vand.u32 %v799, 4294901760
    %v987 = vsub.f32 %v799, %v986
    %v988 = vand.u32 %v987, 4294901760
    %v989 = vsub.f32 %v987, %v988
    %v990 = vand.u32 %v989, 4294901760
    %991 = vmatpush.msra.mxu0 %v990
    %v992 = vand.u32 %v797, 4294901760
    %v993 = vsub.f32 %v797, %v992
    %v994 = vand.u32 %v993, 4294901760
    %v995 = vsub.f32 %v993, %v994
    %v996 = vand.u32 %v995, 4294901760
    %997 = vmatpush.msra.mxu0 %v996
    %v998 = vand.u32 %v795, 4294901760
    %999 = vmatmul.f32.gmra.mxu0 %v998
    %v1000 = vpop.f32.mrf.mxu0
    %v1001 = vadd.f32 %v900, %v1000
    %1002 = vdwg.mxu0
    %v1003 = vand.u32 %v827, 4294901760
    %v1004 = vsub.f32 %v827, %v1003
    %1005 = vmatpush.msra.mxu0 %v1004
    %v1006 = vand.u32 %v825, 4294901760
    %v1007 = vsub.f32 %v825, %v1006
    %1008 = vmatpush.msra.mxu0 %v1007
    %v1009 = vand.u32 %v823, 4294901760
    %v1010 = vsub.f32 %v823, %v1009
    %1011 = vmatpush.msra.mxu0 %v1010
    %v1012 = vand.u32 %v821, 4294901760
    %v1013 = vsub.f32 %v821, %v1012
    %1014 = vmatpush.msra.mxu0 %v1013
    %v1015 = vand.u32 %v819, 4294901760
    %v1016 = vsub.f32 %v819, %v1015
    %1017 = vmatpush.msra.mxu0 %v1016
    %v1018 = vand.u32 %v817, 4294901760
    %v1019 = vsub.f32 %v817, %v1018
    %1020 = vmatpush.msra.mxu0 %v1019
    %v1021 = vand.u32 %v815, 4294901760
    %v1022 = vsub.f32 %v815, %v1021
    %1023 = vmatpush.msra.mxu0 %v1022
    %v1024 = vand.u32 %v813, 4294901760
    %v1025 = vsub.f32 %v813, %v1024
    %1026 = vmatpush.msra.mxu0 %v1025
    %v1027 = vand.u32 %v811, 4294901760
    %v1028 = vsub.f32 %v811, %v1027
    %1029 = vmatpush.msra.mxu0 %v1028
    %v1030 = vand.u32 %v809, 4294901760
    %v1031 = vsub.f32 %v809, %v1030
    %1032 = vmatpush.msra.mxu0 %v1031
    %v1033 = vand.u32 %v807, 4294901760
    %v1034 = vsub.f32 %v807, %v1033
    %1035 = vmatpush.msra.mxu0 %v1034
    %v1036 = vand.u32 %v805, 4294901760
    %v1037 = vsub.f32 %v805, %v1036
    %1038 = vmatpush.msra.mxu0 %v1037
    %v1039 = vand.u32 %v803, 4294901760
    %v1040 = vsub.f32 %v803, %v1039
    %1041 = vmatpush.msra.mxu0 %v1040
    %v1042 = vand.u32 %v801, 4294901760
    %v1043 = vsub.f32 %v801, %v1042
    %1044 = vmatpush.msra.mxu0 %v1043
    %v1045 = vand.u32 %v799, 4294901760
    %v1046 = vsub.f32 %v799, %v1045
    %1047 = vmatpush.msra.mxu0 %v1046
    %v1048 = vand.u32 %v797, 4294901760
    %v1049 = vsub.f32 %v797, %v1048
    %1050 = vmatpush.msra.mxu0 %v1049
    %v1051 = vand.u32 %v795, 4294901760
    %v1052 = vsub.f32 %v795, %v1051
    %1053 = vmatmul.f32.gmra.mxu0 %v1052
    %v1054 = vpop.f32.mrf.mxu0
    %v1055 = vadd.f32 %v1001, %v1054
    %1056 = vdwg.mxu0
    %v1057 = vand.u32 %v827, 4294901760
    %1058 = vmatpush.msra.mxu0 %v1057
    %v1059 = vand.u32 %v825, 4294901760
    %1060 = vmatpush.msra.mxu0 %v1059
    %v1061 = vand.u32 %v823, 4294901760
    %1062 = vmatpush.msra.mxu0 %v1061
    %v1063 = vand.u32 %v821, 4294901760
    %1064 = vmatpush.msra.mxu0 %v1063
    %v1065 = vand.u32 %v819, 4294901760
    %1066 = vmatpush.msra.mxu0 %v1065
    %v1067 = vand.u32 %v817, 4294901760
    %1068 = vmatpush.msra.mxu0 %v1067
    %v1069 = vand.u32 %v815, 4294901760
    %1070 = vmatpush.msra.mxu0 %v1069
    %v1071 = vand.u32 %v813, 4294901760
    %1072 = vmatpush.msra.mxu0 %v1071
    %v1073 = vand.u32 %v811, 4294901760
    %1074 = vmatpush.msra.mxu0 %v1073
    %v1075 = vand.u32 %v809, 4294901760
    %1076 = vmatpush.msra.mxu0 %v1075
    %v1077 = vand.u32 %v807, 4294901760
    %1078 = vmatpush.msra.mxu0 %v1077
    %v1079 = vand.u32 %v805, 4294901760
    %1080 = vmatpush.msra.mxu0 %v1079
    %v1081 = vand.u32 %v803, 4294901760
    %1082 = vmatpush.msra.mxu0 %v1081
    %v1083 = vand.u32 %v801, 4294901760
    %1084 = vmatpush.msra.mxu0 %v1083
    %v1085 = vand.u32 %v799, 4294901760
    %1086 = vmatpush.msra.mxu0 %v1085
    %v1087 = vand.u32 %v797, 4294901760
    %1088 = vmatpush.msra.mxu0 %v1087
    %v1089 = vand.u32 %v795, 4294901760
    %v1090 = vsub.f32 %v795, %v1089
    %v1091 = vand.u32 %v1090, 4294901760
    %1092 = vmatmul.f32.gmra.mxu0 %v1091
    %v1093 = vpop.f32.mrf.mxu0
    %v1094 = vadd.f32 %v1055, %v1093
    %1095 = vdwg.mxu0
    %v1096 = vand.u32 %v827, 4294901760
    %v1097 = vsub.f32 %v827, %v1096
    %v1098 = vand.u32 %v1097, 4294901760
    %1099 = vmatpush.msra.mxu0 %v1098
    %v1100 = vand.u32 %v825, 4294901760
    %v1101 = vsub.f32 %v825, %v1100
    %v1102 = vand.u32 %v1101, 4294901760
    %1103 = vmatpush.msra.mxu0 %v1102
    %v1104 = vand.u32 %v823, 4294901760
    %v1105 = vsub.f32 %v823, %v1104
    %v1106 = vand.u32 %v1105, 4294901760
    %1107 = vmatpush.msra.mxu0 %v1106
    %v1108 = vand.u32 %v821, 4294901760
    %v1109 = vsub.f32 %v821, %v1108
    %v1110 = vand.u32 %v1109, 4294901760
    %1111 = vmatpush.msra.mxu0 %v1110
    %v1112 = vand.u32 %v819, 4294901760
    %v1113 = vsub.f32 %v819, %v1112
    %v1114 = vand.u32 %v1113, 4294901760
    %1115 = vmatpush.msra.mxu0 %v1114
    %v1116 = vand.u32 %v817, 4294901760
    %v1117 = vsub.f32 %v817, %v1116
    %v1118 = vand.u32 %v1117, 4294901760
    %1119 = vmatpush.msra.mxu0 %v1118
    %v1120 = vand.u32 %v815, 4294901760
    %v1121 = vsub.f32 %v815, %v1120
    %v1122 = vand.u32 %v1121, 4294901760
    %1123 = vmatpush.msra.mxu0 %v1122
    %v1124 = vand.u32 %v813, 4294901760
    %v1125 = vsub.f32 %v813, %v1124
    %v1126 = vand.u32 %v1125, 4294901760
    %1127 = vmatpush.msra.mxu0 %v1126
    %v1128 = vand.u32 %v811, 4294901760
    %v1129 = vsub.f32 %v811, %v1128
    %v1130 = vand.u32 %v1129, 4294901760
    %1131 = vmatpush.msra.mxu0 %v1130
    %v1132 = vand.u32 %v809, 4294901760
    %v1133 = vsub.f32 %v809, %v1132
    %v1134 = vand.u32 %v1133, 4294901760
    %1135 = vmatpush.msra.mxu0 %v1134
    %v1136 = vand.u32 %v807, 4294901760
    %v1137 = vsub.f32 %v807, %v1136
    %v1138 = vand.u32 %v1137, 4294901760
    %1139 = vmatpush.msra.mxu0 %v1138
    %v1140 = vand.u32 %v805, 4294901760
    %v1141 = vsub.f32 %v805, %v1140
    %v1142 = vand.u32 %v1141, 4294901760
    %1143 = vmatpush.msra.mxu0 %v1142
    %v1144 = vand.u32 %v803, 4294901760
    %v1145 = vsub.f32 %v803, %v1144
    %v1146 = vand.u32 %v1145, 4294901760
    %1147 = vmatpush.msra.mxu0 %v1146
    %v1148 = vand.u32 %v801, 4294901760
    %v1149 = vsub.f32 %v801, %v1148
    %v1150 = vand.u32 %v1149, 4294901760
    %1151 = vmatpush.msra.mxu0 %v1150
    %v1152 = vand.u32 %v799, 4294901760
    %v1153 = vsub.f32 %v799, %v1152
    %v1154 = vand.u32 %v1153, 4294901760
    %1155 = vmatpush.msra.mxu0 %v1154
    %v1156 = vand.u32 %v797, 4294901760
    %v1157 = vsub.f32 %v797, %v1156
    %v1158 = vand.u32 %v1157, 4294901760
    %1159 = vmatpush.msra.mxu0 %v1158
    %v1160 = vand.u32 %v795, 4294901760
    %1161 = vmatmul.f32.gmra.mxu0 %v1160
    %v1162 = vpop.f32.mrf.mxu0
    %v1163 = vadd.f32 %v1094, %v1162
    %1164 = vdwg.mxu0
    %v1165 = vand.u32 %v827, 4294901760
    %1166 = vmatpush.msra.mxu0 %v1165
    %v1167 = vand.u32 %v825, 4294901760
    %1168 = vmatpush.msra.mxu0 %v1167
    %v1169 = vand.u32 %v823, 4294901760
    %1170 = vmatpush.msra.mxu0 %v1169
    %v1171 = vand.u32 %v821, 4294901760
    %1172 = vmatpush.msra.mxu0 %v1171
    %v1173 = vand.u32 %v819, 4294901760
    %1174 = vmatpush.msra.mxu0 %v1173
    %v1175 = vand.u32 %v817, 4294901760
    %1176 = vmatpush.msra.mxu0 %v1175
    %v1177 = vand.u32 %v815, 4294901760
    %1178 = vmatpush.msra.mxu0 %v1177
    %v1179 = vand.u32 %v813, 4294901760
    %1180 = vmatpush.msra.mxu0 %v1179
    %v1181 = vand.u32 %v811, 4294901760
    %1182 = vmatpush.msra.mxu0 %v1181
    %v1183 = vand.u32 %v809, 4294901760
    %1184 = vmatpush.msra.mxu0 %v1183
    %v1185 = vand.u32 %v807, 4294901760
    %1186 = vmatpush.msra.mxu0 %v1185
    %v1187 = vand.u32 %v805, 4294901760
    %1188 = vmatpush.msra.mxu0 %v1187
    %v1189 = vand.u32 %v803, 4294901760
    %1190 = vmatpush.msra.mxu0 %v1189
    %v1191 = vand.u32 %v801, 4294901760
    %1192 = vmatpush.msra.mxu0 %v1191
    %v1193 = vand.u32 %v799, 4294901760
    %1194 = vmatpush.msra.mxu0 %v1193
    %v1195 = vand.u32 %v797, 4294901760
    %1196 = vmatpush.msra.mxu0 %v1195
    %v1197 = vand.u32 %v795, 4294901760
    %1198 = vmatmul.f32.gmra.mxu0 %v1197
    %v1199 = vpop.f32.mrf.mxu0
    %v1200 = vadd.f32 %v1163, %v1199
    %1201 = vdwg.mxu0
    %v1202 = vand.u32 %v859, 4294901760
    %1203 = vmatpush.msra.mxu0 %v1202
    %v1204 = vand.u32 %v857, 4294901760
    %1205 = vmatpush.msra.mxu0 %v1204
    %v1206 = vand.u32 %v855, 4294901760
    %1207 = vmatpush.msra.mxu0 %v1206
    %v1208 = vand.u32 %v853, 4294901760
    %1209 = vmatpush.msra.mxu0 %v1208
    %v1210 = vand.u32 %v851, 4294901760
    %1211 = vmatpush.msra.mxu0 %v1210
    %v1212 = vand.u32 %v849, 4294901760
    %1213 = vmatpush.msra.mxu0 %v1212
    %v1214 = vand.u32 %v847, 4294901760
    %1215 = vmatpush.msra.mxu0 %v1214
    %v1216 = vand.u32 %v845, 4294901760
    %1217 = vmatpush.msra.mxu0 %v1216
    %v1218 = vand.u32 %v843, 4294901760
    %1219 = vmatpush.msra.mxu0 %v1218
    %v1220 = vand.u32 %v841, 4294901760
    %1221 = vmatpush.msra.mxu0 %v1220
    %v1222 = vand.u32 %v839, 4294901760
    %1223 = vmatpush.msra.mxu0 %v1222
    %v1224 = vand.u32 %v837, 4294901760
    %1225 = vmatpush.msra.mxu0 %v1224
    %v1226 = vand.u32 %v835, 4294901760
    %1227 = vmatpush.msra.mxu0 %v1226
    %v1228 = vand.u32 %v833, 4294901760
    %1229 = vmatpush.msra.mxu0 %v1228
    %v1230 = vand.u32 %v831, 4294901760
    %1231 = vmatpush.msra.mxu0 %v1230
    %v1232 = vand.u32 %v829, 4294901760
    %1233 = vmatpush.msra.mxu0 %v1232
    %v1234 = vand.u32 %v796, 4294901760
    %v1235 = vsub.f32 %v796, %v1234
    %v1236 = vand.u32 %v1235, 4294901760
    %v1237 = vsub.f32 %v1235, %v1236
    %v1238 = vand.u32 %v1237, 4294901760
    %1239 = vmatmul.f32.gmra.mxu0 %v1238
    %v1240 = vpop.f32.mrf.mxu0
    %v1241 = vadd.f32 %v1200, %v1240
    %1242 = vdwg.mxu0
    %v1243 = vand.u32 %v859, 4294901760
    %v1244 = vsub.f32 %v859, %v1243
    %v1245 = vand.u32 %v1244, 4294901760
    %v1246 = vsub.f32 %v1244, %v1245
    %v1247 = vand.u32 %v1246, 4294901760
    %1248 = vmatpush.msra.mxu0 %v1247
    %v1249 = vand.u32 %v857, 4294901760
    %v1250 = vsub.f32 %v857, %v1249
    %v1251 = vand.u32 %v1250, 4294901760
    %v1252 = vsub.f32 %v1250, %v1251
    %v1253 = vand.u32 %v1252, 4294901760
    %1254 = vmatpush.msra.mxu0 %v1253
    %v1255 = vand.u32 %v855, 4294901760
    %v1256 = vsub.f32 %v855, %v1255
    %v1257 = vand.u32 %v1256, 4294901760
    %v1258 = vsub.f32 %v1256, %v1257
    %v1259 = vand.u32 %v1258, 4294901760
    %1260 = vmatpush.msra.mxu0 %v1259
    %v1261 = vand.u32 %v853, 4294901760
    %v1262 = vsub.f32 %v853, %v1261
    %v1263 = vand.u32 %v1262, 4294901760
    %v1264 = vsub.f32 %v1262, %v1263
    %v1265 = vand.u32 %v1264, 4294901760
    %1266 = vmatpush.msra.mxu0 %v1265
    %v1267 = vand.u32 %v851, 4294901760
    %v1268 = vsub.f32 %v851, %v1267
    %v1269 = vand.u32 %v1268, 4294901760
    %v1270 = vsub.f32 %v1268, %v1269
    %v1271 = vand.u32 %v1270, 4294901760
    %1272 = vmatpush.msra.mxu0 %v1271
    %v1273 = vand.u32 %v849, 4294901760
    %v1274 = vsub.f32 %v849, %v1273
    %v1275 = vand.u32 %v1274, 4294901760
    %v1276 = vsub.f32 %v1274, %v1275
    %v1277 = vand.u32 %v1276, 4294901760
    %1278 = vmatpush.msra.mxu0 %v1277
    %v1279 = vand.u32 %v847, 4294901760
    %v1280 = vsub.f32 %v847, %v1279
    %v1281 = vand.u32 %v1280, 4294901760
    %v1282 = vsub.f32 %v1280, %v1281
    %v1283 = vand.u32 %v1282, 4294901760
    %1284 = vmatpush.msra.mxu0 %v1283
    %v1285 = vand.u32 %v845, 4294901760
    %v1286 = vsub.f32 %v845, %v1285
    %v1287 = vand.u32 %v1286, 4294901760
    %v1288 = vsub.f32 %v1286, %v1287
    %v1289 = vand.u32 %v1288, 4294901760
    %1290 = vmatpush.msra.mxu0 %v1289
    %v1291 = vand.u32 %v843, 4294901760
    %v1292 = vsub.f32 %v843, %v1291
    %v1293 = vand.u32 %v1292, 4294901760
    %v1294 = vsub.f32 %v1292, %v1293
    %v1295 = vand.u32 %v1294, 4294901760
    %1296 = vmatpush.msra.mxu0 %v1295
    %v1297 = vand.u32 %v841, 4294901760
    %v1298 = vsub.f32 %v841, %v1297
    %v1299 = vand.u32 %v1298, 4294901760
    %v1300 = vsub.f32 %v1298, %v1299
    %v1301 = vand.u32 %v1300, 4294901760
    %1302 = vmatpush.msra.mxu0 %v1301
    %v1303 = vand.u32 %v839, 4294901760
    %v1304 = vsub.f32 %v839, %v1303
    %v1305 = vand.u32 %v1304, 4294901760
    %v1306 = vsub.f32 %v1304, %v1305
    %v1307 = vand.u32 %v1306, 4294901760
    %1308 = vmatpush.msra.mxu0 %v1307
    %v1309 = vand.u32 %v837, 4294901760
    %v1310 = vsub.f32 %v837, %v1309
    %v1311 = vand.u32 %v1310, 4294901760
    %v1312 = vsub.f32 %v1310, %v1311
    %v1313 = vand.u32 %v1312, 4294901760
    %1314 = vmatpush.msra.mxu0 %v1313
    %v1315 = vand.u32 %v835, 4294901760
    %v1316 = vsub.f32 %v835, %v1315
    %v1317 = vand.u32 %v1316, 4294901760
    %v1318 = vsub.f32 %v1316, %v1317
    %v1319 = vand.u32 %v1318, 4294901760
    %1320 = vmatpush.msra.mxu0 %v1319
    %v1321 = vand.u32 %v833, 4294901760
    %v1322 = vsub.f32 %v833, %v1321
    %v1323 = vand.u32 %v1322, 4294901760
    %v1324 = vsub.f32 %v1322, %v1323
    %v1325 = vand.u32 %v1324, 4294901760
    %1326 = vmatpush.msra.mxu0 %v1325
    %v1327 = vand.u32 %v831, 4294901760
    %v1328 = vsub.f32 %v831, %v1327
    %v1329 = vand.u32 %v1328, 4294901760
    %v1330 = vsub.f32 %v1328, %v1329
    %v1331 = vand.u32 %v1330, 4294901760
    %1332 = vmatpush.msra.mxu0 %v1331
    %v1333 = vand.u32 %v829, 4294901760
    %v1334 = vsub.f32 %v829, %v1333
    %v1335 = vand.u32 %v1334, 4294901760
    %v1336 = vsub.f32 %v1334, %v1335
    %v1337 = vand.u32 %v1336, 4294901760
    %1338 = vmatpush.msra.mxu0 %v1337
    %v1339 = vand.u32 %v796, 4294901760
    %1340 = vmatmul.f32.gmra.mxu0 %v1339
    %v1341 = vpop.f32.mrf.mxu0
    %v1342 = vadd.f32 %v1241, %v1341
    %1343 = vdwg.mxu0
    %v1344 = vand.u32 %v859, 4294901760
    %v1345 = vsub.f32 %v859, %v1344
    %1346 = vmatpush.msra.mxu0 %v1345
    %v1347 = vand.u32 %v857, 4294901760
    %v1348 = vsub.f32 %v857, %v1347
    %1349 = vmatpush.msra.mxu0 %v1348
    %v1350 = vand.u32 %v855, 4294901760
    %v1351 = vsub.f32 %v855, %v1350
    %1352 = vmatpush.msra.mxu0 %v1351
    %v1353 = vand.u32 %v853, 4294901760
    %v1354 = vsub.f32 %v853, %v1353
    %1355 = vmatpush.msra.mxu0 %v1354
    %v1356 = vand.u32 %v851, 4294901760
    %v1357 = vsub.f32 %v851, %v1356
    %1358 = vmatpush.msra.mxu0 %v1357
    %v1359 = vand.u32 %v849, 4294901760
    %v1360 = vsub.f32 %v849, %v1359
    %1361 = vmatpush.msra.mxu0 %v1360
    %v1362 = vand.u32 %v847, 4294901760
    %v1363 = vsub.f32 %v847, %v1362
    %1364 = vmatpush.msra.mxu0 %v1363
    %v1365 = vand.u32 %v845, 4294901760
    %v1366 = vsub.f32 %v845, %v1365
    %1367 = vmatpush.msra.mxu0 %v1366
    %v1368 = vand.u32 %v843, 4294901760
    %v1369 = vsub.f32 %v843, %v1368
    %1370 = vmatpush.msra.mxu0 %v1369
    %v1371 = vand.u32 %v841, 4294901760
    %v1372 = vsub.f32 %v841, %v1371
    %1373 = vmatpush.msra.mxu0 %v1372
    %v1374 = vand.u32 %v839, 4294901760
    %v1375 = vsub.f32 %v839, %v1374
    %1376 = vmatpush.msra.mxu0 %v1375
    %v1377 = vand.u32 %v837, 4294901760
    %v1378 = vsub.f32 %v837, %v1377
    %1379 = vmatpush.msra.mxu0 %v1378
    %v1380 = vand.u32 %v835, 4294901760
    %v1381 = vsub.f32 %v835, %v1380
    %1382 = vmatpush.msra.mxu0 %v1381
    %v1383 = vand.u32 %v833, 4294901760
    %v1384 = vsub.f32 %v833, %v1383
    %1385 = vmatpush.msra.mxu0 %v1384
    %v1386 = vand.u32 %v831, 4294901760
    %v1387 = vsub.f32 %v831, %v1386
    %1388 = vmatpush.msra.mxu0 %v1387
    %v1389 = vand.u32 %v829, 4294901760
    %v1390 = vsub.f32 %v829, %v1389
    %1391 = vmatpush.msra.mxu0 %v1390
    %v1392 = vand.u32 %v796, 4294901760
    %v1393 = vsub.f32 %v796, %v1392
    %1394 = vmatmul.f32.gmra.mxu0 %v1393
    %v1395 = vpop.f32.mrf.mxu0
    %v1396 = vadd.f32 %v1342, %v1395
    %1397 = vdwg.mxu0
    %v1398 = vand.u32 %v859, 4294901760
    %1399 = vmatpush.msra.mxu0 %v1398
    %v1400 = vand.u32 %v857, 4294901760
    %1401 = vmatpush.msra.mxu0 %v1400
    %v1402 = vand.u32 %v855, 4294901760
    %1403 = vmatpush.msra.mxu0 %v1402
    %v1404 = vand.u32 %v853, 4294901760
    %1405 = vmatpush.msra.mxu0 %v1404
    %v1406 = vand.u32 %v851, 4294901760
    %1407 = vmatpush.msra.mxu0 %v1406
    %v1408 = vand.u32 %v849, 4294901760
    %1409 = vmatpush.msra.mxu0 %v1408
    %v1410 = vand.u32 %v847, 4294901760
    %1411 = vmatpush.msra.mxu0 %v1410
    %v1412 = vand.u32 %v845, 4294901760
    %1413 = vmatpush.msra.mxu0 %v1412
    %v1414 = vand.u32 %v843, 4294901760
    %1415 = vmatpush.msra.mxu0 %v1414
    %v1416 = vand.u32 %v841, 4294901760
    %1417 = vmatpush.msra.mxu0 %v1416
    %v1418 = vand.u32 %v839, 4294901760
    %1419 = vmatpush.msra.mxu0 %v1418
    %v1420 = vand.u32 %v837, 4294901760
    %1421 = vmatpush.msra.mxu0 %v1420
    %v1422 = vand.u32 %v835, 4294901760
    %1423 = vmatpush.msra.mxu0 %v1422
    %v1424 = vand.u32 %v833, 4294901760
    %1425 = vmatpush.msra.mxu0 %v1424
    %v1426 = vand.u32 %v831, 4294901760
    %1427 = vmatpush.msra.mxu0 %v1426
    %v1428 = vand.u32 %v829, 4294901760
    %1429 = vmatpush.msra.mxu0 %v1428
    %v1430 = vand.u32 %v796, 4294901760
    %v1431 = vsub.f32 %v796, %v1430
    %v1432 = vand.u32 %v1431, 4294901760
    %1433 = vmatmul.f32.gmra.mxu0 %v1432
    %v1434 = vpop.f32.mrf.mxu0
    %v1435 = vadd.f32 %v1396, %v1434
    %1436 = vdwg.mxu0
    %v1437 = vand.u32 %v859, 4294901760
    %v1438 = vsub.f32 %v859, %v1437
    %v1439 = vand.u32 %v1438, 4294901760
    %1440 = vmatpush.msra.mxu0 %v1439
    %v1441 = vand.u32 %v857, 4294901760
    %v1442 = vsub.f32 %v857, %v1441
    %v1443 = vand.u32 %v1442, 4294901760
    %1444 = vmatpush.msra.mxu0 %v1443
    %v1445 = vand.u32 %v855, 4294901760
    %v1446 = vsub.f32 %v855, %v1445
    %v1447 = vand.u32 %v1446, 4294901760
    %1448 = vmatpush.msra.mxu0 %v1447
    %v1449 = vand.u32 %v853, 4294901760
    %v1450 = vsub.f32 %v853, %v1449
    %v1451 = vand.u32 %v1450, 4294901760
    %1452 = vmatpush.msra.mxu0 %v1451
    %v1453 = vand.u32 %v851, 4294901760
    %v1454 = vsub.f32 %v851, %v1453
    %v1455 = vand.u32 %v1454, 4294901760
    %1456 = vmatpush.msra.mxu0 %v1455
    %v1457 = vand.u32 %v849, 4294901760
    %v1458 = vsub.f32 %v849, %v1457
    %v1459 = vand.u32 %v1458, 4294901760
    %1460 = vmatpush.msra.mxu0 %v1459
    %v1461 = vand.u32 %v847, 4294901760
    %v1462 = vsub.f32 %v847, %v1461
    %v1463 = vand.u32 %v1462, 4294901760
    %1464 = vmatpush.msra.mxu0 %v1463
    %v1465 = vand.u32 %v845, 4294901760
    %v1466 = vsub.f32 %v845, %v1465
    %v1467 = vand.u32 %v1466, 4294901760
    %1468 = vmatpush.msra.mxu0 %v1467
    %v1469 = vand.u32 %v843, 4294901760
    %v1470 = vsub.f32 %v843, %v1469
    %v1471 = vand.u32 %v1470, 4294901760
    %1472 = vmatpush.msra.mxu0 %v1471
    %v1473 = vand.u32 %v841, 4294901760
    %v1474 = vsub.f32 %v841, %v1473
    %v1475 = vand.u32 %v1474, 4294901760
    %1476 = vmatpush.msra.mxu0 %v1475
    %v1477 = vand.u32 %v839, 4294901760
    %v1478 = vsub.f32 %v839, %v1477
    %v1479 = vand.u32 %v1478, 4294901760
    %1480 = vmatpush.msra.mxu0 %v1479
    %v1481 = vand.u32 %v837, 4294901760
    %v1482 = vsub.f32 %v837, %v1481
    %v1483 = vand.u32 %v1482, 4294901760
    %1484 = vmatpush.msra.mxu0 %v1483
    %v1485 = vand.u32 %v835, 4294901760
    %v1486 = vsub.f32 %v835, %v1485
    %v1487 = vand.u32 %v1486, 4294901760
    %1488 = vmatpush.msra.mxu0 %v1487
    %v1489 = vand.u32 %v833, 4294901760
    %v1490 = vsub.f32 %v833, %v1489
    %v1491 = vand.u32 %v1490, 4294901760
    %1492 = vmatpush.msra.mxu0 %v1491
    %v1493 = vand.u32 %v831, 4294901760
    %v1494 = vsub.f32 %v831, %v1493
    %v1495 = vand.u32 %v1494, 4294901760
    %1496 = vmatpush.msra.mxu0 %v1495
    %v1497 = vand.u32 %v829, 4294901760
    %v1498 = vsub.f32 %v829, %v1497
    %v1499 = vand.u32 %v1498, 4294901760
    %1500 = vmatpush.msra.mxu0 %v1499
    %v1501 = vand.u32 %v796, 4294901760
    %1502 = vmatmul.f32.gmra.mxu0 %v1501
    %v1503 = vpop.f32.mrf.mxu0
    %v1504 = vadd.f32 %v1435, %v1503
    %1505 = vdwg.mxu0
    %v1506 = vand.u32 %v859, 4294901760
    %1507 = vmatpush.msra.mxu0 %v1506
    %v1508 = vand.u32 %v857, 4294901760
    %1509 = vmatpush.msra.mxu0 %v1508
    %v1510 = vand.u32 %v855, 4294901760
    %1511 = vmatpush.msra.mxu0 %v1510
    %v1512 = vand.u32 %v853, 4294901760
    %1513 = vmatpush.msra.mxu0 %v1512
    %v1514 = vand.u32 %v851, 4294901760
    %1515 = vmatpush.msra.mxu0 %v1514
    %v1516 = vand.u32 %v849, 4294901760
    %1517 = vmatpush.msra.mxu0 %v1516
    %v1518 = vand.u32 %v847, 4294901760
    %1519 = vmatpush.msra.mxu0 %v1518
    %v1520 = vand.u32 %v845, 4294901760
    %1521 = vmatpush.msra.mxu0 %v1520
    %v1522 = vand.u32 %v843, 4294901760
    %1523 = vmatpush.msra.mxu0 %v1522
    %v1524 = vand.u32 %v841, 4294901760
    %1525 = vmatpush.msra.mxu0 %v1524
    %v1526 = vand.u32 %v839, 4294901760
    %1527 = vmatpush.msra.mxu0 %v1526
    %v1528 = vand.u32 %v837, 4294901760
    %1529 = vmatpush.msra.mxu0 %v1528
    %v1530 = vand.u32 %v835, 4294901760
    %1531 = vmatpush.msra.mxu0 %v1530
    %v1532 = vand.u32 %v833, 4294901760
    %1533 = vmatpush.msra.mxu0 %v1532
    %v1534 = vand.u32 %v831, 4294901760
    %1535 = vmatpush.msra.mxu0 %v1534
    %v1536 = vand.u32 %v829, 4294901760
    %1537 = vmatpush.msra.mxu0 %v1536
    %v1538 = vand.u32 %v796, 4294901760
    %1539 = vmatmul.f32.gmra.mxu0 %v1538
    %v1540 = vpop.f32.mrf.mxu0
    %v1541 = vadd.f32 %v1504, %v1540
    %1542 = vdwg.mxu0
    %v1543 = vand.u32 %v828, 4294901760
    %1544 = vmatpush.msra.mxu0 %v1543
    %v1545 = vand.u32 %v826, 4294901760
    %1546 = vmatpush.msra.mxu0 %v1545
    %v1547 = vand.u32 %v824, 4294901760
    %1548 = vmatpush.msra.mxu0 %v1547
    %v1549 = vand.u32 %v822, 4294901760
    %1550 = vmatpush.msra.mxu0 %v1549
    %v1551 = vand.u32 %v820, 4294901760
    %1552 = vmatpush.msra.mxu0 %v1551
    %v1553 = vand.u32 %v818, 4294901760
    %1554 = vmatpush.msra.mxu0 %v1553
    %v1555 = vand.u32 %v816, 4294901760
    %1556 = vmatpush.msra.mxu0 %v1555
    %v1557 = vand.u32 %v814, 4294901760
    %1558 = vmatpush.msra.mxu0 %v1557
    %v1559 = vand.u32 %v812, 4294901760
    %1560 = vmatpush.msra.mxu0 %v1559
    %v1561 = vand.u32 %v810, 4294901760
    %1562 = vmatpush.msra.mxu0 %v1561
    %v1563 = vand.u32 %v808, 4294901760
    %1564 = vmatpush.msra.mxu0 %v1563
    %v1565 = vand.u32 %v806, 4294901760
    %1566 = vmatpush.msra.mxu0 %v1565
    %v1567 = vand.u32 %v804, 4294901760
    %1568 = vmatpush.msra.mxu0 %v1567
    %v1569 = vand.u32 %v802, 4294901760
    %1570 = vmatpush.msra.mxu0 %v1569
    %v1571 = vand.u32 %v800, 4294901760
    %1572 = vmatpush.msra.mxu0 %v1571
    %v1573 = vand.u32 %v798, 4294901760
    %1574 = vmatpush.msra.mxu0 %v1573
    %v1575 = vand.u32 %v795, 4294901760
    %v1576 = vsub.f32 %v795, %v1575
    %v1577 = vand.u32 %v1576, 4294901760
    %v1578 = vsub.f32 %v1576, %v1577
    %v1579 = vand.u32 %v1578, 4294901760
    %1580 = vmatmul.f32.gmra.mxu0 %v1579
    %v1581 = vpop.f32.mrf.mxu0
    %v1582 = vadd.f32 1e-05, %v1581
    %1583 = vdwg.mxu0
    %v1584 = vand.u32 %v828, 4294901760
    %v1585 = vsub.f32 %v828, %v1584
    %v1586 = vand.u32 %v1585, 4294901760
    %v1587 = vsub.f32 %v1585, %v1586
    %v1588 = vand.u32 %v1587, 4294901760
    %1589 = vmatpush.msra.mxu0 %v1588
    %v1590 = vand.u32 %v826, 4294901760
    %v1591 = vsub.f32 %v826, %v1590
    %v1592 = vand.u32 %v1591, 4294901760
    %v1593 = vsub.f32 %v1591, %v1592
    %v1594 = vand.u32 %v1593, 4294901760
    %1595 = vmatpush.msra.mxu0 %v1594
    %v1596 = vand.u32 %v824, 4294901760
    %v1597 = vsub.f32 %v824, %v1596
    %v1598 = vand.u32 %v1597, 4294901760
    %v1599 = vsub.f32 %v1597, %v1598
    %v1600 = vand.u32 %v1599, 4294901760
    %1601 = vmatpush.msra.mxu0 %v1600
    %v1602 = vand.u32 %v822, 4294901760
    %v1603 = vsub.f32 %v822, %v1602
    %v1604 = vand.u32 %v1603, 4294901760
    %v1605 = vsub.f32 %v1603, %v1604
    %v1606 = vand.u32 %v1605, 4294901760
    %1607 = vmatpush.msra.mxu0 %v1606
    %v1608 = vand.u32 %v820, 4294901760
    %v1609 = vsub.f32 %v820, %v1608
    %v1610 = vand.u32 %v1609, 4294901760
    %v1611 = vsub.f32 %v1609, %v1610
    %v1612 = vand.u32 %v1611, 4294901760
    %1613 = vmatpush.msra.mxu0 %v1612
    %v1614 = vand.u32 %v818, 4294901760
    %v1615 = vsub.f32 %v818, %v1614
    %v1616 = vand.u32 %v1615, 4294901760
    %v1617 = vsub.f32 %v1615, %v1616
    %v1618 = vand.u32 %v1617, 4294901760
    %1619 = vmatpush.msra.mxu0 %v1618
    %v1620 = vand.u32 %v816, 4294901760
    %v1621 = vsub.f32 %v816, %v1620
    %v1622 = vand.u32 %v1621, 4294901760
    %v1623 = vsub.f32 %v1621, %v1622
    %v1624 = vand.u32 %v1623, 4294901760
    %1625 = vmatpush.msra.mxu0 %v1624
    %v1626 = vand.u32 %v814, 4294901760
    %v1627 = vsub.f32 %v814, %v1626
    %v1628 = vand.u32 %v1627, 4294901760
    %v1629 = vsub.f32 %v1627, %v1628
    %v1630 = vand.u32 %v1629, 4294901760
    %1631 = vmatpush.msra.mxu0 %v1630
    %v1632 = vand.u32 %v812, 4294901760
    %v1633 = vsub.f32 %v812, %v1632
    %v1634 = vand.u32 %v1633, 4294901760
    %v1635 = vsub.f32 %v1633, %v1634
    %v1636 = vand.u32 %v1635, 4294901760
    %1637 = vmatpush.msra.mxu0 %v1636
    %v1638 = vand.u32 %v810, 4294901760
    %v1639 = vsub.f32 %v810, %v1638
    %v1640 = vand.u32 %v1639, 4294901760
    %v1641 = vsub.f32 %v1639, %v1640
    %v1642 = vand.u32 %v1641, 4294901760
    %1643 = vmatpush.msra.mxu0 %v1642
    %v1644 = vand.u32 %v808, 4294901760
    %v1645 = vsub.f32 %v808, %v1644
    %v1646 = vand.u32 %v1645, 4294901760
    %v1647 = vsub.f32 %v1645, %v1646
    %v1648 = vand.u32 %v1647, 4294901760
    %1649 = vmatpush.msra.mxu0 %v1648
    %v1650 = vand.u32 %v806, 4294901760
    %v1651 = vsub.f32 %v806, %v1650
    %v1652 = vand.u32 %v1651, 4294901760
    %v1653 = vsub.f32 %v1651, %v1652
    %v1654 = vand.u32 %v1653, 4294901760
    %1655 = vmatpush.msra.mxu0 %v1654
    %v1656 = vand.u32 %v804, 4294901760
    %v1657 = vsub.f32 %v804, %v1656
    %v1658 = vand.u32 %v1657, 4294901760
    %v1659 = vsub.f32 %v1657, %v1658
    %v1660 = vand.u32 %v1659, 4294901760
    %1661 = vmatpush.msra.mxu0 %v1660
    %v1662 = vand.u32 %v802, 4294901760
    %v1663 = vsub.f32 %v802, %v1662
    %v1664 = vand.u32 %v1663, 4294901760
    %v1665 = vsub.f32 %v1663, %v1664
    %v1666 = vand.u32 %v1665, 4294901760
    %1667 = vmatpush.msra.mxu0 %v1666
    %v1668 = vand.u32 %v800, 4294901760
    %v1669 = vsub.f32 %v800, %v1668
    %v1670 = vand.u32 %v1669, 4294901760
    %v1671 = vsub.f32 %v1669, %v1670
    %v1672 = vand.u32 %v1671, 4294901760
    %1673 = vmatpush.msra.mxu0 %v1672
    %v1674 = vand.u32 %v798, 4294901760
    %v1675 = vsub.f32 %v798, %v1674
    %v1676 = vand.u32 %v1675, 4294901760
    %v1677 = vsub.f32 %v1675, %v1676
    %v1678 = vand.u32 %v1677, 4294901760
    %1679 = vmatpush.msra.mxu0 %v1678
    %v1680 = vand.u32 %v795, 4294901760
    %1681 = vmatmul.f32.gmra.mxu0 %v1680
    %v1682 = vpop.f32.mrf.mxu0
    %v1683 = vadd.f32 %v1582, %v1682
    %1684 = vdwg.mxu0
    %v1685 = vand.u32 %v828, 4294901760
    %v1686 = vsub.f32 %v828, %v1685
    %1687 = vmatpush.msra.mxu0 %v1686
    %v1688 = vand.u32 %v826, 4294901760
    %v1689 = vsub.f32 %v826, %v1688
    %1690 = vmatpush.msra.mxu0 %v1689
    %v1691 = vand.u32 %v824, 4294901760
    %v1692 = vsub.f32 %v824, %v1691
    %1693 = vmatpush.msra.mxu0 %v1692
    %v1694 = vand.u32 %v822, 4294901760
    %v1695 = vsub.f32 %v822, %v1694
    %1696 = vmatpush.msra.mxu0 %v1695
    %v1697 = vand.u32 %v820, 4294901760
    %v1698 = vsub.f32 %v820, %v1697
    %1699 = vmatpush.msra.mxu0 %v1698
    %v1700 = vand.u32 %v818, 4294901760
    %v1701 = vsub.f32 %v818, %v1700
    %1702 = vmatpush.msra.mxu0 %v1701
    %v1703 = vand.u32 %v816, 4294901760
    %v1704 = vsub.f32 %v816, %v1703
    %1705 = vmatpush.msra.mxu0 %v1704
    %v1706 = vand.u32 %v814, 4294901760
    %v1707 = vsub.f32 %v814, %v1706
    %1708 = vmatpush.msra.mxu0 %v1707
    %v1709 = vand.u32 %v812, 4294901760
    %v1710 = vsub.f32 %v812, %v1709
    %1711 = vmatpush.msra.mxu0 %v1710
    %v1712 = vand.u32 %v810, 4294901760
    %v1713 = vsub.f32 %v810, %v1712
    %1714 = vmatpush.msra.mxu0 %v1713
    %v1715 = vand.u32 %v808, 4294901760
    %v1716 = vsub.f32 %v808, %v1715
    %1717 = vmatpush.msra.mxu0 %v1716
    %v1718 = vand.u32 %v806, 4294901760
    %v1719 = vsub.f32 %v806, %v1718
    %1720 = vmatpush.msra.mxu0 %v1719
    %v1721 = vand.u32 %v804, 4294901760
    %v1722 = vsub.f32 %v804, %v1721
    %1723 = vmatpush.msra.mxu0 %v1722
    %v1724 = vand.u32 %v802, 4294901760
    %v1725 = vsub.f32 %v802, %v1724
    %1726 = vmatpush.msra.mxu0 %v1725
    %v1727 = vand.u32 %v800, 4294901760
    %v1728 = vsub.f32 %v800, %v1727
    %1729 = vmatpush.msra.mxu0 %v1728
    %v1730 = vand.u32 %v798, 4294901760
    %v1731 = vsub.f32 %v798, %v1730
    %1732 = vmatpush.msra.mxu0 %v1731
    %v1733 = vand.u32 %v795, 4294901760
    %v1734 = vsub.f32 %v795, %v1733
    %1735 = vmatmul.f32.gmra.mxu0 %v1734
    %v1736 = vpop.f32.mrf.mxu0
    %v1737 = vadd.f32 %v1683, %v1736
    %1738 = vdwg.mxu0
    %v1739 = vand.u32 %v828, 4294901760
    %1740 = vmatpush.msra.mxu0 %v1739
    %v1741 = vand.u32 %v826, 4294901760
    %1742 = vmatpush.msra.mxu0 %v1741
    %v1743 = vand.u32 %v824, 4294901760
    %1744 = vmatpush.msra.mxu0 %v1743
    %v1745 = vand.u32 %v822, 4294901760
    %1746 = vmatpush.msra.mxu0 %v1745
    %v1747 = vand.u32 %v820, 4294901760
    %1748 = vmatpush.msra.mxu0 %v1747
    %v1749 = vand.u32 %v818, 4294901760
    %1750 = vmatpush.msra.mxu0 %v1749
    %v1751 = vand.u32 %v816, 4294901760
    %1752 = vmatpush.msra.mxu0 %v1751
    %v1753 = vand.u32 %v814, 4294901760
    %1754 = vmatpush.msra.mxu0 %v1753
    %v1755 = vand.u32 %v812, 4294901760
    %1756 = vmatpush.msra.mxu0 %v1755
    %v1757 = vand.u32 %v810, 4294901760
    %1758 = vmatpush.msra.mxu0 %v1757
    %v1759 = vand.u32 %v808, 4294901760
    %1760 = vmatpush.msra.mxu0 %v1759
    %v1761 = vand.u32 %v806, 4294901760
    %1762 = vmatpush.msra.mxu0 %v1761
    %v1763 = vand.u32 %v804, 4294901760
    %1764 = vmatpush.msra.mxu0 %v1763
    %v1765 = vand.u32 %v802, 4294901760
    %1766 = vmatpush.msra.mxu0 %v1765
    %v1767 = vand.u32 %v800, 4294901760
    %1768 = vmatpush.msra.mxu0 %v1767
    %v1769 = vand.u32 %v798, 4294901760
    %1770 = vmatpush.msra.mxu0 %v1769
    %v1771 = vand.u32 %v795, 4294901760
    %v1772 = vsub.f32 %v795, %v1771
    %v1773 = vand.u32 %v1772, 4294901760
    %1774 = vmatmul.f32.gmra.mxu0 %v1773
    %v1775 = vpop.f32.mrf.mxu0
    %v1776 = vadd.f32 %v1737, %v1775
    %1777 = vdwg.mxu0
    %v1778 = vand.u32 %v828, 4294901760
    %v1779 = vsub.f32 %v828, %v1778
    %v1780 = vand.u32 %v1779, 4294901760
    %1781 = vmatpush.msra.mxu0 %v1780
    %v1782 = vand.u32 %v826, 4294901760
    %v1783 = vsub.f32 %v826, %v1782
    %v1784 = vand.u32 %v1783, 4294901760
    %1785 = vmatpush.msra.mxu0 %v1784
    %v1786 = vand.u32 %v824, 4294901760
    %v1787 = vsub.f32 %v824, %v1786
    %v1788 = vand.u32 %v1787, 4294901760
    %1789 = vmatpush.msra.mxu0 %v1788
    %v1790 = vand.u32 %v822, 4294901760
    %v1791 = vsub.f32 %v822, %v1790
    %v1792 = vand.u32 %v1791, 4294901760
    %1793 = vmatpush.msra.mxu0 %v1792
    %v1794 = vand.u32 %v820, 4294901760
    %v1795 = vsub.f32 %v820, %v1794
    %v1796 = vand.u32 %v1795, 4294901760
    %1797 = vmatpush.msra.mxu0 %v1796
    %v1798 = vand.u32 %v818, 4294901760
    %v1799 = vsub.f32 %v818, %v1798
    %v1800 = vand.u32 %v1799, 4294901760
    %1801 = vmatpush.msra.mxu0 %v1800
    %v1802 = vand.u32 %v816, 4294901760
    %v1803 = vsub.f32 %v816, %v1802
    %v1804 = vand.u32 %v1803, 4294901760
    %1805 = vmatpush.msra.mxu0 %v1804
    %v1806 = vand.u32 %v814, 4294901760
    %v1807 = vsub.f32 %v814, %v1806
    %v1808 = vand.u32 %v1807, 4294901760
    %1809 = vmatpush.msra.mxu0 %v1808
    %v1810 = vand.u32 %v812, 4294901760
    %v1811 = vsub.f32 %v812, %v1810
    %v1812 = vand.u32 %v1811, 4294901760
    %1813 = vmatpush.msra.mxu0 %v1812
    %v1814 = vand.u32 %v810, 4294901760
    %v1815 = vsub.f32 %v810, %v1814
    %v1816 = vand.u32 %v1815, 4294901760
    %1817 = vmatpush.msra.mxu0 %v1816
    %v1818 = vand.u32 %v808, 4294901760
    %v1819 = vsub.f32 %v808, %v1818
    %v1820 = vand.u32 %v1819, 4294901760
    %1821 = vmatpush.msra.mxu0 %v1820
    %v1822 = vand.u32 %v806, 4294901760
    %v1823 = vsub.f32 %v806, %v1822
    %v1824 = vand.u32 %v1823, 4294901760
    %1825 = vmatpush.msra.mxu0 %v1824
    %v1826 = vand.u32 %v804, 4294901760
    %v1827 = vsub.f32 %v804, %v1826
    %v1828 = vand.u32 %v1827, 4294901760
    %1829 = vmatpush.msra.mxu0 %v1828
    %v1830 = vand.u32 %v802, 4294901760
    %v1831 = vsub.f32 %v802, %v1830
    %v1832 = vand.u32 %v1831, 4294901760
    %1833 = vmatpush.msra.mxu0 %v1832
    %v1834 = vand.u32 %v800, 4294901760
    %v1835 = vsub.f32 %v800, %v1834
    %v1836 = vand.u32 %v1835, 4294901760
    %1837 = vmatpush.msra.mxu0 %v1836
    %v1838 = vand.u32 %v798, 4294901760
    %v1839 = vsub.f32 %v798, %v1838
    %v1840 = vand.u32 %v1839, 4294901760
    %1841 = vmatpush.msra.mxu0 %v1840
    %v1842 = vand.u32 %v795, 4294901760
    %1843 = vmatmul.f32.gmra.mxu0 %v1842
    %v1844 = vpop.f32.mrf.mxu0
    %v1845 = vadd.f32 %v1776, %v1844
    %1846 = vdwg.mxu0
    %v1847 = vand.u32 %v828, 4294901760
    %1848 = vmatpush.msra.mxu0 %v1847
    %v1849 = vand.u32 %v826, 4294901760
    %1850 = vmatpush.msra.mxu0 %v1849
    %v1851 = vand.u32 %v824, 4294901760
    %1852 = vmatpush.msra.mxu0 %v1851
    %v1853 = vand.u32 %v822, 4294901760
    %1854 = vmatpush.msra.mxu0 %v1853
    %v1855 = vand.u32 %v820, 4294901760
    %1856 = vmatpush.msra.mxu0 %v1855
    %v1857 = vand.u32 %v818, 4294901760
    %1858 = vmatpush.msra.mxu0 %v1857
    %v1859 = vand.u32 %v816, 4294901760
    %1860 = vmatpush.msra.mxu0 %v1859
    %v1861 = vand.u32 %v814, 4294901760
    %1862 = vmatpush.msra.mxu0 %v1861
    %v1863 = vand.u32 %v812, 4294901760
    %1864 = vmatpush.msra.mxu0 %v1863
    %v1865 = vand.u32 %v810, 4294901760
    %1866 = vmatpush.msra.mxu0 %v1865
    %v1867 = vand.u32 %v808, 4294901760
    %1868 = vmatpush.msra.mxu0 %v1867
    %v1869 = vand.u32 %v806, 4294901760
    %1870 = vmatpush.msra.mxu0 %v1869
    %v1871 = vand.u32 %v804, 4294901760
    %1872 = vmatpush.msra.mxu0 %v1871
    %v1873 = vand.u32 %v802, 4294901760
    %1874 = vmatpush.msra.mxu0 %v1873
    %v1875 = vand.u32 %v800, 4294901760
    %1876 = vmatpush.msra.mxu0 %v1875
    %v1877 = vand.u32 %v798, 4294901760
    %1878 = vmatpush.msra.mxu0 %v1877
    %v1879 = vand.u32 %v795, 4294901760
    %1880 = vmatmul.f32.gmra.mxu0 %v1879
    %v1881 = vpop.f32.mrf.mxu0
    %v1882 = vadd.f32 %v1845, %v1881
    %1883 = vdwg.mxu0
    %v1884 = vand.u32 %v860, 4294901760
    %1885 = vmatpush.msra.mxu0 %v1884
    %v1886 = vand.u32 %v858, 4294901760
    %1887 = vmatpush.msra.mxu0 %v1886
    %v1888 = vand.u32 %v856, 4294901760
    %1889 = vmatpush.msra.mxu0 %v1888
    %v1890 = vand.u32 %v854, 4294901760
    %1891 = vmatpush.msra.mxu0 %v1890
    %v1892 = vand.u32 %v852, 4294901760
    %1893 = vmatpush.msra.mxu0 %v1892
    %v1894 = vand.u32 %v850, 4294901760
    %1895 = vmatpush.msra.mxu0 %v1894
    %v1896 = vand.u32 %v848, 4294901760
    %1897 = vmatpush.msra.mxu0 %v1896
    %v1898 = vand.u32 %v846, 4294901760
    %1899 = vmatpush.msra.mxu0 %v1898
    %v1900 = vand.u32 %v844, 4294901760
    %1901 = vmatpush.msra.mxu0 %v1900
    %v1902 = vand.u32 %v842, 4294901760
    %1903 = vmatpush.msra.mxu0 %v1902
    %v1904 = vand.u32 %v840, 4294901760
    %1905 = vmatpush.msra.mxu0 %v1904
    %v1906 = vand.u32 %v838, 4294901760
    %1907 = vmatpush.msra.mxu0 %v1906
    %v1908 = vand.u32 %v836, 4294901760
    %1909 = vmatpush.msra.mxu0 %v1908
    %v1910 = vand.u32 %v834, 4294901760
    %1911 = vmatpush.msra.mxu0 %v1910
    %v1912 = vand.u32 %v832, 4294901760
    %1913 = vmatpush.msra.mxu0 %v1912
    %v1914 = vand.u32 %v830, 4294901760
    %1915 = vmatpush.msra.mxu0 %v1914
    %v1916 = vand.u32 %v796, 4294901760
    %v1917 = vsub.f32 %v796, %v1916
    %v1918 = vand.u32 %v1917, 4294901760
    %v1919 = vsub.f32 %v1917, %v1918
    %v1920 = vand.u32 %v1919, 4294901760
    %1921 = vmatmul.f32.gmra.mxu0 %v1920
    %v1922 = vpop.f32.mrf.mxu0
    %v1923 = vadd.f32 %v1882, %v1922
    %1924 = vdwg.mxu0
    %v1925 = vand.u32 %v860, 4294901760
    %v1926 = vsub.f32 %v860, %v1925
    %v1927 = vand.u32 %v1926, 4294901760
    %v1928 = vsub.f32 %v1926, %v1927
    %v1929 = vand.u32 %v1928, 4294901760
    %1930 = vmatpush.msra.mxu0 %v1929
    %v1931 = vand.u32 %v858, 4294901760
    %v1932 = vsub.f32 %v858, %v1931
    %v1933 = vand.u32 %v1932, 4294901760
    %v1934 = vsub.f32 %v1932, %v1933
    %v1935 = vand.u32 %v1934, 4294901760
    %1936 = vmatpush.msra.mxu0 %v1935
    %v1937 = vand.u32 %v856, 4294901760
    %v1938 = vsub.f32 %v856, %v1937
    %v1939 = vand.u32 %v1938, 4294901760
    %v1940 = vsub.f32 %v1938, %v1939
    %v1941 = vand.u32 %v1940, 4294901760
    %1942 = vmatpush.msra.mxu0 %v1941
    %v1943 = vand.u32 %v854, 4294901760
    %v1944 = vsub.f32 %v854, %v1943
    %v1945 = vand.u32 %v1944, 4294901760
    %v1946 = vsub.f32 %v1944, %v1945
    %v1947 = vand.u32 %v1946, 4294901760
    %1948 = vmatpush.msra.mxu0 %v1947
    %v1949 = vand.u32 %v852, 4294901760
    %v1950 = vsub.f32 %v852, %v1949
    %v1951 = vand.u32 %v1950, 4294901760
    %v1952 = vsub.f32 %v1950, %v1951
    %v1953 = vand.u32 %v1952, 4294901760
    %1954 = vmatpush.msra.mxu0 %v1953
    %v1955 = vand.u32 %v850, 4294901760
    %v1956 = vsub.f32 %v850, %v1955
    %v1957 = vand.u32 %v1956, 4294901760
    %v1958 = vsub.f32 %v1956, %v1957
    %v1959 = vand.u32 %v1958, 4294901760
    %1960 = vmatpush.msra.mxu0 %v1959
    %v1961 = vand.u32 %v848, 4294901760
    %v1962 = vsub.f32 %v848, %v1961
    %v1963 = vand.u32 %v1962, 4294901760
    %v1964 = vsub.f32 %v1962, %v1963
    %v1965 = vand.u32 %v1964, 4294901760
    %1966 = vmatpush.msra.mxu0 %v1965
    %v1967 = vand.u32 %v846, 4294901760
    %v1968 = vsub.f32 %v846, %v1967
    %v1969 = vand.u32 %v1968, 4294901760
    %v1970 = vsub.f32 %v1968, %v1969
    %v1971 = vand.u32 %v1970, 4294901760
    %1972 = vmatpush.msra.mxu0 %v1971
    %v1973 = vand.u32 %v844, 4294901760
    %v1974 = vsub.f32 %v844, %v1973
    %v1975 = vand.u32 %v1974, 4294901760
    %v1976 = vsub.f32 %v1974, %v1975
    %v1977 = vand.u32 %v1976, 4294901760
    %1978 = vmatpush.msra.mxu0 %v1977
    %v1979 = vand.u32 %v842, 4294901760
    %v1980 = vsub.f32 %v842, %v1979
    %v1981 = vand.u32 %v1980, 4294901760
    %v1982 = vsub.f32 %v1980, %v1981
    %v1983 = vand.u32 %v1982, 4294901760
    %1984 = vmatpush.msra.mxu0 %v1983
    %v1985 = vand.u32 %v840, 4294901760
    %v1986 = vsub.f32 %v840, %v1985
    %v1987 = vand.u32 %v1986, 4294901760
    %v1988 = vsub.f32 %v1986, %v1987
    %v1989 = vand.u32 %v1988, 4294901760
    %1990 = vmatpush.msra.mxu0 %v1989
    %v1991 = vand.u32 %v838, 4294901760
    %v1992 = vsub.f32 %v838, %v1991
    %v1993 = vand.u32 %v1992, 4294901760
    %v1994 = vsub.f32 %v1992, %v1993
    %v1995 = vand.u32 %v1994, 4294901760
    %1996 = vmatpush.msra.mxu0 %v1995
    %v1997 = vand.u32 %v836, 4294901760
    %v1998 = vsub.f32 %v836, %v1997
    %v1999 = vand.u32 %v1998, 4294901760
    %v2000 = vsub.f32 %v1998, %v1999
    %v2001 = vand.u32 %v2000, 4294901760
    %2002 = vmatpush.msra.mxu0 %v2001
    %v2003 = vand.u32 %v834, 4294901760
    %v2004 = vsub.f32 %v834, %v2003
    %v2005 = vand.u32 %v2004, 4294901760
    %v2006 = vsub.f32 %v2004, %v2005
    %v2007 = vand.u32 %v2006, 4294901760
    %2008 = vmatpush.msra.mxu0 %v2007
    %v2009 = vand.u32 %v832, 4294901760
    %v2010 = vsub.f32 %v832, %v2009
    %v2011 = vand.u32 %v2010, 4294901760
    %v2012 = vsub.f32 %v2010, %v2011
    %v2013 = vand.u32 %v2012, 4294901760
    %2014 = vmatpush.msra.mxu0 %v2013
    %v2015 = vand.u32 %v830, 4294901760
    %v2016 = vsub.f32 %v830, %v2015
    %v2017 = vand.u32 %v2016, 4294901760
    %v2018 = vsub.f32 %v2016, %v2017
    %v2019 = vand.u32 %v2018, 4294901760
    %2020 = vmatpush.msra.mxu0 %v2019
    %v2021 = vand.u32 %v796, 4294901760
    %2022 = vmatmul.f32.gmra.mxu0 %v2021
    %v2023 = vpop.f32.mrf.mxu0
    %v2024 = vadd.f32 %v1923, %v2023
    %2025 = vdwg.mxu0
    %v2026 = vand.u32 %v860, 4294901760
    %v2027 = vsub.f32 %v860, %v2026
    %2028 = vmatpush.msra.mxu0 %v2027
    %v2029 = vand.u32 %v858, 4294901760
    %v2030 = vsub.f32 %v858, %v2029
    %2031 = vmatpush.msra.mxu0 %v2030
    %v2032 = vand.u32 %v856, 4294901760
    %v2033 = vsub.f32 %v856, %v2032
    %2034 = vmatpush.msra.mxu0 %v2033
    %v2035 = vand.u32 %v854, 4294901760
    %v2036 = vsub.f32 %v854, %v2035
    %2037 = vmatpush.msra.mxu0 %v2036
    %v2038 = vand.u32 %v852, 4294901760
    %v2039 = vsub.f32 %v852, %v2038
    %2040 = vmatpush.msra.mxu0 %v2039
    %v2041 = vand.u32 %v850, 4294901760
    %v2042 = vsub.f32 %v850, %v2041
    %2043 = vmatpush.msra.mxu0 %v2042
    %v2044 = vand.u32 %v848, 4294901760
    %v2045 = vsub.f32 %v848, %v2044
    %2046 = vmatpush.msra.mxu0 %v2045
    %v2047 = vand.u32 %v846, 4294901760
    %v2048 = vsub.f32 %v846, %v2047
    %2049 = vmatpush.msra.mxu0 %v2048
    %v2050 = vand.u32 %v844, 4294901760
    %v2051 = vsub.f32 %v844, %v2050
    %2052 = vmatpush.msra.mxu0 %v2051
    %v2053 = vand.u32 %v842, 4294901760
    %v2054 = vsub.f32 %v842, %v2053
    %2055 = vmatpush.msra.mxu0 %v2054
    %v2056 = vand.u32 %v840, 4294901760
    %v2057 = vsub.f32 %v840, %v2056
    %2058 = vmatpush.msra.mxu0 %v2057
    %v2059 = vand.u32 %v838, 4294901760
    %v2060 = vsub.f32 %v838, %v2059
    %2061 = vmatpush.msra.mxu0 %v2060
    %v2062 = vand.u32 %v836, 4294901760
    %v2063 = vsub.f32 %v836, %v2062
    %2064 = vmatpush.msra.mxu0 %v2063
    %v2065 = vand.u32 %v834, 4294901760
    %v2066 = vsub.f32 %v834, %v2065
    %2067 = vmatpush.msra.mxu0 %v2066
    %v2068 = vand.u32 %v832, 4294901760
    %v2069 = vsub.f32 %v832, %v2068
    %2070 = vmatpush.msra.mxu0 %v2069
    %v2071 = vand.u32 %v830, 4294901760
    %v2072 = vsub.f32 %v830, %v2071
    %2073 = vmatpush.msra.mxu0 %v2072
    %v2074 = vand.u32 %v796, 4294901760
    %v2075 = vsub.f32 %v796, %v2074
    %2076 = vmatmul.f32.gmra.mxu0 %v2075
    %v2077 = vpop.f32.mrf.mxu0
    %v2078 = vadd.f32 %v2024, %v2077
    %2079 = vdwg.mxu0
    %v2080 = vand.u32 %v860, 4294901760
    %2081 = vmatpush.msra.mxu0 %v2080
    %v2082 = vand.u32 %v858, 4294901760
    %2083 = vmatpush.msra.mxu0 %v2082
    %v2084 = vand.u32 %v856, 4294901760
    %2085 = vmatpush.msra.mxu0 %v2084
    %v2086 = vand.u32 %v854, 4294901760
    %2087 = vmatpush.msra.mxu0 %v2086
    %v2088 = vand.u32 %v852, 4294901760
    %2089 = vmatpush.msra.mxu0 %v2088
    %v2090 = vand.u32 %v850, 4294901760
    %2091 = vmatpush.msra.mxu0 %v2090
    %v2092 = vand.u32 %v848, 4294901760
    %2093 = vmatpush.msra.mxu0 %v2092
    %v2094 = vand.u32 %v846, 4294901760
    %2095 = vmatpush.msra.mxu0 %v2094
    %v2096 = vand.u32 %v844, 4294901760
    %2097 = vmatpush.msra.mxu0 %v2096
    %v2098 = vand.u32 %v842, 4294901760
    %2099 = vmatpush.msra.mxu0 %v2098
    %v2100 = vand.u32 %v840, 4294901760
    %2101 = vmatpush.msra.mxu0 %v2100
    %v2102 = vand.u32 %v838, 4294901760
    %2103 = vmatpush.msra.mxu0 %v2102
    %v2104 = vand.u32 %v836, 4294901760
    %2105 = vmatpush.msra.mxu0 %v2104
    %v2106 = vand.u32 %v834, 4294901760
    %2107 = vmatpush.msra.mxu0 %v2106
    %v2108 = vand.u32 %v832, 4294901760
    %2109 = vmatpush.msra.mxu0 %v2108
    %v2110 = vand.u32 %v830, 4294901760
    %2111 = vmatpush.msra.mxu0 %v2110
    %v2112 = vand.u32 %v796, 4294901760
    %v2113 = vsub.f32 %v796, %v2112
    %v2114 = vand.u32 %v2113, 4294901760
    %2115 = vmatmul.f32.gmra.mxu0 %v2114
    %v2116 = vpop.f32.mrf.mxu0
    %v2117 = vadd.f32 %v2078, %v2116
    %2118 = vdwg.mxu0
    %v2119 = vand.u32 %v860, 4294901760
    %v2120 = vsub.f32 %v860, %v2119
    %v2121 = vand.u32 %v2120, 4294901760
    %2122 = vmatpush.msra.mxu0 %v2121
    %v2123 = vand.u32 %v858, 4294901760
    %v2124 = vsub.f32 %v858, %v2123
    %v2125 = vand.u32 %v2124, 4294901760
    %2126 = vmatpush.msra.mxu0 %v2125
    %v2127 = vand.u32 %v856, 4294901760
    %v2128 = vsub.f32 %v856, %v2127
    %v2129 = vand.u32 %v2128, 4294901760
    %2130 = vmatpush.msra.mxu0 %v2129
    %v2131 = vand.u32 %v854, 4294901760
    %v2132 = vsub.f32 %v854, %v2131
    %v2133 = vand.u32 %v2132, 4294901760
    %2134 = vmatpush.msra.mxu0 %v2133
    %v2135 = vand.u32 %v852, 4294901760
    %v2136 = vsub.f32 %v852, %v2135
    %v2137 = vand.u32 %v2136, 4294901760
    %2138 = vmatpush.msra.mxu0 %v2137
    %v2139 = vand.u32 %v850, 4294901760
    %v2140 = vsub.f32 %v850, %v2139
    %v2141 = vand.u32 %v2140, 4294901760
    %2142 = vmatpush.msra.mxu0 %v2141
    %v2143 = vand.u32 %v848, 4294901760
    %v2144 = vsub.f32 %v848, %v2143
    %v2145 = vand.u32 %v2144, 4294901760
    %2146 = vmatpush.msra.mxu0 %v2145
    %v2147 = vand.u32 %v846, 4294901760
    %v2148 = vsub.f32 %v846, %v2147
    %v2149 = vand.u32 %v2148, 4294901760
    %2150 = vmatpush.msra.mxu0 %v2149
    %v2151 = vand.u32 %v844, 4294901760
    %v2152 = vsub.f32 %v844, %v2151
    %v2153 = vand.u32 %v2152, 4294901760
    %2154 = vmatpush.msra.mxu0 %v2153
    %v2155 = vand.u32 %v842, 4294901760
    %v2156 = vsub.f32 %v842, %v2155
    %v2157 = vand.u32 %v2156, 4294901760
    %2158 = vmatpush.msra.mxu0 %v2157
    %v2159 = vand.u32 %v840, 4294901760
    %v2160 = vsub.f32 %v840, %v2159
    %v2161 = vand.u32 %v2160, 4294901760
    %2162 = vmatpush.msra.mxu0 %v2161
    %v2163 = vand.u32 %v838, 4294901760
    %v2164 = vsub.f32 %v838, %v2163
    %v2165 = vand.u32 %v2164, 4294901760
    %2166 = vmatpush.msra.mxu0 %v2165
    %v2167 = vand.u32 %v836, 4294901760
    %v2168 = vsub.f32 %v836, %v2167
    %v2169 = vand.u32 %v2168, 4294901760
    %2170 = vmatpush.msra.mxu0 %v2169
    %v2171 = vand.u32 %v834, 4294901760
    %v2172 = vsub.f32 %v834, %v2171
    %v2173 = vand.u32 %v2172, 4294901760
    %2174 = vmatpush.msra.mxu0 %v2173
    %v2175 = vand.u32 %v832, 4294901760
    %v2176 = vsub.f32 %v832, %v2175
    %v2177 = vand.u32 %v2176, 4294901760
    %2178 = vmatpush.msra.mxu0 %v2177
    %v2179 = vand.u32 %v830, 4294901760
    %v2180 = vsub.f32 %v830, %v2179
    %v2181 = vand.u32 %v2180, 4294901760
    %2182 = vmatpush.msra.mxu0 %v2181
    %v2183 = vand.u32 %v796, 4294901760
    %2184 = vmatmul.f32.gmra.mxu0 %v2183
    %v2185 = vpop.f32.mrf.mxu0
    %v2186 = vadd.f32 %v2117, %v2185
    %2187 = vdwg.mxu0
    %v2188 = vand.u32 %v860, 4294901760
    %2189 = vmatpush.msra.mxu0 %v2188
    %v2190 = vand.u32 %v858, 4294901760
    %2191 = vmatpush.msra.mxu0 %v2190
    %v2192 = vand.u32 %v856, 4294901760
    %2193 = vmatpush.msra.mxu0 %v2192
    %v2194 = vand.u32 %v854, 4294901760
    %2195 = vmatpush.msra.mxu0 %v2194
    %v2196 = vand.u32 %v852, 4294901760
    %2197 = vmatpush.msra.mxu0 %v2196
    %v2198 = vand.u32 %v850, 4294901760
    %2199 = vmatpush.msra.mxu0 %v2198
    %v2200 = vand.u32 %v848, 4294901760
    %2201 = vmatpush.msra.mxu0 %v2200
    %v2202 = vand.u32 %v846, 4294901760
    %2203 = vmatpush.msra.mxu0 %v2202
    %v2204 = vand.u32 %v844, 4294901760
    %2205 = vmatpush.msra.mxu0 %v2204
    %v2206 = vand.u32 %v842, 4294901760
    %2207 = vmatpush.msra.mxu0 %v2206
    %v2208 = vand.u32 %v840, 4294901760
    %2209 = vmatpush.msra.mxu0 %v2208
    %v2210 = vand.u32 %v838, 4294901760
    %2211 = vmatpush.msra.mxu0 %v2210
    %v2212 = vand.u32 %v836, 4294901760
    %2213 = vmatpush.msra.mxu0 %v2212
    %v2214 = vand.u32 %v834, 4294901760
    %2215 = vmatpush.msra.mxu0 %v2214
    %v2216 = vand.u32 %v832, 4294901760
    %2217 = vmatpush.msra.mxu0 %v2216
    %v2218 = vand.u32 %v830, 4294901760
    %2219 = vmatpush.msra.mxu0 %v2218
    %v2220 = vand.u32 %v796, 4294901760
    %2221 = vmatmul.f32.gmra.mxu0 %v2220
    %v2222 = vpop.f32.mrf.mxu0
    %v2223 = vadd.f32 %v2186, %v2222
    %2224 = vdwg.mxu0
    %v2225 = vrsqrt.pop %v1541
    %v2226 = vmul.f32 %v2225, %v1541
    %v2227 = vmul.f32 %v2226, %v2225
    %v2228 = vmul.f32 0.5, %v2227
    %v2229 = vsub.f32 1.5, %v2228
    %v2230 = vmul.f32 %v2225, %v2229
    %vm2231 = vweird.f32 %v1541
    %vm2232 = vweird.f32 %v2225
    %vm2233 = vmor %vm2231, %vm2232
    %v2234 = vsel %vm2233, %v2225, %v2230
    %v2235 = vrsqrt.pop %v2223
    %v2236 = vmul.f32 %v2235, %v2223
    %v2237 = vmul.f32 %v2236, %v2235
    %v2238 = vmul.f32 0.5, %v2237
    %v2239 = vsub.f32 1.5, %v2238
    %v2240 = vmul.f32 %v2235, %v2239
    %vm2241 = vweird.f32 %v2223
    %vm2242 = vweird.f32 %v2235
    %vm2243 = vmor %vm2241, %vm2242
    %v2244 = vsel %vm2243, %v2235, %v2240
    %v2245 = vmul.f32 %v452, %v2234
    %v2246 = vmul.f32 %v793, %v2244
    %v2247 = vld [vmem:[%s3] sm:$0x3]
    %v2249 = vperm.slane %v2247, 0
    %v2250 = vperm.slane %v2247, 1
    %v2253 = vmul.f32 %v2245, %v2249
    %v2254 = vmul.f32 %v2246, %v2250
    %v2255 = vld [vmem:[#allocation8] sm:$0x3]
    %v2257 = vperm.slane %v2255, 0
    %v2258 = vperm.slane %v2255, 1
    %v2261 = vadd.f32 %v2253, %v2257
    %v2262 = vadd.f32 %v2254, %v2258
    %2263 = vst [vmem:[#allocation10] sm:$0xff] %v2261
    %2264 = vst [vmem:[#allocation10 + $0x8] sm:$0xff] %v2262
    // Predicated region
    $region38: #{tpu_custom_call.1} parent=1 // pred_check
      _
    $region39: #{tpu_custom_call.1} parent=1 // pred_check_branch
      %2266 = sbr.rel (0) target = $region41
    $region40: #{tpu_custom_call.1} parent=1 // pred_region
      %2268 = vsyncadd [#allocation4], 0
      %s2270 = sshll.u32 [#allocation10], 4
      %s2271 = int_to_ptr.vmem [resolvable:$true] %s2270
      %s2272 = sshll.u32 %s5, 4
      %s2273 = int_to_ptr.hbm [resolvable:$true] %s2272
      %2275 = dma.vmem_to_hbm [thread:$0]  %s2271, 256, %s2273, [#allocation4]
    $region41: #{tpu_custom_call.1} parent=1 // pred_fallthru
      _
    // Predicated region
    $region42: #{tpu_custom_call.1} parent=1 // pred_check
      _
    $region43: #{tpu_custom_call.1} parent=1 // pred_check_branch
      %2277 = sbr.rel (0) target = $region45
    $region44: #{tpu_custom_call.1} parent=1 // pred_region
      %2279 = dma.done [#allocation4], 256
    $region45: #{tpu_custom_call.1} parent=1 // pred_fallthru
      _
    %2280 = vsyncpa [#allocation3], 1
    %2281 = vsyncpa [#allocation6], 1
    %2282 = vsyncpa [#allocation9], 1
    %2283 = vsyncpa [#allocation4], 1

// kernel: tpu_custom_call.1
$region0: #{tpu_custom_call.1}
  #allocation0 [shape = 'u32[]', space=smem, size = 0x4, offset = 0x4, fixed_abs, tag = 'smem constant byte address 0x4 - core index']
  #allocation1 [shape = 'u32[72,128]{1,0:T(1,128)}', space=vmem, size = 0x9000, scoped, tag = 'internal scratch']
  %s0 = inlined_call_operand.hbm [shape: f32[8,128], index: 0, kind: input, shape index: {}]
  %s1 = inlined_call_operand.hbm [shape: f32[128,256], index: 1, kind: input, shape index: {}]
  %s2 = inlined_call_operand.hbm [shape: f32[256,256], index: 2, kind: input, shape index: {}]
  %s3 = inlined_call_operand.vmem [shape: f32[1,256], index: 3, kind: input, shape index: {}]
  %s4 = inlined_call_operand.hbm [shape: f32[1,256], index: 4, kind: input, shape index: {}]
  %s5 = inlined_call_operand.hbm [shape: f32[8,256], index: 5, kind: output, shape index: {}]
  %s6 = sld [smem:[#allocation0]]
  $region46: #{tpu_custom_call.1} parent=0
    _
  %s8 = ssub.s32 1, %s6
  %s9 = scalar_select 0, %s8, %s6
  $region1: #{tpu_custom_call.1} parent=0
    #allocation2 [shape = 'u8[4096]{0}', space=vmem, size = 0x1000, scoped, tag = 'input window, operand 0, single buffered']
    #allocation3 [shape = 's32[1]{0}', space=sflag, size = 0x4, scoped, tag = 'scoped memory for tpu_custom_call.1']
    #allocation4 [shape = 's32[1]{0}', space=sflag, size = 0x4, scoped, tag = 'scoped memory for tpu_custom_call.1']
    #allocation5 [shape = 'u8[131072]{0}', space=vmem, size = 0x20000, scoped, tag = 'input window, operand 1, single buffered']
    #allocation6 [shape = 's32[1]{0}', space=sflag, size = 0x4, scoped, tag = 'scoped memory for tpu_custom_call.1']
    #allocation7 [shape = 'u8[262144]{0}', space=vmem, size = 0x40000, scoped, tag = 'input window, operand 2, single buffered']
    #allocation8 [shape = 'u8[1024]{0}', space=vmem, size = 0x400, scoped, tag = 'input window, operand 4, single buffered']
    #allocation9 [shape = 's32[1]{0}', space=sflag, size = 0x4, scoped, tag = 'scoped memory for tpu_custom_call.1']
    #allocation10 [shape = 'u8[8192]{0}', space=vmem, size = 0x2000, scoped, tag = 'output window, operand 0, single buffered']
    %10 = vsyncpa [#allocation3], 0
    %11 = vsyncpa [#allocation6], 0
    %12 = vsyncpa [#allocation9], 0
    %13 = vsyncpa [#allocation4], 0
    // Predicated region
    $region2: #{tpu_custom_call.1} parent=1 // pred_check
      _
    $region3: #{tpu_custom_call.1} parent=1 // pred_check_branch
      %15 = sbr.rel (0) target = $region5
    $region4: #{tpu_custom_call.1} parent=1 // pred_region
      %17 = vsyncadd [#allocation3], 0
      %s19 = sshll.u32 %s0, 4
      %s20 = int_to_ptr.hbm [resolvable:$true] %s19
      %s21 = sshll.u32 [#allocation2], 4
      %s22 = int_to_ptr.vmem [resolvable:$true] %s21
      %24 = dma.hbm_to_vmem [thread:$0]  %s20, 128, %s22, [#allocation3]
    $region5: #{tpu_custom_call.1} parent=1 // pred_fallthru
      _
    // Predicated region
    $region6: #{tpu_custom_call.1} parent=1 // pred_check
      _
    $region7: #{tpu_custom_call.1} parent=1 // pred_check_branch
      %26 = sbr.rel (0) target = $region9
    $region8: #{tpu_custom_call.1} parent=1 // pred_region
      %28 = vsyncadd [#allocation6], 0
      %s29 = sshll.u32 %s1, 4
      %s30 = int_to_ptr.hbm [resolvable:$true] %s29
      %s31 = sshll.u32 [#allocation5], 4
      %s32 = int_to_ptr.vmem [resolvable:$true] %s31
      %37 = dma.hbm_to_vmem [thread:$0]  %s30, 4096, %s32, [#allocation6], 256, 256, 16
    $region9: #{tpu_custom_call.1} parent=1 // pred_fallthru
      _
    // Predicated region
    $region10: #{tpu_custom_call.1} parent=1 // pred_check
      _
    $region11: #{tpu_custom_call.1} parent=1 // pred_check_branch
      %39 = sbr.rel (0) target = $region13
    $region12: #{tpu_custom_call.1} parent=1 // pred_region
      %41 = vsyncadd [#allocation6], 0
      %s42 = sshll.u32 %s2, 4
      %s43 = int_to_ptr.hbm [resolvable:$true] %s42
      %s44 = sshll.u32 [#allocation7], 4
      %s45 = int_to_ptr.vmem [resolvable:$true] %s44
      %50 = dma.hbm_to_vmem [thread:$0]  %s43, 8192, %s45, [#allocation6], 256, 256, 16
    $region13: #{tpu_custom_call.1} parent=1 // pred_fallthru
      _
    // Predicated region
    $region14: #{tpu_custom_call.1} parent=1 // pred_check
      _
    $region15: #{tpu_custom_call.1} parent=1 // pred_check_branch
      %52 = sbr.rel (0) target = $region17
    $region16: #{tpu_custom_call.1} parent=1 // pred_region
      _
    $region17: #{tpu_custom_call.1} parent=1 // pred_fallthru
      _
    // Predicated region
    $region18: #{tpu_custom_call.1} parent=1 // pred_check
      _
    $region19: #{tpu_custom_call.1} parent=1 // pred_check_branch
      %54 = sbr.rel (0) target = $region21
    $region20: #{tpu_custom_call.1} parent=1 // pred_region
      %56 = vsyncadd [#allocation9], 0
      %s58 = sshll.u32 %s4, 4
      %s59 = int_to_ptr.hbm [resolvable:$true] %s58
      %s60 = sshll.u32 [#allocation8], 4
      %s61 = int_to_ptr.vmem [resolvable:$true] %s60
      %63 = dma.hbm_to_vmem [thread:$0]  %s59, 32, %s61, [#allocation9]
    $region21: #{tpu_custom_call.1} parent=1 // pred_fallthru
      _
    // Predicated region
    $region22: #{tpu_custom_call.1} parent=1 // pred_check
      _
    $region23: #{tpu_custom_call.1} parent=1 // pred_check_branch
      %65 = sbr.rel (0) target = $region25
    $region24: #{tpu_custom_call.1} parent=1 // pred_region
      %67 = dma.done [#allocation3], 128
    $region25: #{tpu_custom_call.1} parent=1 // pred_fallthru
      _
    // Predicated region
    $region26: #{tpu_custom_call.1} parent=1 // pred_check
      _
    $region27: #{tpu_custom_call.1} parent=1 // pred_check_branch
      %69 = sbr.rel (0) target = $region29
    $region28: #{tpu_custom_call.1} parent=1 // pred_region
      %71 = dma.done [#allocation6], 4096
    $region29: #{tpu_custom_call.1} parent=1 // pred_fallthru
      _
    // Predicated region
    $region30: #{tpu_custom_call.1} parent=1 // pred_check
      _
    $region31: #{tpu_custom_call.1} parent=1 // pred_check_branch
      %73 = sbr.rel (0) target = $region33
    $region32: #{tpu_custom_call.1} parent=1 // pred_region
      %75 = dma.done [#allocation6], 8192
    $region33: #{tpu_custom_call.1} parent=1 // pred_fallthru
      _
    // Predicated region
    $region34: #{tpu_custom_call.1} parent=1 // pred_check
      _
    $region35: #{tpu_custom_call.1} parent=1 // pred_check_branch
      %77 = sbr.rel (0) target = $region37
    $region36: #{tpu_custom_call.1} parent=1 // pred_region
      %79 = dma.done [#allocation9], 32
    $region37: #{tpu_custom_call.1} parent=1 // pred_fallthru
      _
    %v80 = vld [vmem:[#allocation2] sm:$0xff]
    %v81 = vld [vmem:[#allocation5] sm:$0xff]
    %v82 = vld [vmem:[#allocation5 + $0x8] sm:$0xff]
    %v83 = vld [vmem:[#allocation5 + $0x10] sm:$0xff]
    %v84 = vld [vmem:[#allocation5 + $0x18] sm:$0xff]
    %v85 = vld [vmem:[#allocation5 + $0x20] sm:$0xff]
    %v86 = vld [vmem:[#allocation5 + $0x28] sm:$0xff]
    %v87 = vld [vmem:[#allocation5 + $0x30] sm:$0xff]
    %v88 = vld [vmem:[#allocation5 + $0x38] sm:$0xff]
    %v89 = vld [vmem:[#allocation5 + $0x40] sm:$0xff]
    %v90 = vld [vmem:[#allocation5 + $0x48] sm:$0xff]
    %v91 = vld [vmem:[#allocation5 + $0x50] sm:$0xff]
    %v92 = vld [vmem:[#allocation5 + $0x58] sm:$0xff]
    %v93 = vld [vmem:[#allocation5 + $0x60] sm:$0xff]
    %v94 = vld [vmem:[#allocation5 + $0x68] sm:$0xff]
    %v95 = vld [vmem:[#allocation5 + $0x70] sm:$0xff]
    %v96 = vld [vmem:[#allocation5 + $0x78] sm:$0xff]
    %v97 = vld [vmem:[#allocation5 + $0x80] sm:$0xff]
    %v98 = vld [vmem:[#allocation5 + $0x88] sm:$0xff]
    %v99 = vld [vmem:[#allocation5 + $0x90] sm:$0xff]
    %v100 = vld [vmem:[#allocation5 + $0x98] sm:$0xff]
    %v101 = vld [vmem:[#allocation5 + $0xa0] sm:$0xff]
    %v102 = vld [vmem:[#allocation5 + $0xa8] sm:$0xff]
    %v103 = vld [vmem:[#allocation5 + $0xb0] sm:$0xff]
    %v104 = vld [vmem:[#allocation5 + $0xb8] sm:$0xff]
    %v105 = vld [vmem:[#allocation5 + $0xc0] sm:$0xff]
    %v106 = vld [vmem:[#allocation5 + $0xc8] sm:$0xff]
    %v107 = vld [vmem:[#allocation5 + $0xd0] sm:$0xff]
    %v108 = vld [vmem:[#allocation5 + $0xd8] sm:$0xff]
    %v109 = vld [vmem:[#allocation5 + $0xe0] sm:$0xff]
    %v110 = vld [vmem:[#allocation5 + $0xe8] sm:$0xff]
    %v111 = vld [vmem:[#allocation5 + $0xf0] sm:$0xff]
    %v112 = vld [vmem:[#allocation5 + $0xf8] sm:$0xff]
    %v113 = vand.u32 %v111, 4294901760
    %114 = vmatpush.msra.mxu0 %v113
    %v115 = vand.u32 %v109, 4294901760
    %116 = vmatpush.msra.mxu0 %v115
    %v117 = vand.u32 %v107, 4294901760
    %118 = vmatpush.msra.mxu0 %v117
    %v119 = vand.u32 %v105, 4294901760
    %120 = vmatpush.msra.mxu0 %v119
    %v121 = vand.u32 %v103, 4294901760
    %122 = vmatpush.msra.mxu0 %v121
    %v123 = vand.u32 %v101, 4294901760
    %124 = vmatpush.msra.mxu0 %v123
    %v125 = vand.u32 %v99, 4294901760
    %126 = vmatpush.msra.mxu0 %v125
    %v127 = vand.u32 %v97, 4294901760
    %128 = vmatpush.msra.mxu0 %v127
    %v129 = vand.u32 %v95, 4294901760
    %130 = vmatpush.msra.mxu0 %v129
    %v131 = vand.u32 %v93, 4294901760
    %132 = vmatpush.msra.mxu0 %v131
    %v133 = vand.u32 %v91, 4294901760
    %134 = vmatpush.msra.mxu0 %v133
    %v135 = vand.u32 %v89, 4294901760
    %136 = vmatpush.msra.mxu0 %v135
    %v137 = vand.u32 %v87, 4294901760
    %138 = vmatpush.msra.mxu0 %v137
    %v139 = vand.u32 %v85, 4294901760
    %140 = vmatpush.msra.mxu0 %v139
    %v141 = vand.u32 %v83, 4294901760
    %142 = vmatpush.msra.mxu0 %v141
    %v143 = vand.u32 %v81, 4294901760
    %144 = vmatpush.msra.mxu0 %v143
    %v145 = vand.u32 %v80, 4294901760
    %v146 = vsub.f32 %v80, %v145
    %v147 = vand.u32 %v146, 4294901760
    %v148 = vsub.f32 %v146, %v147
    %v149 = vand.u32 %v148, 4294901760
    %150 = vmatmul.f32.gmra.mxu0 %v149
    %v151 = vpop.f32.mrf.mxu0
    %v152 = vadd.f32 0.0, %v151
    %153 = vdwg.mxu0
    %v154 = vand.u32 %v111, 4294901760
    %v155 = vsub.f32 %v111, %v154
    %v156 = vand.u32 %v155, 4294901760
    %v157 = vsub.f32 %v155, %v156
    %v158 = vand.u32 %v157, 4294901760
    %159 = vmatpush.msra.mxu0 %v158
    %v160 = vand.u32 %v109, 4294901760
    %v161 = vsub.f32 %v109, %v160
    %v162 = vand.u32 %v161, 4294901760
    %v163 = vsub.f32 %v161, %v162
    %v164 = vand.u32 %v163, 4294901760
    %165 = vmatpush.msra.mxu0 %v164
    %v166 = vand.u32 %v107, 4294901760
    %v167 = vsub.f32 %v107, %v166
    %v168 = vand.u32 %v167, 4294901760
    %v169 = vsub.f32 %v167, %v168
    %v170 = vand.u32 %v169, 4294901760
    %171 = vmatpush.msra.mxu0 %v170
    %v172 = vand.u32 %v105, 4294901760
    %v173 = vsub.f32 %v105, %v172
    %v174 = vand.u32 %v173, 4294901760
    %v175 = vsub.f32 %v173, %v174
    %v176 = vand.u32 %v175, 4294901760
    %177 = vmatpush.msra.mxu0 %v176
    %v178 = vand.u32 %v103, 4294901760
    %v179 = vsub.f32 %v103, %v178
    %v180 = vand.u32 %v179, 4294901760
    %v181 = vsub.f32 %v179, %v180
    %v182 = vand.u32 %v181, 4294901760
    %183 = vmatpush.msra.mxu0 %v182
    %v184 = vand.u32 %v101, 4294901760
    %v185 = vsub.f32 %v101, %v184
    %v186 = vand.u32 %v185, 4294901760
    %v187 = vsub.f32 %v185, %v186
    %v188 = vand.u32 %v187, 4294901760
    %189 = vmatpush.msra.mxu0 %v188
    %v190 = vand.u32 %v99, 4294901760
    %v191 = vsub.f32 %v99, %v190
    %v192 = vand.u32 %v191, 4294901760
    %v193 = vsub.f32 %v191, %v192
    %v194 = vand.u32 %v193, 4294901760
    %195 = vmatpush.msra.mxu0 %v194
    %v196 = vand.u32 %v97, 4294901760
    %v197 = vsub.f32 %v97, %v196
    %v198 = vand.u32 %v197, 4294901760
    %v199 = vsub.f32 %v197, %v198
    %v200 = vand.u32 %v199, 4294901760
    %201 = vmatpush.msra.mxu0 %v200
    %v202 = vand.u32 %v95, 4294901760
    %v203 = vsub.f32 %v95, %v202
    %v204 = vand.u32 %v203, 4294901760
    %v205 = vsub.f32 %v203, %v204
    %v206 = vand.u32 %v205, 4294901760
    %207 = vmatpush.msra.mxu0 %v206
    %v208 = vand.u32 %v93, 4294901760
    %v209 = vsub.f32 %v93, %v208
    %v210 = vand.u32 %v209, 4294901760
    %v211 = vsub.f32 %v209, %v210
    %v212 = vand.u32 %v211, 4294901760
    %213 = vmatpush.msra.mxu0 %v212
    %v214 = vand.u32 %v91, 4294901760
    %v215 = vsub.f32 %v91, %v214
    %v216 = vand.u32 %v215, 4294901760
    %v217 = vsub.f32 %v215, %v216
    %v218 = vand.u32 %v217, 4294901760
    %219 = vmatpush.msra.mxu0 %v218
    %v220 = vand.u32 %v89, 4294901760
    %v221 = vsub.f32 %v89, %v220
    %v222 = vand.u32 %v221, 4294901760
    %v223 = vsub.f32 %v221, %v222
    %v224 = vand.u32 %v223, 4294901760
    %225 = vmatpush.msra.mxu0 %v224
    %v226 = vand.u32 %v87, 4294901760
    %v227 = vsub.f32 %v87, %v226
    %v228 = vand.u32 %v227, 4294901760
    %v229 = vsub.f32 %v227, %v228
    %v230 = vand.u32 %v229, 4294901760
    %231 = vmatpush.msra.mxu0 %v230
    %v232 = vand.u32 %v85, 4294901760
    %v233 = vsub.f32 %v85, %v232
    %v234 = vand.u32 %v233, 4294901760
    %v235 = vsub.f32 %v233, %v234
    %v236 = vand.u32 %v235, 4294901760
    %237 = vmatpush.msra.mxu0 %v236
    %v238 = vand.u32 %v83, 4294901760
    %v239 = vsub.f32 %v83, %v238
    %v240 = vand.u32 %v239, 4294901760
    %v241 = vsub.f32 %v239, %v240
    %v242 = vand.u32 %v241, 4294901760
    %243 = vmatpush.msra.mxu0 %v242
    %v244 = vand.u32 %v81, 4294901760
    %v245 = vsub.f32 %v81, %v244
    %v246 = vand.u32 %v245, 4294901760
    %v247 = vsub.f32 %v245, %v246
    %v248 = vand.u32 %v247, 4294901760
    %249 = vmatpush.msra.mxu0 %v248
    %v250 = vand.u32 %v80, 4294901760
    %251 = vmatmul.f32.gmra.mxu0 %v250
    %v252 = vpop.f32.mrf.mxu0
    %v253 = vadd.f32 %v152, %v252
    %254 = vdwg.mxu0
    %v255 = vand.u32 %v111, 4294901760
    %v256 = vsub.f32 %v111, %v255
    %257 = vmatpush.msra.mxu0 %v256
    %v258 = vand.u32 %v109, 4294901760
    %v259 = vsub.f32 %v109, %v258
    %260 = vmatpush.msra.mxu0 %v259
    %v261 = vand.u32 %v107, 4294901760
    %v262 = vsub.f32 %v107, %v261
    %263 = vmatpush.msra.mxu0 %v262
    %v264 = vand.u32 %v105, 4294901760
    %v265 = vsub.f32 %v105, %v264
    %266 = vmatpush.msra.mxu0 %v265
    %v267 = vand.u32 %v103, 4294901760
    %v268 = vsub.f32 %v103, %v267
    %269 = vmatpush.msra.mxu0 %v268
    %v270 = vand.u32 %v101, 4294901760
    %v271 = vsub.f32 %v101, %v270
    %272 = vmatpush.msra.mxu0 %v271
    %v273 = vand.u32 %v99, 4294901760
    %v274 = vsub.f32 %v99, %v273
    %275 = vmatpush.msra.mxu0 %v274
    %v276 = vand.u32 %v97, 4294901760
    %v277 = vsub.f32 %v97, %v276
    %278 = vmatpush.msra.mxu0 %v277
    %v279 = vand.u32 %v95, 4294901760
    %v280 = vsub.f32 %v95, %v279
    %281 = vmatpush.msra.mxu0 %v280
    %v282 = vand.u32 %v93, 4294901760
    %v283 = vsub.f32 %v93, %v282
    %284 = vmatpush.msra.mxu0 %v283
    %v285 = vand.u32 %v91, 4294901760
    %v286 = vsub.f32 %v91, %v285
    %287 = vmatpush.msra.mxu0 %v286
    %v288 = vand.u32 %v89, 4294901760
    %v289 = vsub.f32 %v89, %v288
    %290 = vmatpush.msra.mxu0 %v289
    %v291 = vand.u32 %v87, 4294901760
    %v292 = vsub.f32 %v87, %v291
    %293 = vmatpush.msra.mxu0 %v292
    %v294 = vand.u32 %v85, 4294901760
    %v295 = vsub.f32 %v85, %v294
    %296 = vmatpush.msra.mxu0 %v295
    %v297 = vand.u32 %v83, 4294901760
    %v298 = vsub.f32 %v83, %v297
    %299 = vmatpush.msra.mxu0 %v298
    %v300 = vand.u32 %v81, 4294901760
    %v301 = vsub.f32 %v81, %v300
    %302 = vmatpush.msra.mxu0 %v301
    %v303 = vand.u32 %v80, 4294901760
    %v304 = vsub.f32 %v80, %v303
    %305 = vmatmul.f32.gmra.mxu0 %v304
    %v306 = vpop.f32.mrf.mxu0
    %v307 = vadd.f32 %v253, %v306
    %308 = vdwg.mxu0
    %v309 = vand.u32 %v111, 4294901760
    %310 = vmatpush.msra.mxu0 %v309
    %v311 = vand.u32 %v109, 4294901760
    %312 = vmatpush.msra.mxu0 %v311
    %v313 = vand.u32 %v107, 4294901760
    %314 = vmatpush.msra.mxu0 %v313
    %v315 = vand.u32 %v105, 4294901760
    %316 = vmatpush.msra.mxu0 %v315
    %v317 = vand.u32 %v103, 4294901760
    %318 = vmatpush.msra.mxu0 %v317
    %v319 = vand.u32 %v101, 4294901760
    %320 = vmatpush.msra.mxu0 %v319
    %v321 = vand.u32 %v99, 4294901760
    %322 = vmatpush.msra.mxu0 %v321
    %v323 = vand.u32 %v97, 4294901760
    %324 = vmatpush.msra.mxu0 %v323
    %v325 = vand.u32 %v95, 4294901760
    %326 = vmatpush.msra.mxu0 %v325
    %v327 = vand.u32 %v93, 4294901760
    %328 = vmatpush.msra.mxu0 %v327
    %v329 = vand.u32 %v91, 4294901760
    %330 = vmatpush.msra.mxu0 %v329
    %v331 = vand.u32 %v89, 4294901760
    %332 = vmatpush.msra.mxu0 %v331
    %v333 = vand.u32 %v87, 4294901760
    %334 = vmatpush.msra.mxu0 %v333
    %v335 = vand.u32 %v85, 4294901760
    %336 = vmatpush.msra.mxu0 %v335
    %v337 = vand.u32 %v83, 4294901760
    %338 = vmatpush.msra.mxu0 %v337
    %v339 = vand.u32 %v81, 4294901760
    %340 = vmatpush.msra.mxu0 %v339
    %v341 = vand.u32 %v80, 4294901760
    %v342 = vsub.f32 %v80, %v341
    %v343 = vand.u32 %v342, 4294901760
    %344 = vmatmul.f32.gmra.mxu0 %v343
    %v345 = vpop.f32.mrf.mxu0
    %v346 = vadd.f32 %v307, %v345
    %347 = vdwg.mxu0
    %v348 = vand.u32 %v111, 4294901760
    %v349 = vsub.f32 %v111, %v348
    %v350 = vand.u32 %v349, 4294901760
    %351 = vmatpush.msra.mxu0 %v350
    %v352 = vand.u32 %v109, 4294901760
    %v353 = vsub.f32 %v109, %v352
    %v354 = vand.u32 %v353, 4294901760
    %355 = vmatpush.msra.mxu0 %v354
    %v356 = vand.u32 %v107, 4294901760
    %v357 = vsub.f32 %v107, %v356
    %v358 = vand.u32 %v357, 4294901760
    %359 = vmatpush.msra.mxu0 %v358
    %v360 = vand.u32 %v105, 4294901760
    %v361 = vsub.f32 %v105, %v360
    %v362 = vand.u32 %v361, 4294901760
    %363 = vmatpush.msra.mxu0 %v362
    %v364 = vand.u32 %v103, 4294901760
    %v365 = vsub.f32 %v103, %v364
    %v366 = vand.u32 %v365, 4294901760
    %367 = vmatpush.msra.mxu0 %v366
    %v368 = vand.u32 %v101, 4294901760
    %v369 = vsub.f32 %v101, %v368
    %v370 = vand.u32 %v369, 4294901760
    %371 = vmatpush.msra.mxu0 %v370
    %v372 = vand.u32 %v99, 4294901760
    %v373 = vsub.f32 %v99, %v372
    %v374 = vand.u32 %v373, 4294901760
    %375 = vmatpush.msra.mxu0 %v374
    %v376 = vand.u32 %v97, 4294901760
    %v377 = vsub.f32 %v97, %v376
    %v378 = vand.u32 %v377, 4294901760
    %379 = vmatpush.msra.mxu0 %v378
    %v380 = vand.u32 %v95, 4294901760
    %v381 = vsub.f32 %v95, %v380
    %v382 = vand.u32 %v381, 4294901760
    %383 = vmatpush.msra.mxu0 %v382
    %v384 = vand.u32 %v93, 4294901760
    %v385 = vsub.f32 %v93, %v384
    %v386 = vand.u32 %v385, 4294901760
    %387 = vmatpush.msra.mxu0 %v386
    %v388 = vand.u32 %v91, 4294901760
    %v389 = vsub.f32 %v91, %v388
    %v390 = vand.u32 %v389, 4294901760
    %391 = vmatpush.msra.mxu0 %v390
    %v392 = vand.u32 %v89, 4294901760
    %v393 = vsub.f32 %v89, %v392
    %v394 = vand.u32 %v393, 4294901760
    %395 = vmatpush.msra.mxu0 %v394
    %v396 = vand.u32 %v87, 4294901760
    %v397 = vsub.f32 %v87, %v396
    %v398 = vand.u32 %v397, 4294901760
    %399 = vmatpush.msra.mxu0 %v398
    %v400 = vand.u32 %v85, 4294901760
    %v401 = vsub.f32 %v85, %v400
    %v402 = vand.u32 %v401, 4294901760
    %403 = vmatpush.msra.mxu0 %v402
    %v404 = vand.u32 %v83, 4294901760
    %v405 = vsub.f32 %v83, %v404
    %v406 = vand.u32 %v405, 4294901760
    %407 = vmatpush.msra.mxu0 %v406
    %v408 = vand.u32 %v81, 4294901760
    %v409 = vsub.f32 %v81, %v408
    %v410 = vand.u32 %v409, 4294901760
    %411 = vmatpush.msra.mxu0 %v410
    %v412 = vand.u32 %v80, 4294901760
    %413 = vmatmul.f32.gmra.mxu0 %v412
    %v414 = vpop.f32.mrf.mxu0
    %v415 = vadd.f32 %v346, %v414
    %416 = vdwg.mxu0
    %v417 = vand.u32 %v111, 4294901760
    %418 = vmatpush.msra.mxu0 %v417
    %v419 = vand.u32 %v109, 4294901760
    %420 = vmatpush.msra.mxu0 %v419
    %v421 = vand.u32 %v107, 4294901760
    %422 = vmatpush.msra.mxu0 %v421
    %v423 = vand.u32 %v105, 4294901760
    %424 = vmatpush.msra.mxu0 %v423
    %v425 = vand.u32 %v103, 4294901760
    %426 = vmatpush.msra.mxu0 %v425
    %v427 = vand.u32 %v101, 4294901760
    %428 = vmatpush.msra.mxu0 %v427
    %v429 = vand.u32 %v99, 4294901760
    %430 = vmatpush.msra.mxu0 %v429
    %v431 = vand.u32 %v97, 4294901760
    %432 = vmatpush.msra.mxu0 %v431
    %v433 = vand.u32 %v95, 4294901760
    %434 = vmatpush.msra.mxu0 %v433
    %v435 = vand.u32 %v93, 4294901760
    %436 = vmatpush.msra.mxu0 %v435
    %v437 = vand.u32 %v91, 4294901760
    %438 = vmatpush.msra.mxu0 %v437
    %v439 = vand.u32 %v89, 4294901760
    %440 = vmatpush.msra.mxu0 %v439
    %v441 = vand.u32 %v87, 4294901760
    %442 = vmatpush.msra.mxu0 %v441
    %v443 = vand.u32 %v85, 4294901760
    %444 = vmatpush.msra.mxu0 %v443
    %v445 = vand.u32 %v83, 4294901760
    %446 = vmatpush.msra.mxu0 %v445
    %v447 = vand.u32 %v81, 4294901760
    %448 = vmatpush.msra.mxu0 %v447
    %v449 = vand.u32 %v80, 4294901760
    %450 = vmatmul.f32.gmra.mxu0 %v449
    %v451 = vpop.f32.mrf.mxu0
    %v452 = vadd.f32 %v415, %v451
    %453 = vdwg.mxu0
    %v454 = vand.u32 %v112, 4294901760
    %455 = vmatpush.msra.mxu0 %v454
    %v456 = vand.u32 %v110, 4294901760
    %457 = vmatpush.msra.mxu0 %v456
    %v458 = vand.u32 %v108, 4294901760
    %459 = vmatpush.msra.mxu0 %v458
    %v460 = vand.u32 %v106, 4294901760
    %461 = vmatpush.msra.mxu0 %v460
    %v462 = vand.u32 %v104, 4294901760
    %463 = vmatpush.msra.mxu0 %v462
    %v464 = vand.u32 %v102, 4294901760
    %465 = vmatpush.msra.mxu0 %v464
    %v466 = vand.u32 %v100, 4294901760
    %467 = vmatpush.msra.mxu0 %v466
    %v468 = vand.u32 %v98, 4294901760
    %469 = vmatpush.msra.mxu0 %v468
    %v470 = vand.u32 %v96, 4294901760
    %471 = vmatpush.msra.mxu0 %v470
    %v472 = vand.u32 %v94, 4294901760
    %473 = vmatpush.msra.mxu0 %v472
    %v474 = vand.u32 %v92, 4294901760
    %475 = vmatpush.msra.mxu0 %v474
    %v476 = vand.u32 %v90, 4294901760
    %477 = vmatpush.msra.mxu0 %v476
    %v478 = vand.u32 %v88, 4294901760
    %479 = vmatpush.msra.mxu0 %v478
    %v480 = vand.u32 %v86, 4294901760
    %481 = vmatpush.msra.mxu0 %v480
    %v482 = vand.u32 %v84, 4294901760
    %483 = vmatpush.msra.mxu0 %v482
    %v484 = vand.u32 %v82, 4294901760
    %485 = vmatpush.msra.mxu0 %v484
    %v486 = vand.u32 %v80, 4294901760
    %v487 = vsub.f32 %v80, %v486
    %v488 = vand.u32 %v487, 4294901760
    %v489 = vsub.f32 %v487, %v488
    %v490 = vand.u32 %v489, 4294901760
    %491 = vmatmul.f32.gmra.mxu0 %v490
    %v492 = vpop.f32.mrf.mxu0
    %v493 = vadd.f32 0.0, %v492
    %494 = vdwg.mxu0
    %v495 = vand.u32 %v112, 4294901760
    %v496 = vsub.f32 %v112, %v495
    %v497 = vand.u32 %v496, 4294901760
    %v498 = vsub.f32 %v496, %v497
    %v499 = vand.u32 %v498, 4294901760
    %500 = vmatpush.msra.mxu0 %v499
    %v501 = vand.u32 %v110, 4294901760
    %v502 = vsub.f32 %v110, %v501
    %v503 = vand.u32 %v502, 4294901760
    %v504 = vsub.f32 %v502, %v503
    %v505 = vand.u32 %v504, 4294901760
    %506 = vmatpush.msra.mxu0 %v505
    %v507 = vand.u32 %v108, 4294901760
    %v508 = vsub.f32 %v108, %v507
    %v509 = vand.u32 %v508, 4294901760
    %v510 = vsub.f32 %v508, %v509
    %v511 = vand.u32 %v510, 4294901760
    %512 = vmatpush.msra.mxu0 %v511
    %v513 = vand.u32 %v106, 4294901760
    %v514 = vsub.f32 %v106, %v513
    %v515 = vand.u32 %v514, 4294901760
    %v516 = vsub.f32 %v514, %v515
    %v517 = vand.u32 %v516, 4294901760
    %518 = vmatpush.msra.mxu0 %v517
    %v519 = vand.u32 %v104, 4294901760
    %v520 = vsub.f32 %v104, %v519
    %v521 = vand.u32 %v520, 4294901760
    %v522 = vsub.f32 %v520, %v521
    %v523 = vand.u32 %v522, 4294901760
    %524 = vmatpush.msra.mxu0 %v523
    %v525 = vand.u32 %v102, 4294901760
    %v526 = vsub.f32 %v102, %v525
    %v527 = vand.u32 %v526, 4294901760
    %v528 = vsub.f32 %v526, %v527
    %v529 = vand.u32 %v528, 4294901760
    %530 = vmatpush.msra.mxu0 %v529
    %v531 = vand.u32 %v100, 4294901760
    %v532 = vsub.f32 %v100, %v531
    %v533 = vand.u32 %v532, 4294901760
    %v534 = vsub.f32 %v532, %v533
    %v535 = vand.u32 %v534, 4294901760
    %536 = vmatpush.msra.mxu0 %v535
    %v537 = vand.u32 %v98, 4294901760
    %v538 = vsub.f32 %v98, %v537
    %v539 = vand.u32 %v538, 4294901760
    %v540 = vsub.f32 %v538, %v539
    %v541 = vand.u32 %v540, 4294901760
    %542 = vmatpush.msra.mxu0 %v541
    %v543 = vand.u32 %v96, 4294901760
    %v544 = vsub.f32 %v96, %v543
    %v545 = vand.u32 %v544, 4294901760
    %v546 = vsub.f32 %v544, %v545
    %v547 = vand.u32 %v546, 4294901760
    %548 = vmatpush.msra.mxu0 %v547
    %v549 = vand.u32 %v94, 4294901760
    %v550 = vsub.f32 %v94, %v549
    %v551 = vand.u32 %v550, 4294901760
    %v552 = vsub.f32 %v550, %v551
    %v553 = vand.u32 %v552, 4294901760
    %554 = vmatpush.msra.mxu0 %v553
    %v555 = vand.u32 %v92, 4294901760
    %v556 = vsub.f32 %v92, %v555
    %v557 = vand.u32 %v556, 4294901760
    %v558 = vsub.f32 %v556, %v557
    %v559 = vand.u32 %v558, 4294901760
    %560 = vmatpush.msra.mxu0 %v559
    %v561 = vand.u32 %v90, 4294901760
    %v562 = vsub.f32 %v90, %v561
    %v563 = vand.u32 %v562, 4294901760
    %v564 = vsub.f32 %v562, %v563
    %v565 = vand.u32 %v564, 4294901760
    %566 = vmatpush.msra.mxu0 %v565
    %v567 = vand.u32 %v88, 4294901760
    %v568 = vsub.f32 %v88, %v567
    %v569 = vand.u32 %v568, 4294901760
    %v570 = vsub.f32 %v568, %v569
    %v571 = vand.u32 %v570, 4294901760
    %572 = vmatpush.msra.mxu0 %v571
    %v573 = vand.u32 %v86, 4294901760
    %v574 = vsub.f32 %v86, %v573
    %v575 = vand.u32 %v574, 4294901760
    %v576 = vsub.f32 %v574, %v575
    %v577 = vand.u32 %v576, 4294901760
    %578 = vmatpush.msra.mxu0 %v577
    %v579 = vand.u32 %v84, 4294901760
    %v580 = vsub.f32 %v84, %v579
    %v581 = vand.u32 %v580, 4294901760
    %v582 = vsub.f32 %v580, %v581
    %v583 = vand.u32 %v582, 4294901760
    %584 = vmatpush.msra.mxu0 %v583
    %v585 = vand.u32 %v82, 4294901760
    %v586 = vsub.f32 %v82, %v585
    %v587 = vand.u32 %v586, 4294901760
    %v588 = vsub.f32 %v586, %v587
    %v589 = vand.u32 %v588, 4294901760
    %590 = vmatpush.msra.mxu0 %v589
    %v591 = vand.u32 %v80, 4294901760
    %592 = vmatmul.f32.gmra.mxu0 %v591
    %v593 = vpop.f32.mrf.mxu0
    %v594 = vadd.f32 %v493, %v593
    %595 = vdwg.mxu0
    %v596 = vand.u32 %v112, 4294901760
    %v597 = vsub.f32 %v112, %v596
    %598 = vmatpush.msra.mxu0 %v597
    %v599 = vand.u32 %v110, 4294901760
    %v600 = vsub.f32 %v110, %v599
    %601 = vmatpush.msra.mxu0 %v600
    %v602 = vand.u32 %v108, 4294901760
    %v603 = vsub.f32 %v108, %v602
    %604 = vmatpush.msra.mxu0 %v603
    %v605 = vand.u32 %v106, 4294901760
    %v606 = vsub.f32 %v106, %v605
    %607 = vmatpush.msra.mxu0 %v606
    %v608 = vand.u32 %v104, 4294901760
    %v609 = vsub.f32 %v104, %v608
    %610 = vmatpush.msra.mxu0 %v609
    %v611 = vand.u32 %v102, 4294901760
    %v612 = vsub.f32 %v102, %v611
    %613 = vmatpush.msra.mxu0 %v612
    %v614 = vand.u32 %v100, 4294901760
    %v615 = vsub.f32 %v100, %v614
    %616 = vmatpush.msra.mxu0 %v615
    %v617 = vand.u32 %v98, 4294901760
    %v618 = vsub.f32 %v98, %v617
    %619 = vmatpush.msra.mxu0 %v618
    %v620 = vand.u32 %v96, 4294901760
    %v621 = vsub.f32 %v96, %v620
    %622 = vmatpush.msra.mxu0 %v621
    %v623 = vand.u32 %v94, 4294901760
    %v624 = vsub.f32 %v94, %v623
    %625 = vmatpush.msra.mxu0 %v624
    %v626 = vand.u32 %v92, 4294901760
    %v627 = vsub.f32 %v92, %v626
    %628 = vmatpush.msra.mxu0 %v627
    %v629 = vand.u32 %v90, 4294901760
    %v630 = vsub.f32 %v90, %v629
    %631 = vmatpush.msra.mxu0 %v630
    %v632 = vand.u32 %v88, 4294901760
    %v633 = vsub.f32 %v88, %v632
    %634 = vmatpush.msra.mxu0 %v633
    %v635 = vand.u32 %v86, 4294901760
    %v636 = vsub.f32 %v86, %v635
    %637 = vmatpush.msra.mxu0 %v636
    %v638 = vand.u32 %v84, 4294901760
    %v639 = vsub.f32 %v84, %v638
    %640 = vmatpush.msra.mxu0 %v639
    %v641 = vand.u32 %v82, 4294901760
    %v642 = vsub.f32 %v82, %v641
    %643 = vmatpush.msra.mxu0 %v642
    %v644 = vand.u32 %v80, 4294901760
    %v645 = vsub.f32 %v80, %v644
    %646 = vmatmul.f32.gmra.mxu0 %v645
    %v647 = vpop.f32.mrf.mxu0
    %v648 = vadd.f32 %v594, %v647
    %649 = vdwg.mxu0
    %v650 = vand.u32 %v112, 4294901760
    %651 = vmatpush.msra.mxu0 %v650
    %v652 = vand.u32 %v110, 4294901760
    %653 = vmatpush.msra.mxu0 %v652
    %v654 = vand.u32 %v108, 4294901760
    %655 = vmatpush.msra.mxu0 %v654
    %v656 = vand.u32 %v106, 4294901760
    %657 = vmatpush.msra.mxu0 %v656
    %v658 = vand.u32 %v104, 4294901760
    %659 = vmatpush.msra.mxu0 %v658
    %v660 = vand.u32 %v102, 4294901760
    %661 = vmatpush.msra.mxu0 %v660
    %v662 = vand.u32 %v100, 4294901760
    %663 = vmatpush.msra.mxu0 %v662
    %v664 = vand.u32 %v98, 4294901760
    %665 = vmatpush.msra.mxu0 %v664
    %v666 = vand.u32 %v96, 4294901760
    %667 = vmatpush.msra.mxu0 %v666
    %v668 = vand.u32 %v94, 4294901760
    %669 = vmatpush.msra.mxu0 %v668
    %v670 = vand.u32 %v92, 4294901760
    %671 = vmatpush.msra.mxu0 %v670
    %v672 = vand.u32 %v90, 4294901760
    %673 = vmatpush.msra.mxu0 %v672
    %v674 = vand.u32 %v88, 4294901760
    %675 = vmatpush.msra.mxu0 %v674
    %v676 = vand.u32 %v86, 4294901760
    %677 = vmatpush.msra.mxu0 %v676
    %v678 = vand.u32 %v84, 4294901760
    %679 = vmatpush.msra.mxu0 %v678
    %v680 = vand.u32 %v82, 4294901760
    %681 = vmatpush.msra.mxu0 %v680
    %v682 = vand.u32 %v80, 4294901760
    %v683 = vsub.f32 %v80, %v682
    %v684 = vand.u32 %v683, 4294901760
    %685 = vmatmul.f32.gmra.mxu0 %v684
    %v686 = vpop.f32.mrf.mxu0
    %v687 = vadd.f32 %v648, %v686
    %688 = vdwg.mxu0
    %v689 = vand.u32 %v112, 4294901760
    %v690 = vsub.f32 %v112, %v689
    %v691 = vand.u32 %v690, 4294901760
    %692 = vmatpush.msra.mxu0 %v691
    %v693 = vand.u32 %v110, 4294901760
    %v694 = vsub.f32 %v110, %v693
    %v695 = vand.u32 %v694, 4294901760
    %696 = vmatpush.msra.mxu0 %v695
    %v697 = vand.u32 %v108, 4294901760
    %v698 = vsub.f32 %v108, %v697
    %v699 = vand.u32 %v698, 4294901760
    %700 = vmatpush.msra.mxu0 %v699
    %v701 = vand.u32 %v106, 4294901760
    %v702 = vsub.f32 %v106, %v701
    %v703 = vand.u32 %v702, 4294901760
    %704 = vmatpush.msra.mxu0 %v703
    %v705 = vand.u32 %v104, 4294901760
    %v706 = vsub.f32 %v104, %v705
    %v707 = vand.u32 %v706, 4294901760
    %708 = vmatpush.msra.mxu0 %v707
    %v709 = vand.u32 %v102, 4294901760
    %v710 = vsub.f32 %v102, %v709
    %v711 = vand.u32 %v710, 4294901760
    %712 = vmatpush.msra.mxu0 %v711
    %v713 = vand.u32 %v100, 4294901760
    %v714 = vsub.f32 %v100, %v713
    %v715 = vand.u32 %v714, 4294901760
    %716 = vmatpush.msra.mxu0 %v715
    %v717 = vand.u32 %v98, 4294901760
    %v718 = vsub.f32 %v98, %v717
    %v719 = vand.u32 %v718, 4294901760
    %720 = vmatpush.msra.mxu0 %v719
    %v721 = vand.u32 %v96, 4294901760
    %v722 = vsub.f32 %v96, %v721
    %v723 = vand.u32 %v722, 4294901760
    %724 = vmatpush.msra.mxu0 %v723
    %v725 = vand.u32 %v94, 4294901760
    %v726 = vsub.f32 %v94, %v725
    %v727 = vand.u32 %v726, 4294901760
    %728 = vmatpush.msra.mxu0 %v727
    %v729 = vand.u32 %v92, 4294901760
    %v730 = vsub.f32 %v92, %v729
    %v731 = vand.u32 %v730, 4294901760
    %732 = vmatpush.msra.mxu0 %v731
    %v733 = vand.u32 %v90, 4294901760
    %v734 = vsub.f32 %v90, %v733
    %v735 = vand.u32 %v734, 4294901760
    %736 = vmatpush.msra.mxu0 %v735
    %v737 = vand.u32 %v88, 4294901760
    %v738 = vsub.f32 %v88, %v737
    %v739 = vand.u32 %v738, 4294901760
    %740 = vmatpush.msra.mxu0 %v739
    %v741 = vand.u32 %v86, 4294901760
    %v742 = vsub.f32 %v86, %v741
    %v743 = vand.u32 %v742, 4294901760
    %744 = vmatpush.msra.mxu0 %v743
    %v745 = vand.u32 %v84, 4294901760
    %v746 = vsub.f32 %v84, %v745
    %v747 = vand.u32 %v746, 4294901760
    %748 = vmatpush.msra.mxu0 %v747
    %v749 = vand.u32 %v82, 4294901760
    %v750 = vsub.f32 %v82, %v749
    %v751 = vand.u32 %v750, 4294901760
    %752 = vmatpush.msra.mxu0 %v751
    %v753 = vand.u32 %v80, 4294901760
    %754 = vmatmul.f32.gmra.mxu0 %v753
    %v755 = vpop.f32.mrf.mxu0
    %v756 = vadd.f32 %v687, %v755
    %757 = vdwg.mxu0
    %v758 = vand.u32 %v112, 4294901760
    %759 = vmatpush.msra.mxu0 %v758
    %v760 = vand.u32 %v110, 4294901760
    %761 = vmatpush.msra.mxu0 %v760
    %v762 = vand.u32 %v108, 4294901760
    %763 = vmatpush.msra.mxu0 %v762
    %v764 = vand.u32 %v106, 4294901760
    %765 = vmatpush.msra.mxu0 %v764
    %v766 = vand.u32 %v104, 4294901760
    %767 = vmatpush.msra.mxu0 %v766
    %v768 = vand.u32 %v102, 4294901760
    %769 = vmatpush.msra.mxu0 %v768
    %v770 = vand.u32 %v100, 4294901760
    %771 = vmatpush.msra.mxu0 %v770
    %v772 = vand.u32 %v98, 4294901760
    %773 = vmatpush.msra.mxu0 %v772
    %v774 = vand.u32 %v96, 4294901760
    %775 = vmatpush.msra.mxu0 %v774
    %v776 = vand.u32 %v94, 4294901760
    %777 = vmatpush.msra.mxu0 %v776
    %v778 = vand.u32 %v92, 4294901760
    %779 = vmatpush.msra.mxu0 %v778
    %v780 = vand.u32 %v90, 4294901760
    %781 = vmatpush.msra.mxu0 %v780
    %v782 = vand.u32 %v88, 4294901760
    %783 = vmatpush.msra.mxu0 %v782
    %v784 = vand.u32 %v86, 4294901760
    %785 = vmatpush.msra.mxu0 %v784
    %v786 = vand.u32 %v84, 4294901760
    %787 = vmatpush.msra.mxu0 %v786
    %v788 = vand.u32 %v82, 4294901760
    %789 = vmatpush.msra.mxu0 %v788
    %v790 = vand.u32 %v80, 4294901760
    %791 = vmatmul.f32.gmra.mxu0 %v790
    %v792 = vpop.f32.mrf.mxu0
    %v793 = vadd.f32 %v756, %v792
    %794 = vdwg.mxu0
    %v795 = vmul.f32 %v452, %v452
    %v796 = vmul.f32 %v793, %v793
    %v797 = vld [vmem:[#allocation7] sm:$0xff]
    %v798 = vld [vmem:[#allocation7 + $0x8] sm:$0xff]
    %v799 = vld [vmem:[#allocation7 + $0x10] sm:$0xff]
    %v800 = vld [vmem:[#allocation7 + $0x18] sm:$0xff]
    %v801 = vld [vmem:[#allocation7 + $0x20] sm:$0xff]
    %v802 = vld [vmem:[#allocation7 + $0x28] sm:$0xff]
    %v803 = vld [vmem:[#allocation7 + $0x30] sm:$0xff]
    %v804 = vld [vmem:[#allocation7 + $0x38] sm:$0xff]
    %v805 = vld [vmem:[#allocation7 + $0x40] sm:$0xff]
    %v806 = vld [vmem:[#allocation7 + $0x48] sm:$0xff]
    %v807 = vld [vmem:[#allocation7 + $0x50] sm:$0xff]
    %v808 = vld [vmem:[#allocation7 + $0x58] sm:$0xff]
    %v809 = vld [vmem:[#allocation7 + $0x60] sm:$0xff]
    %v810 = vld [vmem:[#allocation7 + $0x68] sm:$0xff]
    %v811 = vld [vmem:[#allocation7 + $0x70] sm:$0xff]
    %v812 = vld [vmem:[#allocation7 + $0x78] sm:$0xff]
    %v813 = vld [vmem:[#allocation7 + $0x80] sm:$0xff]
    %v814 = vld [vmem:[#allocation7 + $0x88] sm:$0xff]
    %v815 = vld [vmem:[#allocation7 + $0x90] sm:$0xff]
    %v816 = vld [vmem:[#allocation7 + $0x98] sm:$0xff]
    %v817 = vld [vmem:[#allocation7 + $0xa0] sm:$0xff]
    %v818 = vld [vmem:[#allocation7 + $0xa8] sm:$0xff]
    %v819 = vld [vmem:[#allocation7 + $0xb0] sm:$0xff]
    %v820 = vld [vmem:[#allocation7 + $0xb8] sm:$0xff]
    %v821 = vld [vmem:[#allocation7 + $0xc0] sm:$0xff]
    %v822 = vld [vmem:[#allocation7 + $0xc8] sm:$0xff]
    %v823 = vld [vmem:[#allocation7 + $0xd0] sm:$0xff]
    %v824 = vld [vmem:[#allocation7 + $0xd8] sm:$0xff]
    %v825 = vld [vmem:[#allocation7 + $0xe0] sm:$0xff]
    %v826 = vld [vmem:[#allocation7 + $0xe8] sm:$0xff]
    %v827 = vld [vmem:[#allocation7 + $0xf0] sm:$0xff]
    %v828 = vld [vmem:[#allocation7 + $0xf8] sm:$0xff]
    %v829 = vld [vmem:[#allocation7 + $0x100] sm:$0xff]
    %v830 = vld [vmem:[#allocation7 + $0x108] sm:$0xff]
    %v831 = vld [vmem:[#allocation7 + $0x110] sm:$0xff]
    %v832 = vld [vmem:[#allocation7 + $0x118] sm:$0xff]
    %v833 = vld [vmem:[#allocation7 + $0x120] sm:$0xff]
    %v834 = vld [vmem:[#allocation7 + $0x128] sm:$0xff]
    %v835 = vld [vmem:[#allocation7 + $0x130] sm:$0xff]
    %v836 = vld [vmem:[#allocation7 + $0x138] sm:$0xff]
    %v837 = vld [vmem:[#allocation7 + $0x140] sm:$0xff]
    %v838 = vld [vmem:[#allocation7 + $0x148] sm:$0xff]
    %v839 = vld [vmem:[#allocation7 + $0x150] sm:$0xff]
    %v840 = vld [vmem:[#allocation7 + $0x158] sm:$0xff]
    %v841 = vld [vmem:[#allocation7 + $0x160] sm:$0xff]
    %v842 = vld [vmem:[#allocation7 + $0x168] sm:$0xff]
    %v843 = vld [vmem:[#allocation7 + $0x170] sm:$0xff]
    %v844 = vld [vmem:[#allocation7 + $0x178] sm:$0xff]
    %v845 = vld [vmem:[#allocation7 + $0x180] sm:$0xff]
    %v846 = vld [vmem:[#allocation7 + $0x188] sm:$0xff]
    %v847 = vld [vmem:[#allocation7 + $0x190] sm:$0xff]
    %v848 = vld [vmem:[#allocation7 + $0x198] sm:$0xff]
    %v849 = vld [vmem:[#allocation7 + $0x1a0] sm:$0xff]
    %v850 = vld [vmem:[#allocation7 + $0x1a8] sm:$0xff]
    %v851 = vld [vmem:[#allocation7 + $0x1b0] sm:$0xff]
    %v852 = vld [vmem:[#allocation7 + $0x1b8] sm:$0xff]
    %v853 = vld [vmem:[#allocation7 + $0x1c0] sm:$0xff]
    %v854 = vld [vmem:[#allocation7 + $0x1c8] sm:$0xff]
    %v855 = vld [vmem:[#allocation7 + $0x1d0] sm:$0xff]
    %v856 = vld [vmem:[#allocation7 + $0x1d8] sm:$0xff]
    %v857 = vld [vmem:[#allocation7 + $0x1e0] sm:$0xff]
    %v858 = vld [vmem:[#allocation7 + $0x1e8] sm:$0xff]
    %v859 = vld [vmem:[#allocation7 + $0x1f0] sm:$0xff]
    %v860 = vld [vmem:[#allocation7 + $0x1f8] sm:$0xff]
    %v861 = vand.u32 %v827, 4294901760
    %862 = vmatpush.msra.mxu0 %v861
    %v863 = vand.u32 %v825, 4294901760
    %864 = vmatpush.msra.mxu0 %v863
    %v865 = vand.u32 %v823, 4294901760
    %866 = vmatpush.msra.mxu0 %v865
    %v867 = vand.u32 %v821, 4294901760
    %868 = vmatpush.msra.mxu0 %v867
    %v869 = vand.u32 %v819, 4294901760
    %870 = vmatpush.msra.mxu0 %v869
    %v871 = vand.u32 %v817, 4294901760
    %872 = vmatpush.msra.mxu0 %v871
    %v873 = vand.u32 %v815, 4294901760
    %874 = vmatpush.msra.mxu0 %v873
    %v875 = vand.u32 %v813, 4294901760
    %876 = vmatpush.msra.mxu0 %v875
    %v877 = vand.u32 %v811, 4294901760
    %878 = vmatpush.msra.mxu0 %v877
    %v879 = vand.u32 %v809, 4294901760
    %880 = vmatpush.msra.mxu0 %v879
    %v881 = vand.u32 %v807, 4294901760
    %882 = vmatpush.msra.mxu0 %v881
    %v883 = vand.u32 %v805, 4294901760
    %884 = vmatpush.msra.mxu0 %v883
    %v885 = vand.u32 %v803, 4294901760
    %886 = vmatpush.msra.mxu0 %v885
    %v887 = vand.u32 %v801, 4294901760
    %888 = vmatpush.msra.mxu0 %v887
    %v889 = vand.u32 %v799, 4294901760
    %890 = vmatpush.msra.mxu0 %v889
    %v891 = vand.u32 %v797, 4294901760
    %892 = vmatpush.msra.mxu0 %v891
    %v893 = vand.u32 %v795, 4294901760
    %v894 = vsub.f32 %v795, %v893
    %v895 = vand.u32 %v894, 4294901760
    %v896 = vsub.f32 %v894, %v895
    %v897 = vand.u32 %v896, 4294901760
    %898 = vmatmul.f32.gmra.mxu0 %v897
    %v899 = vpop.f32.mrf.mxu0
    %v900 = vadd.f32 1e-05, %v899
    %901 = vdwg.mxu0
    %v902 = vand.u32 %v827, 4294901760
    %v903 = vsub.f32 %v827, %v902
    %v904 = vand.u32 %v903, 4294901760
    %v905 = vsub.f32 %v903, %v904
    %v906 = vand.u32 %v905, 4294901760
    %907 = vmatpush.msra.mxu0 %v906
    %v908 = vand.u32 %v825, 4294901760
    %v909 = vsub.f32 %v825, %v908
    %v910 = vand.u32 %v909, 4294901760
    %v911 = vsub.f32 %v909, %v910
    %v912 = vand.u32 %v911, 4294901760
    %913 = vmatpush.msra.mxu0 %v912
    %v914 = vand.u32 %v823, 4294901760
    %v915 = vsub.f32 %v823, %v914
    %v916 = vand.u32 %v915, 4294901760
    %v917 = vsub.f32 %v915, %v916
    %v918 = vand.u32 %v917, 4294901760
    %919 = vmatpush.msra.mxu0 %v918
    %v920 = vand.u32 %v821, 4294901760
    %v921 = vsub.f32 %v821, %v920
    %v922 = vand.u32 %v921, 4294901760
    %v923 = vsub.f32 %v921, %v922
    %v924 = vand.u32 %v923, 4294901760
    %925 = vmatpush.msra.mxu0 %v924
    %v926 = vand.u32 %v819, 4294901760
    %v927 = vsub.f32 %v819, %v926
    %v928 = vand.u32 %v927, 4294901760
    %v929 = vsub.f32 %v927, %v928
    %v930 = vand.u32 %v929, 4294901760
    %931 = vmatpush.msra.mxu0 %v930
    %v932 = vand.u32 %v817, 4294901760
    %v933 = vsub.f32 %v817, %v932
    %v934 = vand.u32 %v933, 4294901760
    %v935 = vsub.f32 %v933, %v934
    %v936 = vand.u32 %v935, 4294901760
    %937 = vmatpush.msra.mxu0 %v936
    %v938 = vand.u32 %v815, 4294901760
    %v939 = vsub.f32 %v815, %v938
    %v940 = vand.u32 %v939, 4294901760
    %v941 = vsub.f32 %v939, %v940
    %v942 = vand.u32 %v941, 4294901760
    %943 = vmatpush.msra.mxu0 %v942
    %v944 = vand.u32 %v813, 4294901760
    %v945 = vsub.f32 %v813, %v944
    %v946 = vand.u32 %v945, 4294901760
    %v947 = vsub.f32 %v945, %v946
    %v948 = vand.u32 %v947, 4294901760
    %949 = vmatpush.msra.mxu0 %v948
    %v950 = vand.u32 %v811, 4294901760
    %v951 = vsub.f32 %v811, %v950
    %v952 = vand.u32 %v951, 4294901760
    %v953 = vsub.f32 %v951, %v952
    %v954 = vand.u32 %v953, 4294901760
    %955 = vmatpush.msra.mxu0 %v954
    %v956 = vand.u32 %v809, 4294901760
    %v957 = vsub.f32 %v809, %v956
    %v958 = vand.u32 %v957, 4294901760
    %v959 = vsub.f32 %v957, %v958
    %v960 = vand.u32 %v959, 4294901760
    %961 = vmatpush.msra.mxu0 %v960
    %v962 = vand.u32 %v807, 4294901760
    %v963 = vsub.f32 %v807, %v962
    %v964 = vand.u32 %v963, 4294901760
    %v965 = vsub.f32 %v963, %v964
    %v966 = vand.u32 %v965, 4294901760
    %967 = vmatpush.msra.mxu0 %v966
    %v968 = vand.u32 %v805, 4294901760
    %v969 = vsub.f32 %v805, %v968
    %v970 = vand.u32 %v969, 4294901760
    %v971 = vsub.f32 %v969, %v970
    %v972 = vand.u32 %v971, 4294901760
    %973 = vmatpush.msra.mxu0 %v972
    %v974 = vand.u32 %v803, 4294901760
    %v975 = vsub.f32 %v803, %v974
    %v976 = vand.u32 %v975, 4294901760
    %v977 = vsub.f32 %v975, %v976
    %v978 = vand.u32 %v977, 4294901760
    %979 = vmatpush.msra.mxu0 %v978
    %v980 = vand.u32 %v801, 4294901760
    %v981 = vsub.f32 %v801, %v980
    %v982 = vand.u32 %v981, 4294901760
    %v983 = vsub.f32 %v981, %v982
    %v984 = vand.u32 %v983, 4294901760
    %985 = vmatpush.msra.mxu0 %v984
    %v986 = vand.u32 %v799, 4294901760
    %v987 = vsub.f32 %v799, %v986
    %v988 = vand.u32 %v987, 4294901760
    %v989 = vsub.f32 %v987, %v988
    %v990 = vand.u32 %v989, 4294901760
    %991 = vmatpush.msra.mxu0 %v990
    %v992 = vand.u32 %v797, 4294901760
    %v993 = vsub.f32 %v797, %v992
    %v994 = vand.u32 %v993, 4294901760
    %v995 = vsub.f32 %v993, %v994
    %v996 = vand.u32 %v995, 4294901760
    %997 = vmatpush.msra.mxu0 %v996
    %v998 = vand.u32 %v795, 4294901760
    %999 = vmatmul.f32.gmra.mxu0 %v998
    %v1000 = vpop.f32.mrf.mxu0
    %v1001 = vadd.f32 %v900, %v1000
    %1002 = vdwg.mxu0
    %v1003 = vand.u32 %v827, 4294901760
    %v1004 = vsub.f32 %v827, %v1003
    %1005 = vmatpush.msra.mxu0 %v1004
    %v1006 = vand.u32 %v825, 4294901760
    %v1007 = vsub.f32 %v825, %v1006
    %1008 = vmatpush.msra.mxu0 %v1007
    %v1009 = vand.u32 %v823, 4294901760
    %v1010 = vsub.f32 %v823, %v1009
    %1011 = vmatpush.msra.mxu0 %v1010
    %v1012 = vand.u32 %v821, 4294901760
    %v1013 = vsub.f32 %v821, %v1012
    %1014 = vmatpush.msra.mxu0 %v1013
    %v1015 = vand.u32 %v819, 4294901760
    %v1016 = vsub.f32 %v819, %v1015
    %1017 = vmatpush.msra.mxu0 %v1016
    %v1018 = vand.u32 %v817, 4294901760
    %v1019 = vsub.f32 %v817, %v1018
    %1020 = vmatpush.msra.mxu0 %v1019
    %v1021 = vand.u32 %v815, 4294901760
    %v1022 = vsub.f32 %v815, %v1021
    %1023 = vmatpush.msra.mxu0 %v1022
    %v1024 = vand.u32 %v813, 4294901760
    %v1025 = vsub.f32 %v813, %v1024
    %1026 = vmatpush.msra.mxu0 %v1025
    %v1027 = vand.u32 %v811, 4294901760
    %v1028 = vsub.f32 %v811, %v1027
    %1029 = vmatpush.msra.mxu0 %v1028
    %v1030 = vand.u32 %v809, 4294901760
    %v1031 = vsub.f32 %v809, %v1030
    %1032 = vmatpush.msra.mxu0 %v1031
    %v1033 = vand.u32 %v807, 4294901760
    %v1034 = vsub.f32 %v807, %v1033
    %1035 = vmatpush.msra.mxu0 %v1034
    %v1036 = vand.u32 %v805, 4294901760
    %v1037 = vsub.f32 %v805, %v1036
    %1038 = vmatpush.msra.mxu0 %v1037
    %v1039 = vand.u32 %v803, 4294901760
    %v1040 = vsub.f32 %v803, %v1039
    %1041 = vmatpush.msra.mxu0 %v1040
    %v1042 = vand.u32 %v801, 4294901760
    %v1043 = vsub.f32 %v801, %v1042
    %1044 = vmatpush.msra.mxu0 %v1043
    %v1045 = vand.u32 %v799, 4294901760
    %v1046 = vsub.f32 %v799, %v1045
    %1047 = vmatpush.msra.mxu0 %v1046
    %v1048 = vand.u32 %v797, 4294901760
    %v1049 = vsub.f32 %v797, %v1048
    %1050 = vmatpush.msra.mxu0 %v1049
    %v1051 = vand.u32 %v795, 4294901760
    %v1052 = vsub.f32 %v795, %v1051
    %1053 = vmatmul.f32.gmra.mxu0 %v1052
    %v1054 = vpop.f32.mrf.mxu0
    %v1055 = vadd.f32 %v1001, %v1054
    %1056 = vdwg.mxu0
    %v1057 = vand.u32 %v827, 4294901760
    %1058 = vmatpush.msra.mxu0 %v1057
    %v1059 = vand.u32 %v825, 4294901760
    %1060 = vmatpush.msra.mxu0 %v1059
    %v1061 = vand.u32 %v823, 4294901760
    %1062 = vmatpush.msra.mxu0 %v1061
    %v1063 = vand.u32 %v821, 4294901760
    %1064 = vmatpush.msra.mxu0 %v1063
    %v1065 = vand.u32 %v819, 4294901760
    %1066 = vmatpush.msra.mxu0 %v1065
    %v1067 = vand.u32 %v817, 4294901760
    %1068 = vmatpush.msra.mxu0 %v1067
    %v1069 = vand.u32 %v815, 4294901760
    %1070 = vmatpush.msra.mxu0 %v1069
    %v1071 = vand.u32 %v813, 4294901760
    %1072 = vmatpush.msra.mxu0 %v1071
    %v1073 = vand.u32 %v811, 4294901760
    %1074 = vmatpush.msra.mxu0 %v1073
    %v1075 = vand.u32 %v809, 4294901760
    %1076 = vmatpush.msra.mxu0 %v1075
    %v1077 = vand.u32 %v807, 4294901760
    %1078 = vmatpush.msra.mxu0 %v1077
    %v1079 = vand.u32 %v805, 4294901760
    %1080 = vmatpush.msra.mxu0 %v1079
    %v1081 = vand.u32 %v803, 4294901760
    %1082 = vmatpush.msra.mxu0 %v1081
    %v1083 = vand.u32 %v801, 4294901760
    %1084 = vmatpush.msra.mxu0 %v1083
    %v1085 = vand.u32 %v799, 4294901760
    %1086 = vmatpush.msra.mxu0 %v1085
    %v1087 = vand.u32 %v797, 4294901760
    %1088 = vmatpush.msra.mxu0 %v1087
    %v1089 = vand.u32 %v795, 4294901760
    %v1090 = vsub.f32 %v795, %v1089
    %v1091 = vand.u32 %v1090, 4294901760
    %1092 = vmatmul.f32.gmra.mxu0 %v1091
    %v1093 = vpop.f32.mrf.mxu0
    %v1094 = vadd.f32 %v1055, %v1093
    %1095 = vdwg.mxu0
    %v1096 = vand.u32 %v827, 4294901760
    %v1097 = vsub.f32 %v827, %v1096
    %v1098 = vand.u32 %v1097, 4294901760
    %1099 = vmatpush.msra.mxu0 %v1098
    %v1100 = vand.u32 %v825, 4294901760
    %v1101 = vsub.f32 %v825, %v1100
    %v1102 = vand.u32 %v1101, 4294901760
    %1103 = vmatpush.msra.mxu0 %v1102
    %v1104 = vand.u32 %v823, 4294901760
    %v1105 = vsub.f32 %v823, %v1104
    %v1106 = vand.u32 %v1105, 4294901760
    %1107 = vmatpush.msra.mxu0 %v1106
    %v1108 = vand.u32 %v821, 4294901760
    %v1109 = vsub.f32 %v821, %v1108
    %v1110 = vand.u32 %v1109, 4294901760
    %1111 = vmatpush.msra.mxu0 %v1110
    %v1112 = vand.u32 %v819, 4294901760
    %v1113 = vsub.f32 %v819, %v1112
    %v1114 = vand.u32 %v1113, 4294901760
    %1115 = vmatpush.msra.mxu0 %v1114
    %v1116 = vand.u32 %v817, 4294901760
    %v1117 = vsub.f32 %v817, %v1116
    %v1118 = vand.u32 %v1117, 4294901760
    %1119 = vmatpush.msra.mxu0 %v1118
    %v1120 = vand.u32 %v815, 4294901760
    %v1121 = vsub.f32 %v815, %v1120
    %v1122 = vand.u32 %v1121, 4294901760
    %1123 = vmatpush.msra.mxu0 %v1122
    %v1124 = vand.u32 %v813, 4294901760
    %v1125 = vsub.f32 %v813, %v1124
    %v1126 = vand.u32 %v1125, 4294901760
    %1127 = vmatpush.msra.mxu0 %v1126
    %v1128 = vand.u32 %v811, 4294901760
    %v1129 = vsub.f32 %v811, %v1128
    %v1130 = vand.u32 %v1129, 4294901760
    %1131 = vmatpush.msra.mxu0 %v1130
    %v1132 = vand.u32 %v809, 4294901760
    %v1133 = vsub.f32 %v809, %v1132
    %v1134 = vand.u32 %v1133, 4294901760
    %1135 = vmatpush.msra.mxu0 %v1134
    %v1136 = vand.u32 %v807, 4294901760
    %v1137 = vsub.f32 %v807, %v1136
    %v1138 = vand.u32 %v1137, 4294901760
    %1139 = vmatpush.msra.mxu0 %v1138
    %v1140 = vand.u32 %v805, 4294901760
    %v1141 = vsub.f32 %v805, %v1140
    %v1142 = vand.u32 %v1141, 4294901760
    %1143 = vmatpush.msra.mxu0 %v1142
    %v1144 = vand.u32 %v803, 4294901760
    %v1145 = vsub.f32 %v803, %v1144
    %v1146 = vand.u32 %v1145, 4294901760
    %1147 = vmatpush.msra.mxu0 %v1146
    %v1148 = vand.u32 %v801, 4294901760
    %v1149 = vsub.f32 %v801, %v1148
    %v1150 = vand.u32 %v1149, 4294901760
    %1151 = vmatpush.msra.mxu0 %v1150
    %v1152 = vand.u32 %v799, 4294901760
    %v1153 = vsub.f32 %v799, %v1152
    %v1154 = vand.u32 %v1153, 4294901760
    %1155 = vmatpush.msra.mxu0 %v1154
    %v1156 = vand.u32 %v797, 4294901760
    %v1157 = vsub.f32 %v797, %v1156
    %v1158 = vand.u32 %v1157, 4294901760
    %1159 = vmatpush.msra.mxu0 %v1158
    %v1160 = vand.u32 %v795, 4294901760
    %1161 = vmatmul.f32.gmra.mxu0 %v1160
    %v1162 = vpop.f32.mrf.mxu0
    %v1163 = vadd.f32 %v1094, %v1162
    %1164 = vdwg.mxu0
    %v1165 = vand.u32 %v827, 4294901760
    %1166 = vmatpush.msra.mxu0 %v1165
    %v1167 = vand.u32 %v825, 4294901760
    %1168 = vmatpush.msra.mxu0 %v1167
    %v1169 = vand.u32 %v823, 4294901760
    %1170 = vmatpush.msra.mxu0 %v1169
    %v1171 = vand.u32 %v821, 4294901760
    %1172 = vmatpush.msra.mxu0 %v1171
    %v1173 = vand.u32 %v819, 4294901760
    %1174 = vmatpush.msra.mxu0 %v1173
    %v1175 = vand.u32 %v817, 4294901760
    %1176 = vmatpush.msra.mxu0 %v1175
    %v1177 = vand.u32 %v815, 4294901760
    %1178 = vmatpush.msra.mxu0 %v1177
    %v1179 = vand.u32 %v813, 4294901760
    %1180 = vmatpush.msra.mxu0 %v1179
    %v1181 = vand.u32 %v811, 4294901760
    %1182 = vmatpush.msra.mxu0 %v1181
    %v1183 = vand.u32 %v809, 4294901760
    %1184 = vmatpush.msra.mxu0 %v1183
    %v1185 = vand.u32 %v807, 4294901760
    %1186 = vmatpush.msra.mxu0 %v1185
    %v1187 = vand.u32 %v805, 4294901760
    %1188 = vmatpush.msra.mxu0 %v1187
    %v1189 = vand.u32 %v803, 4294901760
    %1190 = vmatpush.msra.mxu0 %v1189
    %v1191 = vand.u32 %v801, 4294901760
    %1192 = vmatpush.msra.mxu0 %v1191
    %v1193 = vand.u32 %v799, 4294901760
    %1194 = vmatpush.msra.mxu0 %v1193
    %v1195 = vand.u32 %v797, 4294901760
    %1196 = vmatpush.msra.mxu0 %v1195
    %v1197 = vand.u32 %v795, 4294901760
    %1198 = vmatmul.f32.gmra.mxu0 %v1197
    %v1199 = vpop.f32.mrf.mxu0
    %v1200 = vadd.f32 %v1163, %v1199
    %1201 = vdwg.mxu0
    %v1202 = vand.u32 %v859, 4294901760
    %1203 = vmatpush.msra.mxu0 %v1202
    %v1204 = vand.u32 %v857, 4294901760
    %1205 = vmatpush.msra.mxu0 %v1204
    %v1206 = vand.u32 %v855, 4294901760
    %1207 = vmatpush.msra.mxu0 %v1206
    %v1208 = vand.u32 %v853, 4294901760
    %1209 = vmatpush.msra.mxu0 %v1208
    %v1210 = vand.u32 %v851, 4294901760
    %1211 = vmatpush.msra.mxu0 %v1210
    %v1212 = vand.u32 %v849, 4294901760
    %1213 = vmatpush.msra.mxu0 %v1212
    %v1214 = vand.u32 %v847, 4294901760
    %1215 = vmatpush.msra.mxu0 %v1214
    %v1216 = vand.u32 %v845, 4294901760
    %1217 = vmatpush.msra.mxu0 %v1216
    %v1218 = vand.u32 %v843, 4294901760
    %1219 = vmatpush.msra.mxu0 %v1218
    %v1220 = vand.u32 %v841, 4294901760
    %1221 = vmatpush.msra.mxu0 %v1220
    %v1222 = vand.u32 %v839, 4294901760
    %1223 = vmatpush.msra.mxu0 %v1222
    %v1224 = vand.u32 %v837, 4294901760
    %1225 = vmatpush.msra.mxu0 %v1224
    %v1226 = vand.u32 %v835, 4294901760
    %1227 = vmatpush.msra.mxu0 %v1226
    %v1228 = vand.u32 %v833, 4294901760
    %1229 = vmatpush.msra.mxu0 %v1228
    %v1230 = vand.u32 %v831, 4294901760
    %1231 = vmatpush.msra.mxu0 %v1230
    %v1232 = vand.u32 %v829, 4294901760
    %1233 = vmatpush.msra.mxu0 %v1232
    %v1234 = vand.u32 %v796, 4294901760
    %v1235 = vsub.f32 %v796, %v1234
    %v1236 = vand.u32 %v1235, 4294901760
    %v1237 = vsub.f32 %v1235, %v1236
    %v1238 = vand.u32 %v1237, 4294901760
    %1239 = vmatmul.f32.gmra.mxu0 %v1238
    %v1240 = vpop.f32.mrf.mxu0
    %v1241 = vadd.f32 %v1200, %v1240
    %1242 = vdwg.mxu0
    %v1243 = vand.u32 %v859, 4294901760
    %v1244 = vsub.f32 %v859, %v1243
    %v1245 = vand.u32 %v1244, 4294901760
    %v1246 = vsub.f32 %v1244, %v1245
    %v1247 = vand.u32 %v1246, 4294901760
    %1248 = vmatpush.msra.mxu0 %v1247
    %v1249 = vand.u32 %v857, 4294901760
    %v1250 = vsub.f32 %v857, %v1249
    %v1251 = vand.u32 %v1250, 4294901760
    %v1252 = vsub.f32 %v1250, %v1251
    %v1253 = vand.u32 %v1252, 4294901760
    %1254 = vmatpush.msra.mxu0 %v1253
    %v1255 = vand.u32 %v855, 4294901760
    %v1256 = vsub.f32 %v855, %v1255
    %v1257 = vand.u32 %v1256, 4294901760
    %v1258 = vsub.f32 %v1256, %v1257
    %v1259 = vand.u32 %v1258, 4294901760
    %1260 = vmatpush.msra.mxu0 %v1259
    %v1261 = vand.u32 %v853, 4294901760
    %v1262 = vsub.f32 %v853, %v1261
    %v1263 = vand.u32 %v1262, 4294901760
    %v1264 = vsub.f32 %v1262, %v1263
    %v1265 = vand.u32 %v1264, 4294901760
    %1266 = vmatpush.msra.mxu0 %v1265
    %v1267 = vand.u32 %v851, 4294901760
    %v1268 = vsub.f32 %v851, %v1267
    %v1269 = vand.u32 %v1268, 4294901760
    %v1270 = vsub.f32 %v1268, %v1269
    %v1271 = vand.u32 %v1270, 4294901760
    %1272 = vmatpush.msra.mxu0 %v1271
    %v1273 = vand.u32 %v849, 4294901760
    %v1274 = vsub.f32 %v849, %v1273
    %v1275 = vand.u32 %v1274, 4294901760
    %v1276 = vsub.f32 %v1274, %v1275
    %v1277 = vand.u32 %v1276, 4294901760
    %1278 = vmatpush.msra.mxu0 %v1277
    %v1279 = vand.u32 %v847, 4294901760
    %v1280 = vsub.f32 %v847, %v1279
    %v1281 = vand.u32 %v1280, 4294901760
    %v1282 = vsub.f32 %v1280, %v1281
    %v1283 = vand.u32 %v1282, 4294901760
    %1284 = vmatpush.msra.mxu0 %v1283
    %v1285 = vand.u32 %v845, 4294901760
    %v1286 = vsub.f32 %v845, %v1285
    %v1287 = vand.u32 %v1286, 4294901760
    %v1288 = vsub.f32 %v1286, %v1287
    %v1289 = vand.u32 %v1288, 4294901760
    %1290 = vmatpush.msra.mxu0 %v1289
    %v1291 = vand.u32 %v843, 4294901760
    %v1292 = vsub.f32 %v843, %v1291
    %v1293 = vand.u32 %v1292, 4294901760
    %v1294 = vsub.f32 %v1292, %v1293
    %v1295 = vand.u32 %v1294, 4294901760
    %1296 = vmatpush.msra.mxu0 %v1295
    %v1297 = vand.u32 %v841, 4294901760
    %v1298 = vsub.f32 %v841, %v1297
    %v1299 = vand.u32 %v1298, 4294901760
    %v1300 = vsub.f32 %v1298, %v1299
    %v1301 = vand.u32 %v1300, 4294901760
    %1302 = vmatpush.msra.mxu0 %v1301
    %v1303 = vand.u32 %v839, 4294901760
    %v1304 = vsub.f32 %v839, %v1303
    %v1305 = vand.u32 %v1304, 4294901760
    %v1306 = vsub.f32 %v1304, %v1305
    %v1307 = vand.u32 %v1306, 4294901760
    %1308 = vmatpush.msra.mxu0 %v1307
    %v1309 = vand.u32 %v837, 4294901760
    %v1310 = vsub.f32 %v837, %v1309
    %v1311 = vand.u32 %v1310, 4294901760
    %v1312 = vsub.f32 %v1310, %v1311
    %v1313 = vand.u32 %v1312, 4294901760
    %1314 = vmatpush.msra.mxu0 %v1313
    %v1315 = vand.u32 %v835, 4294901760
    %v1316 = vsub.f32 %v835, %v1315
    %v1317 = vand.u32 %v1316, 4294901760
    %v1318 = vsub.f32 %v1316, %v1317
    %v1319 = vand.u32 %v1318, 4294901760
    %1320 = vmatpush.msra.mxu0 %v1319
    %v1321 = vand.u32 %v833, 4294901760
    %v1322 = vsub.f32 %v833, %v1321
    %v1323 = vand.u32 %v1322, 4294901760
    %v1324 = vsub.f32 %v1322, %v1323
    %v1325 = vand.u32 %v1324, 4294901760
    %1326 = vmatpush.msra.mxu0 %v1325
    %v1327 = vand.u32 %v831, 4294901760
    %v1328 = vsub.f32 %v831, %v1327
    %v1329 = vand.u32 %v1328, 4294901760
    %v1330 = vsub.f32 %v1328, %v1329
    %v1331 = vand.u32 %v1330, 4294901760
    %1332 = vmatpush.msra.mxu0 %v1331
    %v1333 = vand.u32 %v829, 4294901760
    %v1334 = vsub.f32 %v829, %v1333
    %v1335 = vand.u32 %v1334, 4294901760
    %v1336 = vsub.f32 %v1334, %v1335
    %v1337 = vand.u32 %v1336, 4294901760
    %1338 = vmatpush.msra.mxu0 %v1337
    %v1339 = vand.u32 %v796, 4294901760
    %1340 = vmatmul.f32.gmra.mxu0 %v1339
    %v1341 = vpop.f32.mrf.mxu0
    %v1342 = vadd.f32 %v1241, %v1341
    %1343 = vdwg.mxu0
    %v1344 = vand.u32 %v859, 4294901760
    %v1345 = vsub.f32 %v859, %v1344
    %1346 = vmatpush.msra.mxu0 %v1345
    %v1347 = vand.u32 %v857, 4294901760
    %v1348 = vsub.f32 %v857, %v1347
    %1349 = vmatpush.msra.mxu0 %v1348
    %v1350 = vand.u32 %v855, 4294901760
    %v1351 = vsub.f32 %v855, %v1350
    %1352 = vmatpush.msra.mxu0 %v1351
    %v1353 = vand.u32 %v853, 4294901760
    %v1354 = vsub.f32 %v853, %v1353
    %1355 = vmatpush.msra.mxu0 %v1354
    %v1356 = vand.u32 %v851, 4294901760
    %v1357 = vsub.f32 %v851, %v1356
    %1358 = vmatpush.msra.mxu0 %v1357
    %v1359 = vand.u32 %v849, 4294901760
    %v1360 = vsub.f32 %v849, %v1359
    %1361 = vmatpush.msra.mxu0 %v1360
    %v1362 = vand.u32 %v847, 4294901760
    %v1363 = vsub.f32 %v847, %v1362
    %1364 = vmatpush.msra.mxu0 %v1363
    %v1365 = vand.u32 %v845, 4294901760
    %v1366 = vsub.f32 %v845, %v1365
    %1367 = vmatpush.msra.mxu0 %v1366
    %v1368 = vand.u32 %v843, 4294901760
    %v1369 = vsub.f32 %v843, %v1368
    %1370 = vmatpush.msra.mxu0 %v1369
    %v1371 = vand.u32 %v841, 4294901760
    %v1372 = vsub.f32 %v841, %v1371
    %1373 = vmatpush.msra.mxu0 %v1372
    %v1374 = vand.u32 %v839, 4294901760
    %v1375 = vsub.f32 %v839, %v1374
    %1376 = vmatpush.msra.mxu0 %v1375
    %v1377 = vand.u32 %v837, 4294901760
    %v1378 = vsub.f32 %v837, %v1377
    %1379 = vmatpush.msra.mxu0 %v1378
    %v1380 = vand.u32 %v835, 4294901760
    %v1381 = vsub.f32 %v835, %v1380
    %1382 = vmatpush.msra.mxu0 %v1381
    %v1383 = vand.u32 %v833, 4294901760
    %v1384 = vsub.f32 %v833, %v1383
    %1385 = vmatpush.msra.mxu0 %v1384
    %v1386 = vand.u32 %v831, 4294901760
    %v1387 = vsub.f32 %v831, %v1386
    %1388 = vmatpush.msra.mxu0 %v1387
    %v1389 = vand.u32 %v829, 4294901760
    %v1390 = vsub.f32 %v829, %v1389
    %1391 = vmatpush.msra.mxu0 %v1390
    %v1392 = vand.u32 %v796, 4294901760
    %v1393 = vsub.f32 %v796, %v1392
    %1394 = vmatmul.f32.gmra.mxu0 %v1393
    %v1395 = vpop.f32.mrf.mxu0
    %v1396 = vadd.f32 %v1342, %v1395
    %1397 = vdwg.mxu0
    %v1398 = vand.u32 %v859, 4294901760
    %1399 = vmatpush.msra.mxu0 %v1398
    %v1400 = vand.u32 %v857, 4294901760
    %1401 = vmatpush.msra.mxu0 %v1400
    %v1402 = vand.u32 %v855, 4294901760
    %1403 = vmatpush.msra.mxu0 %v1402
    %v1404 = vand.u32 %v853, 4294901760
    %1405 = vmatpush.msra.mxu0 %v1404
    %v1406 = vand.u32 %v851, 4294901760
    %1407 = vmatpush.msra.mxu0 %v1406
    %v1408 = vand.u32 %v849, 4294901760
    %1409 = vmatpush.msra.mxu0 %v1408
    %v1410 = vand.u32 %v847, 4294901760
    %1411 = vmatpush.msra.mxu0 %v1410
    %v1412 = vand.u32 %v845, 4294901760
    %1413 = vmatpush.msra.mxu0 %v1412
    %v1414 = vand.u32 %v843, 4294901760
    %1415 = vmatpush.msra.mxu0 %v1414
    %v1416 = vand.u32 %v841, 4294901760
    %1417 = vmatpush.msra.mxu0 %v1416
    %v1418 = vand.u32 %v839, 4294901760
    %1419 = vmatpush.msra.mxu0 %v1418
    %v1420 = vand.u32 %v837, 4294901760
    %1421 = vmatpush.msra.mxu0 %v1420
    %v1422 = vand.u32 %v835, 4294901760
    %1423 = vmatpush.msra.mxu0 %v1422
    %v1424 = vand.u32 %v833, 4294901760
    %1425 = vmatpush.msra.mxu0 %v1424
    %v1426 = vand.u32 %v831, 4294901760
    %1427 = vmatpush.msra.mxu0 %v1426
    %v1428 = vand.u32 %v829, 4294901760
    %1429 = vmatpush.msra.mxu0 %v1428
    %v1430 = vand.u32 %v796, 4294901760
    %v1431 = vsub.f32 %v796, %v1430
    %v1432 = vand.u32 %v1431, 4294901760
    %1433 = vmatmul.f32.gmra.mxu0 %v1432
    %v1434 = vpop.f32.mrf.mxu0
    %v1435 = vadd.f32 %v1396, %v1434
    %1436 = vdwg.mxu0
    %v1437 = vand.u32 %v859, 4294901760
    %v1438 = vsub.f32 %v859, %v1437
    %v1439 = vand.u32 %v1438, 4294901760
    %1440 = vmatpush.msra.mxu0 %v1439
    %v1441 = vand.u32 %v857, 4294901760
    %v1442 = vsub.f32 %v857, %v1441
    %v1443 = vand.u32 %v1442, 4294901760
    %1444 = vmatpush.msra.mxu0 %v1443
    %v1445 = vand.u32 %v855, 4294901760
    %v1446 = vsub.f32 %v855, %v1445
    %v1447 = vand.u32 %v1446, 4294901760
    %1448 = vmatpush.msra.mxu0 %v1447
    %v1449 = vand.u32 %v853, 4294901760
    %v1450 = vsub.f32 %v853, %v1449
    %v1451 = vand.u32 %v1450, 4294901760
    %1452 = vmatpush.msra.mxu0 %v1451
    %v1453 = vand.u32 %v851, 4294901760
    %v1454 = vsub.f32 %v851, %v1453
    %v1455 = vand.u32 %v1454, 4294901760
    %1456 = vmatpush.msra.mxu0 %v1455
    %v1457 = vand.u32 %v849, 4294901760
    %v1458 = vsub.f32 %v849, %v1457
    %v1459 = vand.u32 %v1458, 4294901760
    %1460 = vmatpush.msra.mxu0 %v1459
    %v1461 = vand.u32 %v847, 4294901760
    %v1462 = vsub.f32 %v847, %v1461
    %v1463 = vand.u32 %v1462, 4294901760
    %1464 = vmatpush.msra.mxu0 %v1463
    %v1465 = vand.u32 %v845, 4294901760
    %v1466 = vsub.f32 %v845, %v1465
    %v1467 = vand.u32 %v1466, 4294901760
    %1468 = vmatpush.msra.mxu0 %v1467
    %v1469 = vand.u32 %v843, 4294901760
    %v1470 = vsub.f32 %v843, %v1469
    %v1471 = vand.u32 %v1470, 4294901760
    %1472 = vmatpush.msra.mxu0 %v1471
    %v1473 = vand.u32 %v841, 4294901760
    %v1474 = vsub.f32 %v841, %v1473
    %v1475 = vand.u32 %v1474, 4294901760
    %1476 = vmatpush.msra.mxu0 %v1475
    %v1477 = vand.u32 %v839, 4294901760
    %v1478 = vsub.f32 %v839, %v1477
    %v1479 = vand.u32 %v1478, 4294901760
    %1480 = vmatpush.msra.mxu0 %v1479
    %v1481 = vand.u32 %v837, 4294901760
    %v1482 = vsub.f32 %v837, %v1481
    %v1483 = vand.u32 %v1482, 4294901760
    %1484 = vmatpush.msra.mxu0 %v1483
    %v1485 = vand.u32 %v835, 4294901760
    %v1486 = vsub.f32 %v835, %v1485
    %v1487 = vand.u32 %v1486, 4294901760
    %1488 = vmatpush.msra.mxu0 %v1487
    %v1489 = vand.u32 %v833, 4294901760
    %v1490 = vsub.f32 %v833, %v1489
    %v1491 = vand.u32 %v1490, 4294901760
    %1492 = vmatpush.msra.mxu0 %v1491
    %v1493 = vand.u32 %v831, 4294901760
    %v1494 = vsub.f32 %v831, %v1493
    %v1495 = vand.u32 %v1494, 4294901760
    %1496 = vmatpush.msra.mxu0 %v1495
    %v1497 = vand.u32 %v829, 4294901760
    %v1498 = vsub.f32 %v829, %v1497
    %v1499 = vand.u32 %v1498, 4294901760
    %1500 = vmatpush.msra.mxu0 %v1499
    %v1501 = vand.u32 %v796, 4294901760
    %1502 = vmatmul.f32.gmra.mxu0 %v1501
    %v1503 = vpop.f32.mrf.mxu0
    %v1504 = vadd.f32 %v1435, %v1503
    %1505 = vdwg.mxu0
    %v1506 = vand.u32 %v859, 4294901760
    %1507 = vmatpush.msra.mxu0 %v1506
    %v1508 = vand.u32 %v857, 4294901760
    %1509 = vmatpush.msra.mxu0 %v1508
    %v1510 = vand.u32 %v855, 4294901760
    %1511 = vmatpush.msra.mxu0 %v1510
    %v1512 = vand.u32 %v853, 4294901760
    %1513 = vmatpush.msra.mxu0 %v1512
    %v1514 = vand.u32 %v851, 4294901760
    %1515 = vmatpush.msra.mxu0 %v1514
    %v1516 = vand.u32 %v849, 4294901760
    %1517 = vmatpush.msra.mxu0 %v1516
    %v1518 = vand.u32 %v847, 4294901760
    %1519 = vmatpush.msra.mxu0 %v1518
    %v1520 = vand.u32 %v845, 4294901760
    %1521 = vmatpush.msra.mxu0 %v1520
    %v1522 = vand.u32 %v843, 4294901760
    %1523 = vmatpush.msra.mxu0 %v1522
    %v1524 = vand.u32 %v841, 4294901760
    %1525 = vmatpush.msra.mxu0 %v1524
    %v1526 = vand.u32 %v839, 4294901760
    %1527 = vmatpush.msra.mxu0 %v1526
    %v1528 = vand.u32 %v837, 4294901760
    %1529 = vmatpush.msra.mxu0 %v1528
    %v1530 = vand.u32 %v835, 4294901760
    %1531 = vmatpush.msra.mxu0 %v1530
    %v1532 = vand.u32 %v833, 4294901760
    %1533 = vmatpush.msra.mxu0 %v1532
    %v1534 = vand.u32 %v831, 4294901760
    %1535 = vmatpush.msra.mxu0 %v1534
    %v1536 = vand.u32 %v829, 4294901760
    %1537 = vmatpush.msra.mxu0 %v1536
    %v1538 = vand.u32 %v796, 4294901760
    %1539 = vmatmul.f32.gmra.mxu0 %v1538
    %v1540 = vpop.f32.mrf.mxu0
    %v1541 = vadd.f32 %v1504, %v1540
    %1542 = vdwg.mxu0
    %v1543 = vand.u32 %v828, 4294901760
    %1544 = vmatpush.msra.mxu0 %v1543
    %v1545 = vand.u32 %v826, 4294901760
    %1546 = vmatpush.msra.mxu0 %v1545
    %v1547 = vand.u32 %v824, 4294901760
    %1548 = vmatpush.msra.mxu0 %v1547
    %v1549 = vand.u32 %v822, 4294901760
    %1550 = vmatpush.msra.mxu0 %v1549
    %v1551 = vand.u32 %v820, 4294901760
    %1552 = vmatpush.msra.mxu0 %v1551
    %v1553 = vand.u32 %v818, 4294901760
    %1554 = vmatpush.msra.mxu0 %v1553
    %v1555 = vand.u32 %v816, 4294901760
    %1556 = vmatpush.msra.mxu0 %v1555
    %v1557 = vand.u32 %v814, 4294901760
    %1558 = vmatpush.msra.mxu0 %v1557
    %v1559 = vand.u32 %v812, 4294901760
    %1560 = vmatpush.msra.mxu0 %v1559
    %v1561 = vand.u32 %v810, 4294901760
    %1562 = vmatpush.msra.mxu0 %v1561
    %v1563 = vand.u32 %v808, 4294901760
    %1564 = vmatpush.msra.mxu0 %v1563
    %v1565 = vand.u32 %v806, 4294901760
    %1566 = vmatpush.msra.mxu0 %v1565
    %v1567 = vand.u32 %v804, 4294901760
    %1568 = vmatpush.msra.mxu0 %v1567
    %v1569 = vand.u32 %v802, 4294901760
    %1570 = vmatpush.msra.mxu0 %v1569
    %v1571 = vand.u32 %v800, 4294901760
    %1572 = vmatpush.msra.mxu0 %v1571
    %v1573 = vand.u32 %v798, 4294901760
    %1574 = vmatpush.msra.mxu0 %v1573
    %v1575 = vand.u32 %v795, 4294901760
    %v1576 = vsub.f32 %v795, %v1575
    %v1577 = vand.u32 %v1576, 4294901760
    %v1578 = vsub.f32 %v1576, %v1577
    %v1579 = vand.u32 %v1578, 4294901760
    %1580 = vmatmul.f32.gmra.mxu0 %v1579
    %v1581 = vpop.f32.mrf.mxu0
    %v1582 = vadd.f32 1e-05, %v1581
    %1583 = vdwg.mxu0
    %v1584 = vand.u32 %v828, 4294901760
    %v1585 = vsub.f32 %v828, %v1584
    %v1586 = vand.u32 %v1585, 4294901760
    %v1587 = vsub.f32 %v1585, %v1586
    %v1588 = vand.u32 %v1587, 4294901760
    %1589 = vmatpush.msra.mxu0 %v1588
    %v1590 = vand.u32 %v826, 4294901760
    %v1591 = vsub.f32 %v826, %v1590
    %v1592 = vand.u32 %v1591, 4294901760
    %v1593 = vsub.f32 %v1591, %v1592
    %v1594 = vand.u32 %v1593, 4294901760
    %1595 = vmatpush.msra.mxu0 %v1594
    %v1596 = vand.u32 %v824, 4294901760
    %v1597 = vsub.f32 %v824, %v1596
    %v1598 = vand.u32 %v1597, 4294901760
    %v1599 = vsub.f32 %v1597, %v1598
    %v1600 = vand.u32 %v1599, 4294901760
    %1601 = vmatpush.msra.mxu0 %v1600
    %v1602 = vand.u32 %v822, 4294901760
    %v1603 = vsub.f32 %v822, %v1602
    %v1604 = vand.u32 %v1603, 4294901760
    %v1605 = vsub.f32 %v1603, %v1604
    %v1606 = vand.u32 %v1605, 4294901760
    %1607 = vmatpush.msra.mxu0 %v1606
    %v1608 = vand.u32 %v820, 4294901760
    %v1609 = vsub.f32 %v820, %v1608
    %v1610 = vand.u32 %v1609, 4294901760
    %v1611 = vsub.f32 %v1609, %v1610
    %v1612 = vand.u32 %v1611, 4294901760
    %1613 = vmatpush.msra.mxu0 %v1612
    %v1614 = vand.u32 %v818, 4294901760
    %v1615 = vsub.f32 %v818, %v1614
    %v1616 = vand.u32 %v1615, 4294901760
    %v1617 = vsub.f32 %v1615, %v1616
    %v1618 = vand.u32 %v1617, 4294901760
    %1619 = vmatpush.msra.mxu0 %v1618
    %v1620 = vand.u32 %v816, 4294901760
    %v1621 = vsub.f32 %v816, %v1620
    %v1622 = vand.u32 %v1621, 4294901760
    %v1623 = vsub.f32 %v1621, %v1622
    %v1624 = vand.u32 %v1623, 4294901760
    %1625 = vmatpush.msra.mxu0 %v1624
    %v1626 = vand.u32 %v814, 4294901760
    %v1627 = vsub.f32 %v814, %v1626
    %v1628 = vand.u32 %v1627, 4294901760
    %v1629 = vsub.f32 %v1627, %v1628
    %v1630 = vand.u32 %v1629, 4294901760
    %1631 = vmatpush.msra.mxu0 %v1630
    %v1632 = vand.u32 %v812, 4294901760
    %v1633 = vsub.f32 %v812, %v1632
    %v1634 = vand.u32 %v1633, 4294901760
    %v1635 = vsub.f32 %v1633, %v1634
    %v1636 = vand.u32 %v1635, 4294901760
    %1637 = vmatpush.msra.mxu0 %v1636
    %v1638 = vand.u32 %v810, 4294901760
    %v1639 = vsub.f32 %v810, %v1638
    %v1640 = vand.u32 %v1639, 4294901760
    %v1641 = vsub.f32 %v1639, %v1640
    %v1642 = vand.u32 %v1641, 4294901760
    %1643 = vmatpush.msra.mxu0 %v1642
    %v1644 = vand.u32 %v808, 4294901760
    %v1645 = vsub.f32 %v808, %v1644
    %v1646 = vand.u32 %v1645, 4294901760
    %v1647 = vsub.f32 %v1645, %v1646
    %v1648 = vand.u32 %v1647, 4294901760
    %1649 = vmatpush.msra.mxu0 %v1648
    %v1650 = vand.u32 %v806, 4294901760
    %v1651 = vsub.f32 %v806, %v1650
    %v1652 = vand.u32 %v1651, 4294901760
    %v1653 = vsub.f32 %v1651, %v1652
    %v1654 = vand.u32 %v1653, 4294901760
    %1655 = vmatpush.msra.mxu0 %v1654
    %v1656 = vand.u32 %v804, 4294901760
    %v1657 = vsub.f32 %v804, %v1656
    %v1658 = vand.u32 %v1657, 4294901760
    %v1659 = vsub.f32 %v1657, %v1658
    %v1660 = vand.u32 %v1659, 4294901760
    %1661 = vmatpush.msra.mxu0 %v1660
    %v1662 = vand.u32 %v802, 4294901760
    %v1663 = vsub.f32 %v802, %v1662
    %v1664 = vand.u32 %v1663, 4294901760
    %v1665 = vsub.f32 %v1663, %v1664
    %v1666 = vand.u32 %v1665, 4294901760
    %1667 = vmatpush.msra.mxu0 %v1666
    %v1668 = vand.u32 %v800, 4294901760
    %v1669 = vsub.f32 %v800, %v1668
    %v1670 = vand.u32 %v1669, 4294901760
    %v1671 = vsub.f32 %v1669, %v1670
    %v1672 = vand.u32 %v1671, 4294901760
    %1673 = vmatpush.msra.mxu0 %v1672
    %v1674 = vand.u32 %v798, 4294901760
    %v1675 = vsub.f32 %v798, %v1674
    %v1676 = vand.u32 %v1675, 4294901760
    %v1677 = vsub.f32 %v1675, %v1676
    %v1678 = vand.u32 %v1677, 4294901760
    %1679 = vmatpush.msra.mxu0 %v1678
    %v1680 = vand.u32 %v795, 4294901760
    %1681 = vmatmul.f32.gmra.mxu0 %v1680
    %v1682 = vpop.f32.mrf.mxu0
    %v1683 = vadd.f32 %v1582, %v1682
    %1684 = vdwg.mxu0
    %v1685 = vand.u32 %v828, 4294901760
    %v1686 = vsub.f32 %v828, %v1685
    %1687 = vmatpush.msra.mxu0 %v1686
    %v1688 = vand.u32 %v826, 4294901760
    %v1689 = vsub.f32 %v826, %v1688
    %1690 = vmatpush.msra.mxu0 %v1689
    %v1691 = vand.u32 %v824, 4294901760
    %v1692 = vsub.f32 %v824, %v1691
    %1693 = vmatpush.msra.mxu0 %v1692
    %v1694 = vand.u32 %v822, 4294901760
    %v1695 = vsub.f32 %v822, %v1694
    %1696 = vmatpush.msra.mxu0 %v1695
    %v1697 = vand.u32 %v820, 4294901760
    %v1698 = vsub.f32 %v820, %v1697
    %1699 = vmatpush.msra.mxu0 %v1698
    %v1700 = vand.u32 %v818, 4294901760
    %v1701 = vsub.f32 %v818, %v1700
    %1702 = vmatpush.msra.mxu0 %v1701
    %v1703 = vand.u32 %v816, 4294901760
    %v1704 = vsub.f32 %v816, %v1703
    %1705 = vmatpush.msra.mxu0 %v1704
    %v1706 = vand.u32 %v814, 4294901760
    %v1707 = vsub.f32 %v814, %v1706
    %1708 = vmatpush.msra.mxu0 %v1707
    %v1709 = vand.u32 %v812, 4294901760
    %v1710 = vsub.f32 %v812, %v1709
    %1711 = vmatpush.msra.mxu0 %v1710
    %v1712 = vand.u32 %v810, 4294901760
    %v1713 = vsub.f32 %v810, %v1712
    %1714 = vmatpush.msra.mxu0 %v1713
    %v1715 = vand.u32 %v808, 4294901760
    %v1716 = vsub.f32 %v808, %v1715
    %1717 = vmatpush.msra.mxu0 %v1716
    %v1718 = vand.u32 %v806, 4294901760
    %v1719 = vsub.f32 %v806, %v1718
    %1720 = vmatpush.msra.mxu0 %v1719
    %v1721 = vand.u32 %v804, 4294901760
    %v1722 = vsub.f32 %v804, %v1721
    %1723 = vmatpush.msra.mxu0 %v1722
    %v1724 = vand.u32 %v802, 4294901760
    %v1725 = vsub.f32 %v802, %v1724
    %1726 = vmatpush.msra.mxu0 %v1725
    %v1727 = vand.u32 %v800, 4294901760
    %v1728 = vsub.f32 %v800, %v1727
    %1729 = vmatpush.msra.mxu0 %v1728
    %v1730 = vand.u32 %v798, 4294901760
    %v1731 = vsub.f32 %v798, %v1730
    %1732 = vmatpush.msra.mxu0 %v1731
    %v1733 = vand.u32 %v795, 4294901760
    %v1734 = vsub.f32 %v795, %v1733
    %1735 = vmatmul.f32.gmra.mxu0 %v1734
    %v1736 = vpop.f32.mrf.mxu0
    %v1737 = vadd.f32 %v1683, %v1736
    %1738 = vdwg.mxu0
    %v1739 = vand.u32 %v828, 4294901760
    %1740 = vmatpush.msra.mxu0 %v1739
    %v1741 = vand.u32 %v826, 4294901760
    %1742 = vmatpush.msra.mxu0 %v1741
    %v1743 = vand.u32 %v824, 4294901760
    %1744 = vmatpush.msra.mxu0 %v1743
    %v1745 = vand.u32 %v822, 4294901760
    %1746 = vmatpush.msra.mxu0 %v1745
    %v1747 = vand.u32 %v820, 4294901760
    %1748 = vmatpush.msra.mxu0 %v1747
    %v1749 = vand.u32 %v818, 4294901760
    %1750 = vmatpush.msra.mxu0 %v1749
    %v1751 = vand.u32 %v816, 4294901760
    %1752 = vmatpush.msra.mxu0 %v1751
    %v1753 = vand.u32 %v814, 4294901760
    %1754 = vmatpush.msra.mxu0 %v1753
    %v1755 = vand.u32 %v812, 4294901760
    %1756 = vmatpush.msra.mxu0 %v1755
    %v1757 = vand.u32 %v810, 4294901760
    %1758 = vmatpush.msra.mxu0 %v1757
    %v1759 = vand.u32 %v808, 4294901760
    %1760 = vmatpush.msra.mxu0 %v1759
    %v1761 = vand.u32 %v806, 4294901760
    %1762 = vmatpush.msra.mxu0 %v1761
    %v1763 = vand.u32 %v804, 4294901760
    %1764 = vmatpush.msra.mxu0 %v1763
    %v1765 = vand.u32 %v802, 4294901760
    %1766 = vmatpush.msra.mxu0 %v1765
    %v1767 = vand.u32 %v800, 4294901760
    %1768 = vmatpush.msra.mxu0 %v1767
    %v1769 = vand.u32 %v798, 4294901760
    %1770 = vmatpush.msra.mxu0 %v1769
    %v1771 = vand.u32 %v795, 4294901760
    %v1772 = vsub.f32 %v795, %v1771
    %v1773 = vand.u32 %v1772, 4294901760
    %1774 = vmatmul.f32.gmra.mxu0 %v1773
    %v1775 = vpop.f32.mrf.mxu0
    %v1776 = vadd.f32 %v1737, %v1775
    %1777 = vdwg.mxu0
    %v1778 = vand.u32 %v828, 4294901760
    %v1779 = vsub.f32 %v828, %v1778
    %v1780 = vand.u32 %v1779, 4294901760
    %1781 = vmatpush.msra.mxu0 %v1780
    %v1782 = vand.u32 %v826, 4294901760
    %v1783 = vsub.f32 %v826, %v1782
    %v1784 = vand.u32 %v1783, 4294901760
    %1785 = vmatpush.msra.mxu0 %v1784
    %v1786 = vand.u32 %v824, 4294901760
    %v1787 = vsub.f32 %v824, %v1786
    %v1788 = vand.u32 %v1787, 4294901760
    %1789 = vmatpush.msra.mxu0 %v1788
    %v1790 = vand.u32 %v822, 4294901760
    %v1791 = vsub.f32 %v822, %v1790
    %v1792 = vand.u32 %v1791, 4294901760
    %1793 = vmatpush.msra.mxu0 %v1792
    %v1794 = vand.u32 %v820, 4294901760
    %v1795 = vsub.f32 %v820, %v1794
    %v1796 = vand.u32 %v1795, 4294901760
    %1797 = vmatpush.msra.mxu0 %v1796
    %v1798 = vand.u32 %v818, 4294901760
    %v1799 = vsub.f32 %v818, %v1798
    %v1800 = vand.u32 %v1799, 4294901760
    %1801 = vmatpush.msra.mxu0 %v1800
    %v1802 = vand.u32 %v816, 4294901760
    %v1803 = vsub.f32 %v816, %v1802
    %v1804 = vand.u32 %v1803, 4294901760
    %1805 = vmatpush.msra.mxu0 %v1804
    %v1806 = vand.u32 %v814, 4294901760
    %v1807 = vsub.f32 %v814, %v1806
    %v1808 = vand.u32 %v1807, 4294901760
    %1809 = vmatpush.msra.mxu0 %v1808
    %v1810 = vand.u32 %v812, 4294901760
    %v1811 = vsub.f32 %v812, %v1810
    %v1812 = vand.u32 %v1811, 4294901760
    %1813 = vmatpush.msra.mxu0 %v1812
    %v1814 = vand.u32 %v810, 4294901760
    %v1815 = vsub.f32 %v810, %v1814
    %v1816 = vand.u32 %v1815, 4294901760
    %1817 = vmatpush.msra.mxu0 %v1816
    %v1818 = vand.u32 %v808, 4294901760
    %v1819 = vsub.f32 %v808, %v1818
    %v1820 = vand.u32 %v1819, 4294901760
    %1821 = vmatpush.msra.mxu0 %v1820
    %v1822 = vand.u32 %v806, 4294901760
    %v1823 = vsub.f32 %v806, %v1822
    %v1824 = vand.u32 %v1823, 4294901760
    %1825 = vmatpush.msra.mxu0 %v1824
    %v1826 = vand.u32 %v804, 4294901760
    %v1827 = vsub.f32 %v804, %v1826
    %v1828 = vand.u32 %v1827, 4294901760
    %1829 = vmatpush.msra.mxu0 %v1828
    %v1830 = vand.u32 %v802, 4294901760
    %v1831 = vsub.f32 %v802, %v1830
    %v1832 = vand.u32 %v1831, 4294901760
    %1833 = vmatpush.msra.mxu0 %v1832
    %v1834 = vand.u32 %v800, 4294901760
    %v1835 = vsub.f32 %v800, %v1834
    %v1836 = vand.u32 %v1835, 4294901760
    %1837 = vmatpush.msra.mxu0 %v1836
    %v1838 = vand.u32 %v798, 4294901760
    %v1839 = vsub.f32 %v798, %v1838
    %v1840 = vand.u32 %v1839, 4294901760
    %1841 = vmatpush.msra.mxu0 %v1840
    %v1842 = vand.u32 %v795, 4294901760
    %1843 = vmatmul.f32.gmra.mxu0 %v1842
    %v1844 = vpop.f32.mrf.mxu0
    %v1845 = vadd.f32 %v1776, %v1844
    %1846 = vdwg.mxu0
    %v1847 = vand.u32 %v828, 4294901760
    %1848 = vmatpush.msra.mxu0 %v1847
    %v1849 = vand.u32 %v826, 4294901760
    %1850 = vmatpush.msra.mxu0 %v1849
    %v1851 = vand.u32 %v824, 4294901760
    %1852 = vmatpush.msra.mxu0 %v1851
    %v1853 = vand.u32 %v822, 4294901760
    %1854 = vmatpush.msra.mxu0 %v1853
    %v1855 = vand.u32 %v820, 4294901760
    %1856 = vmatpush.msra.mxu0 %v1855
    %v1857 = vand.u32 %v818, 4294901760
    %1858 = vmatpush.msra.mxu0 %v1857
    %v1859 = vand.u32 %v816, 4294901760
    %1860 = vmatpush.msra.mxu0 %v1859
    %v1861 = vand.u32 %v814, 4294901760
    %1862 = vmatpush.msra.mxu0 %v1861
    %v1863 = vand.u32 %v812, 4294901760
    %1864 = vmatpush.msra.mxu0 %v1863
    %v1865 = vand.u32 %v810, 4294901760
    %1866 = vmatpush.msra.mxu0 %v1865
    %v1867 = vand.u32 %v808, 4294901760
    %1868 = vmatpush.msra.mxu0 %v1867
    %v1869 = vand.u32 %v806, 4294901760
    %1870 = vmatpush.msra.mxu0 %v1869
    %v1871 = vand.u32 %v804, 4294901760
    %1872 = vmatpush.msra.mxu0 %v1871
    %v1873 = vand.u32 %v802, 4294901760
    %1874 = vmatpush.msra.mxu0 %v1873
    %v1875 = vand.u32 %v800, 4294901760
    %1876 = vmatpush.msra.mxu0 %v1875
    %v1877 = vand.u32 %v798, 4294901760
    %1878 = vmatpush.msra.mxu0 %v1877
    %v1879 = vand.u32 %v795, 4294901760
    %1880 = vmatmul.f32.gmra.mxu0 %v1879
    %v1881 = vpop.f32.mrf.mxu0
    %v1882 = vadd.f32 %v1845, %v1881
    %1883 = vdwg.mxu0
    %v1884 = vand.u32 %v860, 4294901760
    %1885 = vmatpush.msra.mxu0 %v1884
    %v1886 = vand.u32 %v858, 4294901760
    %1887 = vmatpush.msra.mxu0 %v1886
    %v1888 = vand.u32 %v856, 4294901760
    %1889 = vmatpush.msra.mxu0 %v1888
    %v1890 = vand.u32 %v854, 4294901760
    %1891 = vmatpush.msra.mxu0 %v1890
    %v1892 = vand.u32 %v852, 4294901760
    %1893 = vmatpush.msra.mxu0 %v1892
    %v1894 = vand.u32 %v850, 4294901760
    %1895 = vmatpush.msra.mxu0 %v1894
    %v1896 = vand.u32 %v848, 4294901760
    %1897 = vmatpush.msra.mxu0 %v1896
    %v1898 = vand.u32 %v846, 4294901760
    %1899 = vmatpush.msra.mxu0 %v1898
    %v1900 = vand.u32 %v844, 4294901760
    %1901 = vmatpush.msra.mxu0 %v1900
    %v1902 = vand.u32 %v842, 4294901760
    %1903 = vmatpush.msra.mxu0 %v1902
    %v1904 = vand.u32 %v840, 4294901760
    %1905 = vmatpush.msra.mxu0 %v1904
    %v1906 = vand.u32 %v838, 4294901760
    %1907 = vmatpush.msra.mxu0 %v1906
    %v1908 = vand.u32 %v836, 4294901760
    %1909 = vmatpush.msra.mxu0 %v1908
    %v1910 = vand.u32 %v834, 4294901760
    %1911 = vmatpush.msra.mxu0 %v1910
    %v1912 = vand.u32 %v832, 4294901760
    %1913 = vmatpush.msra.mxu0 %v1912
    %v1914 = vand.u32 %v830, 4294901760
    %1915 = vmatpush.msra.mxu0 %v1914
    %v1916 = vand.u32 %v796, 4294901760
    %v1917 = vsub.f32 %v796, %v1916
    %v1918 = vand.u32 %v1917, 4294901760
    %v1919 = vsub.f32 %v1917, %v1918
    %v1920 = vand.u32 %v1919, 4294901760
    %1921 = vmatmul.f32.gmra.mxu0 %v1920
    %v1922 = vpop.f32.mrf.mxu0
    %v1923 = vadd.f32 %v1882, %v1922
    %1924 = vdwg.mxu0
    %v1925 = vand.u32 %v860, 4294901760
    %v1926 = vsub.f32 %v860, %v1925
    %v1927 = vand.u32 %v1926, 4294901760
    %v1928 = vsub.f32 %v1926, %v1927
    %v1929 = vand.u32 %v1928, 4294901760
    %1930 = vmatpush.msra.mxu0 %v1929
    %v1931 = vand.u32 %v858, 4294901760
    %v1932 = vsub.f32 %v858, %v1931
    %v1933 = vand.u32 %v1932, 4294901760
    %v1934 = vsub.f32 %v1932, %v1933
    %v1935 = vand.u32 %v1934, 4294901760
    %1936 = vmatpush.msra.mxu0 %v1935
    %v1937 = vand.u32 %v856, 4294901760
    %v1938 = vsub.f32 %v856, %v1937
    %v1939 = vand.u32 %v1938, 4294901760
    %v1940 = vsub.f32 %v1938, %v1939
    %v1941 = vand.u32 %v1940, 4294901760
    %1942 = vmatpush.msra.mxu0 %v1941
    %v1943 = vand.u32 %v854, 4294901760
    %v1944 = vsub.f32 %v854, %v1943
    %v1945 = vand.u32 %v1944, 4294901760
    %v1946 = vsub.f32 %v1944, %v1945
    %v1947 = vand.u32 %v1946, 4294901760
    %1948 = vmatpush.msra.mxu0 %v1947
    %v1949 = vand.u32 %v852, 4294901760
    %v1950 = vsub.f32 %v852, %v1949
    %v1951 = vand.u32 %v1950, 4294901760
    %v1952 = vsub.f32 %v1950, %v1951
    %v1953 = vand.u32 %v1952, 4294901760
    %1954 = vmatpush.msra.mxu0 %v1953
    %v1955 = vand.u32 %v850, 4294901760
    %v1956 = vsub.f32 %v850, %v1955
    %v1957 = vand.u32 %v1956, 4294901760
    %v1958 = vsub.f32 %v1956, %v1957
    %v1959 = vand.u32 %v1958, 4294901760
    %1960 = vmatpush.msra.mxu0 %v1959
    %v1961 = vand.u32 %v848, 4294901760
    %v1962 = vsub.f32 %v848, %v1961
    %v1963 = vand.u32 %v1962, 4294901760
    %v1964 = vsub.f32 %v1962, %v1963
    %v1965 = vand.u32 %v1964, 4294901760
    %1966 = vmatpush.msra.mxu0 %v1965
    %v1967 = vand.u32 %v846, 4294901760
    %v1968 = vsub.f32 %v846, %v1967
    %v1969 = vand.u32 %v1968, 4294901760
    %v1970 = vsub.f32 %v1968, %v1969
    %v1971 = vand.u32 %v1970, 4294901760
    %1972 = vmatpush.msra.mxu0 %v1971
    %v1973 = vand.u32 %v844, 4294901760
    %v1974 = vsub.f32 %v844, %v1973
    %v1975 = vand.u32 %v1974, 4294901760
    %v1976 = vsub.f32 %v1974, %v1975
    %v1977 = vand.u32 %v1976, 4294901760
    %1978 = vmatpush.msra.mxu0 %v1977
    %v1979 = vand.u32 %v842, 4294901760
    %v1980 = vsub.f32 %v842, %v1979
    %v1981 = vand.u32 %v1980, 4294901760
    %v1982 = vsub.f32 %v1980, %v1981
    %v1983 = vand.u32 %v1982, 4294901760
    %1984 = vmatpush.msra.mxu0 %v1983
    %v1985 = vand.u32 %v840, 4294901760
    %v1986 = vsub.f32 %v840, %v1985
    %v1987 = vand.u32 %v1986, 4294901760
    %v1988 = vsub.f32 %v1986, %v1987
    %v1989 = vand.u32 %v1988, 4294901760
    %1990 = vmatpush.msra.mxu0 %v1989
    %v1991 = vand.u32 %v838, 4294901760
    %v1992 = vsub.f32 %v838, %v1991
    %v1993 = vand.u32 %v1992, 4294901760
    %v1994 = vsub.f32 %v1992, %v1993
    %v1995 = vand.u32 %v1994, 4294901760
    %1996 = vmatpush.msra.mxu0 %v1995
    %v1997 = vand.u32 %v836, 4294901760
    %v1998 = vsub.f32 %v836, %v1997
    %v1999 = vand.u32 %v1998, 4294901760
    %v2000 = vsub.f32 %v1998, %v1999
    %v2001 = vand.u32 %v2000, 4294901760
    %2002 = vmatpush.msra.mxu0 %v2001
    %v2003 = vand.u32 %v834, 4294901760
    %v2004 = vsub.f32 %v834, %v2003
    %v2005 = vand.u32 %v2004, 4294901760
    %v2006 = vsub.f32 %v2004, %v2005
    %v2007 = vand.u32 %v2006, 4294901760
    %2008 = vmatpush.msra.mxu0 %v2007
    %v2009 = vand.u32 %v832, 4294901760
    %v2010 = vsub.f32 %v832, %v2009
    %v2011 = vand.u32 %v2010, 4294901760
    %v2012 = vsub.f32 %v2010, %v2011
    %v2013 = vand.u32 %v2012, 4294901760
    %2014 = vmatpush.msra.mxu0 %v2013
    %v2015 = vand.u32 %v830, 4294901760
    %v2016 = vsub.f32 %v830, %v2015
    %v2017 = vand.u32 %v2016, 4294901760
    %v2018 = vsub.f32 %v2016, %v2017
    %v2019 = vand.u32 %v2018, 4294901760
    %2020 = vmatpush.msra.mxu0 %v2019
    %v2021 = vand.u32 %v796, 4294901760
    %2022 = vmatmul.f32.gmra.mxu0 %v2021
    %v2023 = vpop.f32.mrf.mxu0
    %v2024 = vadd.f32 %v1923, %v2023
    %2025 = vdwg.mxu0
    %v2026 = vand.u32 %v860, 4294901760
    %v2027 = vsub.f32 %v860, %v2026
    %2028 = vmatpush.msra.mxu0 %v2027
    %v2029 = vand.u32 %v858, 4294901760
    %v2030 = vsub.f32 %v858, %v2029
    %2031 = vmatpush.msra.mxu0 %v2030
    %v2032 = vand.u32 %v856, 4294901760
    %v2033 = vsub.f32 %v856, %v2032
    %2034 = vmatpush.msra.mxu0 %v2033
    %v2035 = vand.u32 %v854, 4294901760
    %v2036 = vsub.f32 %v854, %v2035
    %2037 = vmatpush.msra.mxu0 %v2036
    %v2038 = vand.u32 %v852, 4294901760
    %v2039 = vsub.f32 %v852, %v2038
    %2040 = vmatpush.msra.mxu0 %v2039
    %v2041 = vand.u32 %v850, 4294901760
    %v2042 = vsub.f32 %v850, %v2041
    %2043 = vmatpush.msra.mxu0 %v2042
    %v2044 = vand.u32 %v848, 4294901760
    %v2045 = vsub.f32 %v848, %v2044
    %2046 = vmatpush.msra.mxu0 %v2045
    %v2047 = vand.u32 %v846, 4294901760
    %v2048 = vsub.f32 %v846, %v2047
    %2049 = vmatpush.msra.mxu0 %v2048
    %v2050 = vand.u32 %v844, 4294901760
    %v2051 = vsub.f32 %v844, %v2050
    %2052 = vmatpush.msra.mxu0 %v2051
    %v2053 = vand.u32 %v842, 4294901760
    %v2054 = vsub.f32 %v842, %v2053
    %2055 = vmatpush.msra.mxu0 %v2054
    %v2056 = vand.u32 %v840, 4294901760
    %v2057 = vsub.f32 %v840, %v2056
    %2058 = vmatpush.msra.mxu0 %v2057
    %v2059 = vand.u32 %v838, 4294901760
    %v2060 = vsub.f32 %v838, %v2059
    %2061 = vmatpush.msra.mxu0 %v2060
    %v2062 = vand.u32 %v836, 4294901760
    %v2063 = vsub.f32 %v836, %v2062
    %2064 = vmatpush.msra.mxu0 %v2063
    %v2065 = vand.u32 %v834, 4294901760
    %v2066 = vsub.f32 %v834, %v2065
    %2067 = vmatpush.msra.mxu0 %v2066
    %v2068 = vand.u32 %v832, 4294901760
    %v2069 = vsub.f32 %v832, %v2068
    %2070 = vmatpush.msra.mxu0 %v2069
    %v2071 = vand.u32 %v830, 4294901760
    %v2072 = vsub.f32 %v830, %v2071
    %2073 = vmatpush.msra.mxu0 %v2072
    %v2074 = vand.u32 %v796, 4294901760
    %v2075 = vsub.f32 %v796, %v2074
    %2076 = vmatmul.f32.gmra.mxu0 %v2075
    %v2077 = vpop.f32.mrf.mxu0
    %v2078 = vadd.f32 %v2024, %v2077
    %2079 = vdwg.mxu0
    %v2080 = vand.u32 %v860, 4294901760
    %2081 = vmatpush.msra.mxu0 %v2080
    %v2082 = vand.u32 %v858, 4294901760
    %2083 = vmatpush.msra.mxu0 %v2082
    %v2084 = vand.u32 %v856, 4294901760
    %2085 = vmatpush.msra.mxu0 %v2084
    %v2086 = vand.u32 %v854, 4294901760
    %2087 = vmatpush.msra.mxu0 %v2086
    %v2088 = vand.u32 %v852, 4294901760
    %2089 = vmatpush.msra.mxu0 %v2088
    %v2090 = vand.u32 %v850, 4294901760
    %2091 = vmatpush.msra.mxu0 %v2090
    %v2092 = vand.u32 %v848, 4294901760
    %2093 = vmatpush.msra.mxu0 %v2092
    %v2094 = vand.u32 %v846, 4294901760
    %2095 = vmatpush.msra.mxu0 %v2094
    %v2096 = vand.u32 %v844, 4294901760
    %2097 = vmatpush.msra.mxu0 %v2096
    %v2098 = vand.u32 %v842, 4294901760
    %2099 = vmatpush.msra.mxu0 %v2098
    %v2100 = vand.u32 %v840, 4294901760
    %2101 = vmatpush.msra.mxu0 %v2100
    %v2102 = vand.u32 %v838, 4294901760
    %2103 = vmatpush.msra.mxu0 %v2102
    %v2104 = vand.u32 %v836, 4294901760
    %2105 = vmatpush.msra.mxu0 %v2104
    %v2106 = vand.u32 %v834, 4294901760
    %2107 = vmatpush.msra.mxu0 %v2106
    %v2108 = vand.u32 %v832, 4294901760
    %2109 = vmatpush.msra.mxu0 %v2108
    %v2110 = vand.u32 %v830, 4294901760
    %2111 = vmatpush.msra.mxu0 %v2110
    %v2112 = vand.u32 %v796, 4294901760
    %v2113 = vsub.f32 %v796, %v2112
    %v2114 = vand.u32 %v2113, 4294901760
    %2115 = vmatmul.f32.gmra.mxu0 %v2114
    %v2116 = vpop.f32.mrf.mxu0
    %v2117 = vadd.f32 %v2078, %v2116
    %2118 = vdwg.mxu0
    %v2119 = vand.u32 %v860, 4294901760
    %v2120 = vsub.f32 %v860, %v2119
    %v2121 = vand.u32 %v2120, 4294901760
    %2122 = vmatpush.msra.mxu0 %v2121
    %v2123 = vand.u32 %v858, 4294901760
    %v2124 = vsub.f32 %v858, %v2123
    %v2125 = vand.u32 %v2124, 4294901760
    %2126 = vmatpush.msra.mxu0 %v2125
    %v2127 = vand.u32 %v856, 4294901760
    %v2128 = vsub.f32 %v856, %v2127
    %v2129 = vand.u32 %v2128, 4294901760
    %2130 = vmatpush.msra.mxu0 %v2129
    %v2131 = vand.u32 %v854, 4294901760
    %v2132 = vsub.f32 %v854, %v2131
    %v2133 = vand.u32 %v2132, 4294901760
    %2134 = vmatpush.msra.mxu0 %v2133
    %v2135 = vand.u32 %v852, 4294901760
    %v2136 = vsub.f32 %v852, %v2135
    %v2137 = vand.u32 %v2136, 4294901760
    %2138 = vmatpush.msra.mxu0 %v2137
    %v2139 = vand.u32 %v850, 4294901760
    %v2140 = vsub.f32 %v850, %v2139
    %v2141 = vand.u32 %v2140, 4294901760
    %2142 = vmatpush.msra.mxu0 %v2141
    %v2143 = vand.u32 %v848, 4294901760
    %v2144 = vsub.f32 %v848, %v2143
    %v2145 = vand.u32 %v2144, 4294901760
    %2146 = vmatpush.msra.mxu0 %v2145
    %v2147 = vand.u32 %v846, 4294901760
    %v2148 = vsub.f32 %v846, %v2147
    %v2149 = vand.u32 %v2148, 4294901760
    %2150 = vmatpush.msra.mxu0 %v2149
    %v2151 = vand.u32 %v844, 4294901760
    %v2152 = vsub.f32 %v844, %v2151
    %v2153 = vand.u32 %v2152, 4294901760
    %2154 = vmatpush.msra.mxu0 %v2153
    %v2155 = vand.u32 %v842, 4294901760
    %v2156 = vsub.f32 %v842, %v2155
    %v2157 = vand.u32 %v2156, 4294901760
    %2158 = vmatpush.msra.mxu0 %v2157
    %v2159 = vand.u32 %v840, 4294901760
    %v2160 = vsub.f32 %v840, %v2159
    %v2161 = vand.u32 %v2160, 4294901760
    %2162 = vmatpush.msra.mxu0 %v2161
    %v2163 = vand.u32 %v838, 4294901760
    %v2164 = vsub.f32 %v838, %v2163
    %v2165 = vand.u32 %v2164, 4294901760
    %2166 = vmatpush.msra.mxu0 %v2165
    %v2167 = vand.u32 %v836, 4294901760
    %v2168 = vsub.f32 %v836, %v2167
    %v2169 = vand.u32 %v2168, 4294901760
    %2170 = vmatpush.msra.mxu0 %v2169
    %v2171 = vand.u32 %v834, 4294901760
    %v2172 = vsub.f32 %v834, %v2171
    %v2173 = vand.u32 %v2172, 4294901760
    %2174 = vmatpush.msra.mxu0 %v2173
    %v2175 = vand.u32 %v832, 4294901760
    %v2176 = vsub.f32 %v832, %v2175
    %v2177 = vand.u32 %v2176, 4294901760
    %2178 = vmatpush.msra.mxu0 %v2177
    %v2179 = vand.u32 %v830, 4294901760
    %v2180 = vsub.f32 %v830, %v2179
    %v2181 = vand.u32 %v2180, 4294901760
    %2182 = vmatpush.msra.mxu0 %v2181
    %v2183 = vand.u32 %v796, 4294901760
    %2184 = vmatmul.f32.gmra.mxu0 %v2183
    %v2185 = vpop.f32.mrf.mxu0
    %v2186 = vadd.f32 %v2117, %v2185
    %2187 = vdwg.mxu0
    %v2188 = vand.u32 %v860, 4294901760
    %2189 = vmatpush.msra.mxu0 %v2188
    %v2190 = vand.u32 %v858, 4294901760
    %2191 = vmatpush.msra.mxu0 %v2190
    %v2192 = vand.u32 %v856, 4294901760
    %2193 = vmatpush.msra.mxu0 %v2192
    %v2194 = vand.u32 %v854, 4294901760
    %2195 = vmatpush.msra.mxu0 %v2194
    %v2196 = vand.u32 %v852, 4294901760
    %2197 = vmatpush.msra.mxu0 %v2196
    %v2198 = vand.u32 %v850, 4294901760
    %2199 = vmatpush.msra.mxu0 %v2198
    %v2200 = vand.u32 %v848, 4294901760
    %2201 = vmatpush.msra.mxu0 %v2200
    %v2202 = vand.u32 %v846, 4294901760
    %2203 = vmatpush.msra.mxu0 %v2202
    %v2204 = vand.u32 %v844, 4294901760
    %2205 = vmatpush.msra.mxu0 %v2204
    %v2206 = vand.u32 %v842, 4294901760
    %2207 = vmatpush.msra.mxu0 %v2206
    %v2208 = vand.u32 %v840, 4294901760
    %2209 = vmatpush.msra.mxu0 %v2208
    %v2210 = vand.u32 %v838, 4294901760
    %2211 = vmatpush.msra.mxu0 %v2210
    %v2212 = vand.u32 %v836, 4294901760
    %2213 = vmatpush.msra.mxu0 %v2212
    %v2214 = vand.u32 %v834, 4294901760
    %2215 = vmatpush.msra.mxu0 %v2214
    %v2216 = vand.u32 %v832, 4294901760
    %2217 = vmatpush.msra.mxu0 %v2216
    %v2218 = vand.u32 %v830, 4294901760
    %2219 = vmatpush.msra.mxu0 %v2218
    %v2220 = vand.u32 %v796, 4294901760
    %2221 = vmatmul.f32.gmra.mxu0 %v2220
    %v2222 = vpop.f32.mrf.mxu0
    %v2223 = vadd.f32 %v2186, %v2222
    %2224 = vdwg.mxu0
    %v2225 = vrsqrt.pop %v1541
    %v2226 = vmul.f32 %v2225, %v1541
    %v2227 = vmul.f32 %v2226, %v2225
    %v2228 = vmul.f32 0.5, %v2227
    %v2229 = vsub.f32 1.5, %v2228
    %v2230 = vmul.f32 %v2225, %v2229
    %vm2231 = vweird.f32 %v1541
    %vm2232 = vweird.f32 %v2225
    %vm2233 = vmor %vm2231, %vm2232
    %v2234 = vsel %vm2233, %v2225, %v2230
    %v2235 = vrsqrt.pop %v2223
    %v2236 = vmul.f32 %v2235, %v2223
    %v2237 = vmul.f32 %v2236, %v2235
    %v2238 = vmul.f32 0.5, %v2237
    %v2239 = vsub.f32 1.5, %v2238
    %v2240 = vmul.f32 %v2235, %v2239
    %vm2241 = vweird.f32 %v2223
    %vm2242 = vweird.f32 %v2235
    %vm2243 = vmor %vm2241, %vm2242
    %v2244 = vsel %vm2243, %v2235, %v2240
    %v2245 = vmul.f32 %v452, %v2234
    %v2246 = vmul.f32 %v793, %v2244
    %v2247 = vld [vmem:[%s3] sm:$0x3]
    %v2249 = vperm.slane %v2247, 0
    %v2250 = vperm.slane %v2247, 1
    %v2253 = vmul.f32 %v2245, %v2249
    %v2254 = vmul.f32 %v2246, %v2250
    %v2255 = vld [vmem:[#allocation8] sm:$0x3]
    %v2257 = vperm.slane %v2255, 0
    %v2258 = vperm.slane %v2255, 1
    %v2261 = vadd.f32 %v2253, %v2257
    %v2262 = vadd.f32 %v2254, %v2258
    %2263 = vst [vmem:[#allocation10] sm:$0xff] %v2261
    %2264 = vst [vmem:[#allocation10 + $0x8] sm:$0xff] %v2262
    // Predicated region
    $region38: #{tpu_custom_call.1} parent=1 // pred_check
      _
    $region39: #{tpu_custom_call.1} parent=1 // pred_check_branch
      %2266 = sbr.rel (0) target = $region41
    $region40: #{tpu_custom_call.1} parent=1 // pred_region
      %2268 = vsyncadd [#allocation4], 0
      %s2270 = sshll.u32 [#allocation10], 4
      %s2271 = int_to_ptr.vmem [resolvable:$true] %s2270
      %s2272 = sshll.u32 %s5, 4
      %s2273 = int_to_ptr.hbm [resolvable:$true] %s2272
      %2275 = dma.vmem_to_hbm [thread:$0]  %s2271, 256, %s2273, [#allocation4]
    $region41: #{tpu_custom_call.1} parent=1 // pred_fallthru
      _
    // Predicated region
    $region42: #{tpu_custom_call.1} parent=1 // pred_check
      _
    $region43: #{tpu_custom_call.1} parent=1 // pred_check_branch
      %2277 = sbr.rel (0) target = $region45
    $region44: #{tpu_custom_call.1} parent=1 // pred_region
      %2279 = dma.done [#allocation4], 256
    $region45: #{tpu_custom_call.1} parent=1 // pred_fallthru
      _
    %2280 = vsyncpa [#allocation3], 1
    %2281 = vsyncpa [#allocation6], 1
    %2282 = vsyncpa [#allocation9], 1
    %2283 = vsyncpa [#allocation4], 1

</llo_original>
